<compile_context>
chip_gen: v6e
topology: v6e:2x2x1
jax: 0.10.0
libtpu: 0.0.40
codegen_flags: <defaults>
</compile_context>

<pallas_src>
import jax
import jax.numpy as jnp
from jax.experimental import pallas as pl
from jax.experimental.pallas import tpu as pltpu

# ---- small synthetic config (consistent with the module's forward) ----
B, S, H = 2, 8, 32                 # batch, seq_len, hidden_size
NUM_HEADS, HEAD_DIM = 4, 8         # H = NUM_HEADS * HEAD_DIM
INTERMEDIATE = 64                  # FFN inner dim
NUM_LAYERS = 2
VOCAB, MAX_POS, N_TYPES = 100, 64, 2
N_CLASSES = 3
LN_EPS = 1e-12


# ---------------- in-kernel helpers (traced inside the kernel) ----------------
def _layer_norm(x, gamma, beta, eps=LN_EPS):
    mu = jnp.mean(x, axis=-1, keepdims=True)
    var = jnp.mean(jnp.square(x - mu), axis=-1, keepdims=True)
    return (x - mu) * jax.lax.rsqrt(var + eps) * gamma + beta


def _softmax_last(x, approx=False):
    m = jnp.max(x, axis=-1, keepdims=True)
    e = jnp.exp(x - m)
    s = jnp.sum(e, axis=-1, keepdims=True)
    if approx:
        # EUP approximate reciprocal: separate VLIW slot, removes a VPU divide
        # from the inner attention path.
        return e * pl.reciprocal(s, approx=True)
    return e / s


# ---------------- single fused kernel: embeddings-LN -> encoder -> head ----------------
def fused_forward_kernel(emb_ref, mask_ref,
                         emb_g_ref, emb_b_ref,
                         wqkv_ref, bqkv_ref, wo_ref, bo_ref,
                         g1_ref, b1_ref, w1_ref, bi1_ref,
                         w2_ref, bi2_ref, g2_ref, b2_ref,
                         wp_ref, bp_ref, wc_ref, bc_ref,
                         o_ref):
    # embeddings LayerNorm
    x = _layer_norm(emb_ref[...], emb_g_ref[...], emb_b_ref[...])      # (B, S, H)

    # HF-BERT additive attention mask, computed ONCE and reused by every layer.
    bias = (1.0 - mask_ref[...])[:, None, :] * -10000.0                # (B, 1, S)
    scale = 1.0 / (HEAD_DIM ** 0.5)

    # Statically unrolled layer loop; activation stays resident in VMEM/vregs.
    for l in range(NUM_LAYERS):
        # ---- fused QKV projection: one lane-dense (H, 3H) matmul ----
        qkv = jnp.einsum('bsh,hd->bsd', x, wqkv_ref[l],
                         preferred_element_type=jnp.float32) + bqkv_ref[l]
        q = qkv[:, :, 0:H]
        k = qkv[:, :, H:2 * H]
        v = qkv[:, :, 2 * H:3 * H]

        # ---- multi-head attention (static 4-way unroll over heads) ----
        # Per-head context is folded straight into the output projection via
        # Wo row-slices (sum over heads == concat-then-matmul; exact).
        wo = wo_ref[l]
        attn = jnp.zeros_like(x)
        for h in range(NUM_HEADS):
            lo, hi = h * HEAD_DIM, (h + 1) * HEAD_DIM
            sc = jnp.einsum('bqd,bkd->bqk', q[:, :, lo:hi], k[:, :, lo:hi],
                            preferred_element_type=jnp.float32) * scale + bias
            p = _softmax_last(sc, approx=True)
            ctx = jnp.einsum('bqk,bkd->bqd', p, v[:, :, lo:hi],
                             preferred_element_type=jnp.float32)
            attn = attn + jnp.einsum('bqd,dh->bqh', ctx, wo[lo:hi, :],
                                     preferred_element_type=jnp.float32)
        attn = attn + bo_ref[l]

        # Add & Norm (post-LN, as in BERT)
        x = _layer_norm(x + attn, g1_ref[l], b1_ref[l])

        # FFN: GELU(x W1 + b1) W2 + b2   (tanh-approx GELU; exact-erf differs <1e-3)
        hdn = jax.nn.gelu(
            jnp.einsum('bsh,hi->bsi', x, w1_ref[l],
                       preferred_element_type=jnp.float32) + bi1_ref[l],
            approximate=True)
        ffn = jnp.einsum('bsi,ih->bsh', hdn, w2_ref[l],
                         preferred_element_type=jnp.float32) + bi2_ref[l]

        x = _layer_norm(x + ffn, g2_ref[l], b2_ref[l])

    # ---- BERT pooler on the [CLS] token + dropout(eval) + classifier + softmax ----
    cls3 = x[:, 0:1, :]                                                # (B, 1, H)
    pooled = jnp.tanh(jnp.einsum('bsh,hd->bsd', cls3, wp_ref[...],
                                 preferred_element_type=jnp.float32) + bp_ref[...])
    # nn.Dropout(p=0.3): identity at inference (eval mode).
    # TODO(synk): training-mode dropout would use pltpu.prng_seed/stateful_bernoulli.
    logits = jnp.einsum('bsh,hc->bsc', pooled, wc_ref[...],
                        preferred_element_type=jnp.float32) + bc_ref[...]
    o_ref[...] = _softmax_last(logits)                                 # nn.Softmax(dim=1)


# ---------------- parameter init (deterministic, synthetic) ----------------
def init_params(key):
    std = 0.02

    def nrm(k, shape):
        return std * jax.random.normal(k, shape, jnp.float32)

    ki = iter(jax.random.split(key, 9))
    params = {
        'word_emb': nrm(next(ki), (VOCAB, H)),
        'pos_emb': nrm(next(ki), (MAX_POS, H)),
        'type_emb': nrm(next(ki), (N_TYPES, H)),
        'emb_g': jnp.ones((1, H), jnp.float32),
        'emb_b': jnp.zeros((1, H), jnp.float32),
        # pooler + classifier
        'wp': nrm(next(ki), (H, H)),
        'bp': jnp.zeros((1, H), jnp.float32),
        'wc': nrm(next(ki), (H, N_CLASSES)),
        'bc': jnp.zeros((1, N_CLASSES), jnp.float32),
        # per-layer weights stacked along a leading NUM_LAYERS axis
        'stacked': {
            'wqkv': nrm(next(ki), (NUM_LAYERS, H, 3 * H)),
            'bqkv': jnp.zeros((NUM_LAYERS, 1, 3 * H), jnp.float32),
            'wo':   nrm(next(ki), (NUM_LAYERS, H, H)),
            'bo':   jnp.zeros((NUM_LAYERS, 1, H), jnp.float32),
            'g1':   jnp.ones((NUM_LAYERS, 1, H), jnp.float32),
            'b1':   jnp.zeros((NUM_LAYERS, 1, H), jnp.float32),
            'w1':   nrm(next(ki), (NUM_LAYERS, H, INTERMEDIATE)),
            'bi1':  jnp.zeros((NUM_LAYERS, 1, INTERMEDIATE), jnp.float32),
            'w2':   nrm(next(ki), (NUM_LAYERS, INTERMEDIATE, H)),
            'bi2':  jnp.zeros((NUM_LAYERS, 1, H), jnp.float32),
            'g2':   jnp.ones((NUM_LAYERS, 1, H), jnp.float32),
            'b2':   jnp.zeros((NUM_LAYERS, 1, H), jnp.float32),
        },
    }
    return params


# ---------------- forward (mirrors SentimentClassifier.forward) ----------------
@jax.jit
def sentiment_classifier_forward(params, input_ids, attention_mask):
    # embeddings (gather = plain-JAX glue); everything else is one fused Pallas kernel
    pos_ids = jnp.arange(S)
    emb = (params['word_emb'][input_ids]
           + params['pos_emb'][pos_ids][None, :, :]
           + params['type_emb'][0][None, None, :])
    maskf = attention_mask.astype(jnp.float32)

    L = params['stacked']
    out = pl.pallas_call(
        fused_forward_kernel,
        out_shape=jax.ShapeDtypeStruct((B, 1, N_CLASSES), jnp.float32),
    )(emb, maskf,
      params['emb_g'], params['emb_b'],
      L['wqkv'], L['bqkv'], L['wo'], L['bo'],
      L['g1'], L['b1'], L['w1'], L['bi1'],
      L['w2'], L['bi2'], L['g2'], L['b2'],
      params['wp'], params['bp'], params['wc'], params['bc'])
    return out[:, 0, :]                                # (B, N_CLASSES) softmax probs


if __name__ == "__main__":
    key = jax.random.PRNGKey(0)
    k_param, k_ids = jax.random.split(key)

    params = init_params(k_param)
    input_ids = jax.random.randint(k_ids, (B, S), 0, VOCAB, dtype=jnp.int32)
    # second example has 2 padding tokens at the end
    attention_mask = jnp.array([[1, 1, 1, 1, 1, 1, 1, 1],
                                [1, 1, 1, 1, 1, 1, 0, 0]], dtype=jnp.int32)

    probs = sentiment_classifier_forward(params, input_ids, attention_mask)
    probs = jax.block_until_ready(probs)

    assert probs.shape == (B, N_CLASSES)
    assert bool(jnp.all(jnp.isfinite(probs)))
    assert bool(jnp.allclose(jnp.sum(probs, axis=1), 1.0, atol=1e-5))
    print("KERNEL_OK")
</pallas_src>

<mosaic_0001>
module attributes {stable_mosaic.version = 11 : i64} {
  func.func @fused_forward_kernel(%arg0: memref<2x8x32xf32, #tpu.memory_space<vmem>>, %arg1: memref<2x8xf32, #tpu.memory_space<vmem>>, %arg2: memref<1x32xf32, #tpu.memory_space<vmem>>, %arg3: memref<1x32xf32, #tpu.memory_space<vmem>>, %arg4: memref<2x32x96xf32, #tpu.memory_space<vmem>>, %arg5: memref<2x1x96xf32, #tpu.memory_space<vmem>>, %arg6: memref<2x32x32xf32, #tpu.memory_space<vmem>>, %arg7: memref<2x1x32xf32, #tpu.memory_space<vmem>>, %arg8: memref<2x1x32xf32, #tpu.memory_space<vmem>>, %arg9: memref<2x1x32xf32, #tpu.memory_space<vmem>>, %arg10: memref<2x32x64xf32, #tpu.memory_space<vmem>>, %arg11: memref<2x1x64xf32, #tpu.memory_space<vmem>>, %arg12: memref<2x64x32xf32, #tpu.memory_space<vmem>>, %arg13: memref<2x1x32xf32, #tpu.memory_space<vmem>>, %arg14: memref<2x1x32xf32, #tpu.memory_space<vmem>>, %arg15: memref<2x1x32xf32, #tpu.memory_space<vmem>>, %arg16: memref<32x32xf32, #tpu.memory_space<vmem>>, %arg17: memref<1x32xf32, #tpu.memory_space<vmem>>, %arg18: memref<32x3xf32, #tpu.memory_space<vmem>>, %arg19: memref<1x3xf32, #tpu.memory_space<vmem>>, %arg20: memref<2x1x3xf32, #tpu.memory_space<vmem>>) attributes {dimension_semantics = [], scalar_prefetch = 0 : i64, scratch_operands = 0 : i64, tpu.core_type = #tpu.core_type<tc>} {
    %c0 = arith.constant 0 : index
    %c0_0 = arith.constant 0 : index
    %c0_1 = arith.constant 0 : index
    %0 = vector.load %arg0[%c0, %c0_0, %c0_1] : memref<2x8x32xf32, #tpu.memory_space<vmem>>, vector<2x8x32xf32>
    %c0_2 = arith.constant 0 : index
    %c0_3 = arith.constant 0 : index
    %1 = vector.load %arg2[%c0_2, %c0_3] : memref<1x32xf32, #tpu.memory_space<vmem>>, vector<1x32xf32>
    %c0_4 = arith.constant 0 : index
    %c0_5 = arith.constant 0 : index
    %2 = vector.load %arg3[%c0_4, %c0_5] : memref<1x32xf32, #tpu.memory_space<vmem>>, vector<1x32xf32>
    %cst = arith.constant dense<0.000000e+00> : vector<2x8xf32>
    %3 = vector.multi_reduction <add>, %0, %cst [2] : vector<2x8x32xf32> to vector<2x8xf32>
    %4 = vector.shape_cast %3 : vector<2x8xf32> to vector<2x8x1xf32>
    %cst_6 = arith.constant 3.200000e+01 : f32
    %5 = vector.broadcast %cst_6 : f32 to vector<2x8x1xf32>
    %6 = arith.divf %4, %5 : vector<2x8x1xf32>
    %7 = vector.broadcast %6 : vector<2x8x1xf32> to vector<2x8x32xf32>
    %8 = arith.subf %0, %7 : vector<2x8x32xf32>
    %9 = arith.mulf %8, %8 : vector<2x8x32xf32>
    %cst_7 = arith.constant dense<0.000000e+00> : vector<2x8xf32>
    %10 = vector.multi_reduction <add>, %9, %cst_7 [2] : vector<2x8x32xf32> to vector<2x8xf32>
    %11 = vector.shape_cast %10 : vector<2x8xf32> to vector<2x8x1xf32>
    %cst_8 = arith.constant 3.200000e+01 : f32
    %12 = vector.broadcast %cst_8 : f32 to vector<2x8x1xf32>
    %13 = arith.divf %11, %12 : vector<2x8x1xf32>
    %14 = vector.broadcast %6 : vector<2x8x1xf32> to vector<2x8x32xf32>
    %15 = arith.subf %0, %14 : vector<2x8x32xf32>
    %cst_9 = arith.constant 9.99999996E-13 : f32
    %16 = vector.broadcast %cst_9 : f32 to vector<2x8x1xf32>
    %17 = arith.addf %13, %16 : vector<2x8x1xf32>
    %18 = math.rsqrt %17 : vector<2x8x1xf32>
    %19 = vector.broadcast %18 : vector<2x8x1xf32> to vector<2x8x32xf32>
    %20 = arith.mulf %15, %19 : vector<2x8x32xf32>
    %21 = vector.shape_cast %1 : vector<1x32xf32> to vector<1x1x32xf32>
    %22 = vector.broadcast %21 : vector<1x1x32xf32> to vector<2x8x32xf32>
    %23 = arith.mulf %20, %22 : vector<2x8x32xf32>
    %24 = vector.shape_cast %2 : vector<1x32xf32> to vector<1x1x32xf32>
    %25 = vector.broadcast %24 : vector<1x1x32xf32> to vector<2x8x32xf32>
    %26 = arith.addf %23, %25 : vector<2x8x32xf32>
    %c0_10 = arith.constant 0 : index
    %c0_11 = arith.constant 0 : index
    %27 = vector.load %arg1[%c0_10, %c0_11] : memref<2x8xf32, #tpu.memory_space<vmem>>, vector<2x8xf32>
    %cst_12 = arith.constant 1.000000e+00 : f32
    %28 = vector.broadcast %cst_12 : f32 to vector<2x8xf32>
    %29 = arith.subf %28, %27 : vector<2x8xf32>
    %30 = vector.shape_cast %29 : vector<2x8xf32> to vector<2x1x8xf32>
    %cst_13 = arith.constant -1.000000e+04 : f32
    %31 = vector.broadcast %cst_13 : f32 to vector<2x1x8xf32>
    %32 = arith.mulf %30, %31 : vector<2x1x8xf32>
    %c0_14 = arith.constant 0 : index
    %c0_15 = arith.constant 0 : index
    %c0_16 = arith.constant 0 : index
    %33 = vector.load %arg4[%c0_14, %c0_15, %c0_16] : memref<2x32x96xf32, #tpu.memory_space<vmem>>, vector<1x32x96xf32>
    %34 = vector.shape_cast %33 : vector<1x32x96xf32> to vector<32x96xf32>
    "tpu.trace_start"() <{level = 10 : i32, message = "bsh,hd->bsd"}> : () -> ()
    %cst_17 = arith.constant dense<0.000000e+00> : vector<2x8x96xf32>
    %35 = tpu.matmul %26, %34, %cst_17 {dimension_numbers = #tpu.dot_dimension_numbers<[2], [0], [0, 1], [1], [0, 0, 0, 1, 1, 1], [], []>} : vector<2x8x32xf32>, vector<32x96xf32>, vector<2x8x96xf32> -> vector<2x8x96xf32>
    "tpu.trace_stop"() : () -> ()
    %c0_18 = arith.constant 0 : index
    %c0_19 = arith.constant 0 : index
    %c0_20 = arith.constant 0 : index
    %36 = vector.load %arg5[%c0_18, %c0_19, %c0_20] : memref<2x1x96xf32, #tpu.memory_space<vmem>>, vector<1x1x96xf32>
    %37 = vector.shape_cast %36 : vector<1x1x96xf32> to vector<1x96xf32>
    %38 = vector.shape_cast %37 : vector<1x96xf32> to vector<1x1x96xf32>
    %39 = vector.broadcast %38 : vector<1x1x96xf32> to vector<2x8x96xf32>
    %40 = arith.addf %35, %39 : vector<2x8x96xf32>
    %41 = vector.extract_strided_slice %40 {offsets = [0, 0, 0], sizes = [2, 8, 32], strides = [1, 1, 1]} : vector<2x8x96xf32> to vector<2x8x32xf32>
    %42 = vector.extract_strided_slice %40 {offsets = [0, 0, 32], sizes = [2, 8, 32], strides = [1, 1, 1]} : vector<2x8x96xf32> to vector<2x8x32xf32>
    %43 = vector.extract_strided_slice %40 {offsets = [0, 0, 64], sizes = [2, 8, 32], strides = [1, 1, 1]} : vector<2x8x96xf32> to vector<2x8x32xf32>
    %c0_21 = arith.constant 0 : index
    %c0_22 = arith.constant 0 : index
    %c0_23 = arith.constant 0 : index
    %44 = vector.load %arg6[%c0_21, %c0_22, %c0_23] : memref<2x32x32xf32, #tpu.memory_space<vmem>>, vector<1x32x32xf32>
    %45 = vector.shape_cast %44 : vector<1x32x32xf32> to vector<32x32xf32>
    %cst_24 = arith.constant 0.000000e+00 : f32
    %46 = vector.broadcast %cst_24 : f32 to vector<2x8x32xf32>
    %47 = vector.extract_strided_slice %41 {offsets = [0, 0, 0], sizes = [2, 8, 8], strides = [1, 1, 1]} : vector<2x8x32xf32> to vector<2x8x8xf32>
    %48 = vector.extract_strided_slice %42 {offsets = [0, 0, 0], sizes = [2, 8, 8], strides = [1, 1, 1]} : vector<2x8x32xf32> to vector<2x8x8xf32>
    "tpu.trace_start"() <{level = 10 : i32, message = "bqd,bkd->bqk"}> : () -> ()
    %cst_25 = arith.constant dense<0.000000e+00> : vector<2x8x8xf32>
    %49 = tpu.matmul %47, %48, %cst_25 {dimension_numbers = #tpu.dot_dimension_numbers<[2], [2], [1], [1], [0, 0, 0, 1, 1, 1], [0], [0]>} : vector<2x8x8xf32>, vector<2x8x8xf32>, vector<2x8x8xf32> -> vector<2x8x8xf32>
    "tpu.trace_stop"() : () -> ()
    %cst_26 = arith.constant 0.353553385 : f32
    %50 = vector.broadcast %cst_26 : f32 to vector<2x8x8xf32>
    %51 = arith.mulf %49, %50 : vector<2x8x8xf32>
    %52 = vector.broadcast %32 : vector<2x1x8xf32> to vector<2x8x8xf32>
    %53 = arith.addf %51, %52 : vector<2x8x8xf32>
    %cst_27 = arith.constant dense<0xFF800000> : vector<2x8xf32>
    %54 = vector.multi_reduction <maximumf>, %53, %cst_27 [2] : vector<2x8x8xf32> to vector<2x8xf32>
    %55 = vector.shape_cast %54 : vector<2x8xf32> to vector<2x8x1xf32>
    %56 = vector.broadcast %55 : vector<2x8x1xf32> to vector<2x8x8xf32>
    %57 = arith.subf %53, %56 : vector<2x8x8xf32>
    %58 = math.exp %57 : vector<2x8x8xf32>
    %cst_28 = arith.constant dense<0.000000e+00> : vector<2x8xf32>
    %59 = vector.multi_reduction <add>, %58, %cst_28 [2] : vector<2x8x8xf32> to vector<2x8xf32>
    %60 = vector.shape_cast %59 : vector<2x8xf32> to vector<2x8x1xf32>
    %61 = tpu.reciprocal %60 {approx = true} : vector<2x8x1xf32> -> vector<2x8x1xf32>
    %62 = vector.broadcast %61 : vector<2x8x1xf32> to vector<2x8x8xf32>
    %63 = arith.mulf %58, %62 : vector<2x8x8xf32>
    %64 = vector.extract_strided_slice %43 {offsets = [0, 0, 0], sizes = [2, 8, 8], strides = [1, 1, 1]} : vector<2x8x32xf32> to vector<2x8x8xf32>
    "tpu.trace_start"() <{level = 10 : i32, message = "bqk,bkd->bqd"}> : () -> ()
    %cst_29 = arith.constant dense<0.000000e+00> : vector<2x8x8xf32>
    %65 = tpu.matmul %63, %64, %cst_29 {dimension_numbers = #tpu.dot_dimension_numbers<[2], [1], [1], [2], [0, 0, 0, 1, 1, 2], [0], [0]>} : vector<2x8x8xf32>, vector<2x8x8xf32>, vector<2x8x8xf32> -> vector<2x8x8xf32>
    "tpu.trace_stop"() : () -> ()
    %66 = vector.extract_strided_slice %45 {offsets = [0, 0], sizes = [8, 32], strides = [1, 1]} : vector<32x32xf32> to vector<8x32xf32>
    "tpu.trace_start"() <{level = 10 : i32, message = "bqd,dh->bqh"}> : () -> ()
    %cst_30 = arith.constant dense<0.000000e+00> : vector<2x8x32xf32>
    %67 = tpu.matmul %65, %66, %cst_30 {dimension_numbers = #tpu.dot_dimension_numbers<[2], [0], [0, 1], [1], [0, 0, 0, 1, 1, 1], [], []>} : vector<2x8x8xf32>, vector<8x32xf32>, vector<2x8x32xf32> -> vector<2x8x32xf32>
    "tpu.trace_stop"() : () -> ()
    %68 = arith.addf %46, %67 : vector<2x8x32xf32>
    %69 = vector.extract_strided_slice %41 {offsets = [0, 0, 8], sizes = [2, 8, 8], strides = [1, 1, 1]} : vector<2x8x32xf32> to vector<2x8x8xf32>
    %70 = vector.extract_strided_slice %42 {offsets = [0, 0, 8], sizes = [2, 8, 8], strides = [1, 1, 1]} : vector<2x8x32xf32> to vector<2x8x8xf32>
    "tpu.trace_start"() <{level = 10 : i32, message = "bqd,bkd->bqk"}> : () -> ()
    %cst_31 = arith.constant dense<0.000000e+00> : vector<2x8x8xf32>
    %71 = tpu.matmul %69, %70, %cst_31 {dimension_numbers = #tpu.dot_dimension_numbers<[2], [2], [1], [1], [0, 0, 0, 1, 1, 1], [0], [0]>} : vector<2x8x8xf32>, vector<2x8x8xf32>, vector<2x8x8xf32> -> vector<2x8x8xf32>
    "tpu.trace_stop"() : () -> ()
    %cst_32 = arith.constant 0.353553385 : f32
    %72 = vector.broadcast %cst_32 : f32 to vector<2x8x8xf32>
    %73 = arith.mulf %71, %72 : vector<2x8x8xf32>
    %74 = vector.broadcast %32 : vector<2x1x8xf32> to vector<2x8x8xf32>
    %75 = arith.addf %73, %74 : vector<2x8x8xf32>
    %cst_33 = arith.constant dense<0xFF800000> : vector<2x8xf32>
    %76 = vector.multi_reduction <maximumf>, %75, %cst_33 [2] : vector<2x8x8xf32> to vector<2x8xf32>
    %77 = vector.shape_cast %76 : vector<2x8xf32> to vector<2x8x1xf32>
    %78 = vector.broadcast %77 : vector<2x8x1xf32> to vector<2x8x8xf32>
    %79 = arith.subf %75, %78 : vector<2x8x8xf32>
    %80 = math.exp %79 : vector<2x8x8xf32>
    %cst_34 = arith.constant dense<0.000000e+00> : vector<2x8xf32>
    %81 = vector.multi_reduction <add>, %80, %cst_34 [2] : vector<2x8x8xf32> to vector<2x8xf32>
    %82 = vector.shape_cast %81 : vector<2x8xf32> to vector<2x8x1xf32>
    %83 = tpu.reciprocal %82 {approx = true} : vector<2x8x1xf32> -> vector<2x8x1xf32>
    %84 = vector.broadcast %83 : vector<2x8x1xf32> to vector<2x8x8xf32>
    %85 = arith.mulf %80, %84 : vector<2x8x8xf32>
    %86 = vector.extract_strided_slice %43 {offsets = [0, 0, 8], sizes = [2, 8, 8], strides = [1, 1, 1]} : vector<2x8x32xf32> to vector<2x8x8xf32>
    "tpu.trace_start"() <{level = 10 : i32, message = "bqk,bkd->bqd"}> : () -> ()
    %cst_35 = arith.constant dense<0.000000e+00> : vector<2x8x8xf32>
    %87 = tpu.matmul %85, %86, %cst_35 {dimension_numbers = #tpu.dot_dimension_numbers<[2], [1], [1], [2], [0, 0, 0, 1, 1, 2], [0], [0]>} : vector<2x8x8xf32>, vector<2x8x8xf32>, vector<2x8x8xf32> -> vector<2x8x8xf32>
    "tpu.trace_stop"() : () -> ()
    %88 = vector.extract_strided_slice %45 {offsets = [8, 0], sizes = [8, 32], strides = [1, 1]} : vector<32x32xf32> to vector<8x32xf32>
    "tpu.trace_start"() <{level = 10 : i32, message = "bqd,dh->bqh"}> : () -> ()
    %cst_36 = arith.constant dense<0.000000e+00> : vector<2x8x32xf32>
    %89 = tpu.matmul %87, %88, %cst_36 {dimension_numbers = #tpu.dot_dimension_numbers<[2], [0], [0, 1], [1], [0, 0, 0, 1, 1, 1], [], []>} : vector<2x8x8xf32>, vector<8x32xf32>, vector<2x8x32xf32> -> vector<2x8x32xf32>
    "tpu.trace_stop"() : () -> ()
    %90 = arith.addf %68, %89 : vector<2x8x32xf32>
    %91 = vector.extract_strided_slice %41 {offsets = [0, 0, 16], sizes = [2, 8, 8], strides = [1, 1, 1]} : vector<2x8x32xf32> to vector<2x8x8xf32>
    %92 = vector.extract_strided_slice %42 {offsets = [0, 0, 16], sizes = [2, 8, 8], strides = [1, 1, 1]} : vector<2x8x32xf32> to vector<2x8x8xf32>
    "tpu.trace_start"() <{level = 10 : i32, message = "bqd,bkd->bqk"}> : () -> ()
    %cst_37 = arith.constant dense<0.000000e+00> : vector<2x8x8xf32>
    %93 = tpu.matmul %91, %92, %cst_37 {dimension_numbers = #tpu.dot_dimension_numbers<[2], [2], [1], [1], [0, 0, 0, 1, 1, 1], [0], [0]>} : vector<2x8x8xf32>, vector<2x8x8xf32>, vector<2x8x8xf32> -> vector<2x8x8xf32>
    "tpu.trace_stop"() : () -> ()
    %cst_38 = arith.constant 0.353553385 : f32
    %94 = vector.broadcast %cst_38 : f32 to vector<2x8x8xf32>
    %95 = arith.mulf %93, %94 : vector<2x8x8xf32>
    %96 = vector.broadcast %32 : vector<2x1x8xf32> to vector<2x8x8xf32>
    %97 = arith.addf %95, %96 : vector<2x8x8xf32>
    %cst_39 = arith.constant dense<0xFF800000> : vector<2x8xf32>
    %98 = vector.multi_reduction <maximumf>, %97, %cst_39 [2] : vector<2x8x8xf32> to vector<2x8xf32>
    %99 = vector.shape_cast %98 : vector<2x8xf32> to vector<2x8x1xf32>
    %100 = vector.broadcast %99 : vector<2x8x1xf32> to vector<2x8x8xf32>
    %101 = arith.subf %97, %100 : vector<2x8x8xf32>
    %102 = math.exp %101 : vector<2x8x8xf32>
    %cst_40 = arith.constant dense<0.000000e+00> : vector<2x8xf32>
    %103 = vector.multi_reduction <add>, %102, %cst_40 [2] : vector<2x8x8xf32> to vector<2x8xf32>
    %104 = vector.shape_cast %103 : vector<2x8xf32> to vector<2x8x1xf32>
    %105 = tpu.reciprocal %104 {approx = true} : vector<2x8x1xf32> -> vector<2x8x1xf32>
    %106 = vector.broadcast %105 : vector<2x8x1xf32> to vector<2x8x8xf32>
    %107 = arith.mulf %102, %106 : vector<2x8x8xf32>
    %108 = vector.extract_strided_slice %43 {offsets = [0, 0, 16], sizes = [2, 8, 8], strides = [1, 1, 1]} : vector<2x8x32xf32> to vector<2x8x8xf32>
    "tpu.trace_start"() <{level = 10 : i32, message = "bqk,bkd->bqd"}> : () -> ()
    %cst_41 = arith.constant dense<0.000000e+00> : vector<2x8x8xf32>
    %109 = tpu.matmul %107, %108, %cst_41 {dimension_numbers = #tpu.dot_dimension_numbers<[2], [1], [1], [2], [0, 0, 0, 1, 1, 2], [0], [0]>} : vector<2x8x8xf32>, vector<2x8x8xf32>, vector<2x8x8xf32> -> vector<2x8x8xf32>
    "tpu.trace_stop"() : () -> ()
    %110 = vector.extract_strided_slice %45 {offsets = [16, 0], sizes = [8, 32], strides = [1, 1]} : vector<32x32xf32> to vector<8x32xf32>
    "tpu.trace_start"() <{level = 10 : i32, message = "bqd,dh->bqh"}> : () -> ()
    %cst_42 = arith.constant dense<0.000000e+00> : vector<2x8x32xf32>
    %111 = tpu.matmul %109, %110, %cst_42 {dimension_numbers = #tpu.dot_dimension_numbers<[2], [0], [0, 1], [1], [0, 0, 0, 1, 1, 1], [], []>} : vector<2x8x8xf32>, vector<8x32xf32>, vector<2x8x32xf32> -> vector<2x8x32xf32>
    "tpu.trace_stop"() : () -> ()
    %112 = arith.addf %90, %111 : vector<2x8x32xf32>
    %113 = vector.extract_strided_slice %41 {offsets = [0, 0, 24], sizes = [2, 8, 8], strides = [1, 1, 1]} : vector<2x8x32xf32> to vector<2x8x8xf32>
    %114 = vector.extract_strided_slice %42 {offsets = [0, 0, 24], sizes = [2, 8, 8], strides = [1, 1, 1]} : vector<2x8x32xf32> to vector<2x8x8xf32>
    "tpu.trace_start"() <{level = 10 : i32, message = "bqd,bkd->bqk"}> : () -> ()
    %cst_43 = arith.constant dense<0.000000e+00> : vector<2x8x8xf32>
    %115 = tpu.matmul %113, %114, %cst_43 {dimension_numbers = #tpu.dot_dimension_numbers<[2], [2], [1], [1], [0, 0, 0, 1, 1, 1], [0], [0]>} : vector<2x8x8xf32>, vector<2x8x8xf32>, vector<2x8x8xf32> -> vector<2x8x8xf32>
    "tpu.trace_stop"() : () -> ()
    %cst_44 = arith.constant 0.353553385 : f32
    %116 = vector.broadcast %cst_44 : f32 to vector<2x8x8xf32>
    %117 = arith.mulf %115, %116 : vector<2x8x8xf32>
    %118 = vector.broadcast %32 : vector<2x1x8xf32> to vector<2x8x8xf32>
    %119 = arith.addf %117, %118 : vector<2x8x8xf32>
    %cst_45 = arith.constant dense<0xFF800000> : vector<2x8xf32>
    %120 = vector.multi_reduction <maximumf>, %119, %cst_45 [2] : vector<2x8x8xf32> to vector<2x8xf32>
    %121 = vector.shape_cast %120 : vector<2x8xf32> to vector<2x8x1xf32>
    %122 = vector.broadcast %121 : vector<2x8x1xf32> to vector<2x8x8xf32>
    %123 = arith.subf %119, %122 : vector<2x8x8xf32>
    %124 = math.exp %123 : vector<2x8x8xf32>
    %cst_46 = arith.constant dense<0.000000e+00> : vector<2x8xf32>
    %125 = vector.multi_reduction <add>, %124, %cst_46 [2] : vector<2x8x8xf32> to vector<2x8xf32>
    %126 = vector.shape_cast %125 : vector<2x8xf32> to vector<2x8x1xf32>
    %127 = tpu.reciprocal %126 {approx = true} : vector<2x8x1xf32> -> vector<2x8x1xf32>
    %128 = vector.broadcast %127 : vector<2x8x1xf32> to vector<2x8x8xf32>
    %129 = arith.mulf %124, %128 : vector<2x8x8xf32>
    %130 = vector.extract_strided_slice %43 {offsets = [0, 0, 24], sizes = [2, 8, 8], strides = [1, 1, 1]} : vector<2x8x32xf32> to vector<2x8x8xf32>
    "tpu.trace_start"() <{level = 10 : i32, message = "bqk,bkd->bqd"}> : () -> ()
    %cst_47 = arith.constant dense<0.000000e+00> : vector<2x8x8xf32>
    %131 = tpu.matmul %129, %130, %cst_47 {dimension_numbers = #tpu.dot_dimension_numbers<[2], [1], [1], [2], [0, 0, 0, 1, 1, 2], [0], [0]>} : vector<2x8x8xf32>, vector<2x8x8xf32>, vector<2x8x8xf32> -> vector<2x8x8xf32>
    "tpu.trace_stop"() : () -> ()
    %132 = vector.extract_strided_slice %45 {offsets = [24, 0], sizes = [8, 32], strides = [1, 1]} : vector<32x32xf32> to vector<8x32xf32>
    "tpu.trace_start"() <{level = 10 : i32, message = "bqd,dh->bqh"}> : () -> ()
    %cst_48 = arith.constant dense<0.000000e+00> : vector<2x8x32xf32>
    %133 = tpu.matmul %131, %132, %cst_48 {dimension_numbers = #tpu.dot_dimension_numbers<[2], [0], [0, 1], [1], [0, 0, 0, 1, 1, 1], [], []>} : vector<2x8x8xf32>, vector<8x32xf32>, vector<2x8x32xf32> -> vector<2x8x32xf32>
    "tpu.trace_stop"() : () -> ()
    %134 = arith.addf %112, %133 : vector<2x8x32xf32>
    %c0_49 = arith.constant 0 : index
    %c0_50 = arith.constant 0 : index
    %c0_51 = arith.constant 0 : index
    %135 = vector.load %arg7[%c0_49, %c0_50, %c0_51] : memref<2x1x32xf32, #tpu.memory_space<vmem>>, vector<1x1x32xf32>
    %136 = vector.shape_cast %135 : vector<1x1x32xf32> to vector<1x32xf32>
    %137 = vector.shape_cast %136 : vector<1x32xf32> to vector<1x1x32xf32>
    %138 = vector.broadcast %137 : vector<1x1x32xf32> to vector<2x8x32xf32>
    %139 = arith.addf %134, %138 : vector<2x8x32xf32>
    %140 = arith.addf %26, %139 : vector<2x8x32xf32>
    %c0_52 = arith.constant 0 : index
    %c0_53 = arith.constant 0 : index
    %c0_54 = arith.constant 0 : index
    %141 = vector.load %arg8[%c0_52, %c0_53, %c0_54] : memref<2x1x32xf32, #tpu.memory_space<vmem>>, vector<1x1x32xf32>
    %142 = vector.shape_cast %141 : vector<1x1x32xf32> to vector<1x32xf32>
    %c0_55 = arith.constant 0 : index
    %c0_56 = arith.constant 0 : index
    %c0_57 = arith.constant 0 : index
    %143 = vector.load %arg9[%c0_55, %c0_56, %c0_57] : memref<2x1x32xf32, #tpu.memory_space<vmem>>, vector<1x1x32xf32>
    %144 = vector.shape_cast %143 : vector<1x1x32xf32> to vector<1x32xf32>
    %cst_58 = arith.constant dense<0.000000e+00> : vector<2x8xf32>
    %145 = vector.multi_reduction <add>, %140, %cst_58 [2] : vector<2x8x32xf32> to vector<2x8xf32>
    %146 = vector.shape_cast %145 : vector<2x8xf32> to vector<2x8x1xf32>
    %cst_59 = arith.constant 3.200000e+01 : f32
    %147 = vector.broadcast %cst_59 : f32 to vector<2x8x1xf32>
    %148 = arith.divf %146, %147 : vector<2x8x1xf32>
    %149 = vector.broadcast %148 : vector<2x8x1xf32> to vector<2x8x32xf32>
    %150 = arith.subf %140, %149 : vector<2x8x32xf32>
    %151 = arith.mulf %150, %150 : vector<2x8x32xf32>
    %cst_60 = arith.constant dense<0.000000e+00> : vector<2x8xf32>
    %152 = vector.multi_reduction <add>, %151, %cst_60 [2] : vector<2x8x32xf32> to vector<2x8xf32>
    %153 = vector.shape_cast %152 : vector<2x8xf32> to vector<2x8x1xf32>
    %cst_61 = arith.constant 3.200000e+01 : f32
    %154 = vector.broadcast %cst_61 : f32 to vector<2x8x1xf32>
    %155 = arith.divf %153, %154 : vector<2x8x1xf32>
    %156 = vector.broadcast %148 : vector<2x8x1xf32> to vector<2x8x32xf32>
    %157 = arith.subf %140, %156 : vector<2x8x32xf32>
    %cst_62 = arith.constant 9.99999996E-13 : f32
    %158 = vector.broadcast %cst_62 : f32 to vector<2x8x1xf32>
    %159 = arith.addf %155, %158 : vector<2x8x1xf32>
    %160 = math.rsqrt %159 : vector<2x8x1xf32>
    %161 = vector.broadcast %160 : vector<2x8x1xf32> to vector<2x8x32xf32>
    %162 = arith.mulf %157, %161 : vector<2x8x32xf32>
    %163 = vector.shape_cast %142 : vector<1x32xf32> to vector<1x1x32xf32>
    %164 = vector.broadcast %163 : vector<1x1x32xf32> to vector<2x8x32xf32>
    %165 = arith.mulf %162, %164 : vector<2x8x32xf32>
    %166 = vector.shape_cast %144 : vector<1x32xf32> to vector<1x1x32xf32>
    %167 = vector.broadcast %166 : vector<1x1x32xf32> to vector<2x8x32xf32>
    %168 = arith.addf %165, %167 : vector<2x8x32xf32>
    %c0_63 = arith.constant 0 : index
    %c0_64 = arith.constant 0 : index
    %c0_65 = arith.constant 0 : index
    %169 = vector.load %arg10[%c0_63, %c0_64, %c0_65] : memref<2x32x64xf32, #tpu.memory_space<vmem>>, vector<1x32x64xf32>
    %170 = vector.shape_cast %169 : vector<1x32x64xf32> to vector<32x64xf32>
    "tpu.trace_start"() <{level = 10 : i32, message = "bsh,hi->bsi"}> : () -> ()
    %cst_66 = arith.constant dense<0.000000e+00> : vector<2x8x64xf32>
    %171 = tpu.matmul %168, %170, %cst_66 {dimension_numbers = #tpu.dot_dimension_numbers<[2], [0], [0, 1], [1], [0, 0, 0, 1, 1, 1], [], []>} : vector<2x8x32xf32>, vector<32x64xf32>, vector<2x8x64xf32> -> vector<2x8x64xf32>
    "tpu.trace_stop"() : () -> ()
    %c0_67 = arith.constant 0 : index
    %c0_68 = arith.constant 0 : index
    %c0_69 = arith.constant 0 : index
    %172 = vector.load %arg11[%c0_67, %c0_68, %c0_69] : memref<2x1x64xf32, #tpu.memory_space<vmem>>, vector<1x1x64xf32>
    %173 = vector.shape_cast %172 : vector<1x1x64xf32> to vector<1x64xf32>
    %174 = vector.shape_cast %173 : vector<1x64xf32> to vector<1x1x64xf32>
    %175 = vector.broadcast %174 : vector<1x1x64xf32> to vector<2x8x64xf32>
    %176 = arith.addf %171, %175 : vector<2x8x64xf32>
    %177 = arith.mulf %176, %176 : vector<2x8x64xf32>
    %178 = arith.mulf %176, %177 : vector<2x8x64xf32>
    %cst_70 = arith.constant 4.471500e-02 : f32
    %179 = vector.broadcast %cst_70 : f32 to vector<2x8x64xf32>
    %180 = arith.mulf %179, %178 : vector<2x8x64xf32>
    %181 = arith.addf %176, %180 : vector<2x8x64xf32>
    %cst_71 = arith.constant 0.797884583 : f32
    %182 = vector.broadcast %cst_71 : f32 to vector<2x8x64xf32>
    %183 = arith.mulf %182, %181 : vector<2x8x64xf32>
    %184 = math.tanh %183 : vector<2x8x64xf32>
    %cst_72 = arith.constant 1.000000e+00 : f32
    %185 = vector.broadcast %cst_72 : f32 to vector<2x8x64xf32>
    %186 = arith.addf %185, %184 : vector<2x8x64xf32>
    %cst_73 = arith.constant 5.000000e-01 : f32
    %187 = vector.broadcast %cst_73 : f32 to vector<2x8x64xf32>
    %188 = arith.mulf %187, %186 : vector<2x8x64xf32>
    %189 = arith.mulf %176, %188 : vector<2x8x64xf32>
    %c0_74 = arith.constant 0 : index
    %c0_75 = arith.constant 0 : index
    %c0_76 = arith.constant 0 : index
    %190 = vector.load %arg12[%c0_74, %c0_75, %c0_76] : memref<2x64x32xf32, #tpu.memory_space<vmem>>, vector<1x64x32xf32>
    %191 = vector.shape_cast %190 : vector<1x64x32xf32> to vector<64x32xf32>
    "tpu.trace_start"() <{level = 10 : i32, message = "bsi,ih->bsh"}> : () -> ()
    %cst_77 = arith.constant dense<0.000000e+00> : vector<2x8x32xf32>
    %192 = tpu.matmul %189, %191, %cst_77 {dimension_numbers = #tpu.dot_dimension_numbers<[2], [0], [0, 1], [1], [0, 0, 0, 1, 1, 1], [], []>} : vector<2x8x64xf32>, vector<64x32xf32>, vector<2x8x32xf32> -> vector<2x8x32xf32>
    "tpu.trace_stop"() : () -> ()
    %c0_78 = arith.constant 0 : index
    %c0_79 = arith.constant 0 : index
    %c0_80 = arith.constant 0 : index
    %193 = vector.load %arg13[%c0_78, %c0_79, %c0_80] : memref<2x1x32xf32, #tpu.memory_space<vmem>>, vector<1x1x32xf32>
    %194 = vector.shape_cast %193 : vector<1x1x32xf32> to vector<1x32xf32>
    %195 = vector.shape_cast %194 : vector<1x32xf32> to vector<1x1x32xf32>
    %196 = vector.broadcast %195 : vector<1x1x32xf32> to vector<2x8x32xf32>
    %197 = arith.addf %192, %196 : vector<2x8x32xf32>
    %198 = arith.addf %168, %197 : vector<2x8x32xf32>
    %c0_81 = arith.constant 0 : index
    %c0_82 = arith.constant 0 : index
    %c0_83 = arith.constant 0 : index
    %199 = vector.load %arg14[%c0_81, %c0_82, %c0_83] : memref<2x1x32xf32, #tpu.memory_space<vmem>>, vector<1x1x32xf32>
    %200 = vector.shape_cast %199 : vector<1x1x32xf32> to vector<1x32xf32>
    %c0_84 = arith.constant 0 : index
    %c0_85 = arith.constant 0 : index
    %c0_86 = arith.constant 0 : index
    %201 = vector.load %arg15[%c0_84, %c0_85, %c0_86] : memref<2x1x32xf32, #tpu.memory_space<vmem>>, vector<1x1x32xf32>
    %202 = vector.shape_cast %201 : vector<1x1x32xf32> to vector<1x32xf32>
    %cst_87 = arith.constant dense<0.000000e+00> : vector<2x8xf32>
    %203 = vector.multi_reduction <add>, %198, %cst_87 [2] : vector<2x8x32xf32> to vector<2x8xf32>
    %204 = vector.shape_cast %203 : vector<2x8xf32> to vector<2x8x1xf32>
    %cst_88 = arith.constant 3.200000e+01 : f32
    %205 = vector.broadcast %cst_88 : f32 to vector<2x8x1xf32>
    %206 = arith.divf %204, %205 : vector<2x8x1xf32>
    %207 = vector.broadcast %206 : vector<2x8x1xf32> to vector<2x8x32xf32>
    %208 = arith.subf %198, %207 : vector<2x8x32xf32>
    %209 = arith.mulf %208, %208 : vector<2x8x32xf32>
    %cst_89 = arith.constant dense<0.000000e+00> : vector<2x8xf32>
    %210 = vector.multi_reduction <add>, %209, %cst_89 [2] : vector<2x8x32xf32> to vector<2x8xf32>
    %211 = vector.shape_cast %210 : vector<2x8xf32> to vector<2x8x1xf32>
    %cst_90 = arith.constant 3.200000e+01 : f32
    %212 = vector.broadcast %cst_90 : f32 to vector<2x8x1xf32>
    %213 = arith.divf %211, %212 : vector<2x8x1xf32>
    %214 = vector.broadcast %206 : vector<2x8x1xf32> to vector<2x8x32xf32>
    %215 = arith.subf %198, %214 : vector<2x8x32xf32>
    %cst_91 = arith.constant 9.99999996E-13 : f32
    %216 = vector.broadcast %cst_91 : f32 to vector<2x8x1xf32>
    %217 = arith.addf %213, %216 : vector<2x8x1xf32>
    %218 = math.rsqrt %217 : vector<2x8x1xf32>
    %219 = vector.broadcast %218 : vector<2x8x1xf32> to vector<2x8x32xf32>
    %220 = arith.mulf %215, %219 : vector<2x8x32xf32>
    %221 = vector.shape_cast %200 : vector<1x32xf32> to vector<1x1x32xf32>
    %222 = vector.broadcast %221 : vector<1x1x32xf32> to vector<2x8x32xf32>
    %223 = arith.mulf %220, %222 : vector<2x8x32xf32>
    %224 = vector.shape_cast %202 : vector<1x32xf32> to vector<1x1x32xf32>
    %225 = vector.broadcast %224 : vector<1x1x32xf32> to vector<2x8x32xf32>
    %226 = arith.addf %223, %225 : vector<2x8x32xf32>
    %c1 = arith.constant 1 : index
    %c0_92 = arith.constant 0 : index
    %c0_93 = arith.constant 0 : index
    %227 = vector.load %arg4[%c1, %c0_92, %c0_93] : memref<2x32x96xf32, #tpu.memory_space<vmem>>, vector<1x32x96xf32>
    %228 = vector.shape_cast %227 : vector<1x32x96xf32> to vector<32x96xf32>
    "tpu.trace_start"() <{level = 10 : i32, message = "bsh,hd->bsd"}> : () -> ()
    %cst_94 = arith.constant dense<0.000000e+00> : vector<2x8x96xf32>
    %229 = tpu.matmul %226, %228, %cst_94 {dimension_numbers = #tpu.dot_dimension_numbers<[2], [0], [0, 1], [1], [0, 0, 0, 1, 1, 1], [], []>} : vector<2x8x32xf32>, vector<32x96xf32>, vector<2x8x96xf32> -> vector<2x8x96xf32>
    "tpu.trace_stop"() : () -> ()
    %c1_95 = arith.constant 1 : index
    %c0_96 = arith.constant 0 : index
    %c0_97 = arith.constant 0 : index
    %230 = vector.load %arg5[%c1_95, %c0_96, %c0_97] : memref<2x1x96xf32, #tpu.memory_space<vmem>>, vector<1x1x96xf32>
    %231 = vector.shape_cast %230 : vector<1x1x96xf32> to vector<1x96xf32>
    %232 = vector.shape_cast %231 : vector<1x96xf32> to vector<1x1x96xf32>
    %233 = vector.broadcast %232 : vector<1x1x96xf32> to vector<2x8x96xf32>
    %234 = arith.addf %229, %233 : vector<2x8x96xf32>
    %235 = vector.extract_strided_slice %234 {offsets = [0, 0, 0], sizes = [2, 8, 32], strides = [1, 1, 1]} : vector<2x8x96xf32> to vector<2x8x32xf32>
    %236 = vector.extract_strided_slice %234 {offsets = [0, 0, 32], sizes = [2, 8, 32], strides = [1, 1, 1]} : vector<2x8x96xf32> to vector<2x8x32xf32>
    %237 = vector.extract_strided_slice %234 {offsets = [0, 0, 64], sizes = [2, 8, 32], strides = [1, 1, 1]} : vector<2x8x96xf32> to vector<2x8x32xf32>
    %c1_98 = arith.constant 1 : index
    %c0_99 = arith.constant 0 : index
    %c0_100 = arith.constant 0 : index
    %238 = vector.load %arg6[%c1_98, %c0_99, %c0_100] : memref<2x32x32xf32, #tpu.memory_space<vmem>>, vector<1x32x32xf32>
    %239 = vector.shape_cast %238 : vector<1x32x32xf32> to vector<32x32xf32>
    %cst_101 = arith.constant 0.000000e+00 : f32
    %240 = vector.broadcast %cst_101 : f32 to vector<2x8x32xf32>
    %241 = vector.extract_strided_slice %235 {offsets = [0, 0, 0], sizes = [2, 8, 8], strides = [1, 1, 1]} : vector<2x8x32xf32> to vector<2x8x8xf32>
    %242 = vector.extract_strided_slice %236 {offsets = [0, 0, 0], sizes = [2, 8, 8], strides = [1, 1, 1]} : vector<2x8x32xf32> to vector<2x8x8xf32>
    "tpu.trace_start"() <{level = 10 : i32, message = "bqd,bkd->bqk"}> : () -> ()
    %cst_102 = arith.constant dense<0.000000e+00> : vector<2x8x8xf32>
    %243 = tpu.matmul %241, %242, %cst_102 {dimension_numbers = #tpu.dot_dimension_numbers<[2], [2], [1], [1], [0, 0, 0, 1, 1, 1], [0], [0]>} : vector<2x8x8xf32>, vector<2x8x8xf32>, vector<2x8x8xf32> -> vector<2x8x8xf32>
    "tpu.trace_stop"() : () -> ()
    %cst_103 = arith.constant 0.353553385 : f32
    %244 = vector.broadcast %cst_103 : f32 to vector<2x8x8xf32>
    %245 = arith.mulf %243, %244 : vector<2x8x8xf32>
    %246 = vector.broadcast %32 : vector<2x1x8xf32> to vector<2x8x8xf32>
    %247 = arith.addf %245, %246 : vector<2x8x8xf32>
    %cst_104 = arith.constant dense<0xFF800000> : vector<2x8xf32>
    %248 = vector.multi_reduction <maximumf>, %247, %cst_104 [2] : vector<2x8x8xf32> to vector<2x8xf32>
    %249 = vector.shape_cast %248 : vector<2x8xf32> to vector<2x8x1xf32>
    %250 = vector.broadcast %249 : vector<2x8x1xf32> to vector<2x8x8xf32>
    %251 = arith.subf %247, %250 : vector<2x8x8xf32>
    %252 = math.exp %251 : vector<2x8x8xf32>
    %cst_105 = arith.constant dense<0.000000e+00> : vector<2x8xf32>
    %253 = vector.multi_reduction <add>, %252, %cst_105 [2] : vector<2x8x8xf32> to vector<2x8xf32>
    %254 = vector.shape_cast %253 : vector<2x8xf32> to vector<2x8x1xf32>
    %255 = tpu.reciprocal %254 {approx = true} : vector<2x8x1xf32> -> vector<2x8x1xf32>
    %256 = vector.broadcast %255 : vector<2x8x1xf32> to vector<2x8x8xf32>
    %257 = arith.mulf %252, %256 : vector<2x8x8xf32>
    %258 = vector.extract_strided_slice %237 {offsets = [0, 0, 0], sizes = [2, 8, 8], strides = [1, 1, 1]} : vector<2x8x32xf32> to vector<2x8x8xf32>
    "tpu.trace_start"() <{level = 10 : i32, message = "bqk,bkd->bqd"}> : () -> ()
    %cst_106 = arith.constant dense<0.000000e+00> : vector<2x8x8xf32>
    %259 = tpu.matmul %257, %258, %cst_106 {dimension_numbers = #tpu.dot_dimension_numbers<[2], [1], [1], [2], [0, 0, 0, 1, 1, 2], [0], [0]>} : vector<2x8x8xf32>, vector<2x8x8xf32>, vector<2x8x8xf32> -> vector<2x8x8xf32>
    "tpu.trace_stop"() : () -> ()
    %260 = vector.extract_strided_slice %239 {offsets = [0, 0], sizes = [8, 32], strides = [1, 1]} : vector<32x32xf32> to vector<8x32xf32>
    "tpu.trace_start"() <{level = 10 : i32, message = "bqd,dh->bqh"}> : () -> ()
    %cst_107 = arith.constant dense<0.000000e+00> : vector<2x8x32xf32>
    %261 = tpu.matmul %259, %260, %cst_107 {dimension_numbers = #tpu.dot_dimension_numbers<[2], [0], [0, 1], [1], [0, 0, 0, 1, 1, 1], [], []>} : vector<2x8x8xf32>, vector<8x32xf32>, vector<2x8x32xf32> -> vector<2x8x32xf32>
    "tpu.trace_stop"() : () -> ()
    %262 = arith.addf %240, %261 : vector<2x8x32xf32>
    %263 = vector.extract_strided_slice %235 {offsets = [0, 0, 8], sizes = [2, 8, 8], strides = [1, 1, 1]} : vector<2x8x32xf32> to vector<2x8x8xf32>
    %264 = vector.extract_strided_slice %236 {offsets = [0, 0, 8], sizes = [2, 8, 8], strides = [1, 1, 1]} : vector<2x8x32xf32> to vector<2x8x8xf32>
    "tpu.trace_start"() <{level = 10 : i32, message = "bqd,bkd->bqk"}> : () -> ()
    %cst_108 = arith.constant dense<0.000000e+00> : vector<2x8x8xf32>
    %265 = tpu.matmul %263, %264, %cst_108 {dimension_numbers = #tpu.dot_dimension_numbers<[2], [2], [1], [1], [0, 0, 0, 1, 1, 1], [0], [0]>} : vector<2x8x8xf32>, vector<2x8x8xf32>, vector<2x8x8xf32> -> vector<2x8x8xf32>
    "tpu.trace_stop"() : () -> ()
    %cst_109 = arith.constant 0.353553385 : f32
    %266 = vector.broadcast %cst_109 : f32 to vector<2x8x8xf32>
    %267 = arith.mulf %265, %266 : vector<2x8x8xf32>
    %268 = vector.broadcast %32 : vector<2x1x8xf32> to vector<2x8x8xf32>
    %269 = arith.addf %267, %268 : vector<2x8x8xf32>
    %cst_110 = arith.constant dense<0xFF800000> : vector<2x8xf32>
    %270 = vector.multi_reduction <maximumf>, %269, %cst_110 [2] : vector<2x8x8xf32> to vector<2x8xf32>
    %271 = vector.shape_cast %270 : vector<2x8xf32> to vector<2x8x1xf32>
    %272 = vector.broadcast %271 : vector<2x8x1xf32> to vector<2x8x8xf32>
    %273 = arith.subf %269, %272 : vector<2x8x8xf32>
    %274 = math.exp %273 : vector<2x8x8xf32>
    %cst_111 = arith.constant dense<0.000000e+00> : vector<2x8xf32>
    %275 = vector.multi_reduction <add>, %274, %cst_111 [2] : vector<2x8x8xf32> to vector<2x8xf32>
    %276 = vector.shape_cast %275 : vector<2x8xf32> to vector<2x8x1xf32>
    %277 = tpu.reciprocal %276 {approx = true} : vector<2x8x1xf32> -> vector<2x8x1xf32>
    %278 = vector.broadcast %277 : vector<2x8x1xf32> to vector<2x8x8xf32>
    %279 = arith.mulf %274, %278 : vector<2x8x8xf32>
    %280 = vector.extract_strided_slice %237 {offsets = [0, 0, 8], sizes = [2, 8, 8], strides = [1, 1, 1]} : vector<2x8x32xf32> to vector<2x8x8xf32>
    "tpu.trace_start"() <{level = 10 : i32, message = "bqk,bkd->bqd"}> : () -> ()
    %cst_112 = arith.constant dense<0.000000e+00> : vector<2x8x8xf32>
    %281 = tpu.matmul %279, %280, %cst_112 {dimension_numbers = #tpu.dot_dimension_numbers<[2], [1], [1], [2], [0, 0, 0, 1, 1, 2], [0], [0]>} : vector<2x8x8xf32>, vector<2x8x8xf32>, vector<2x8x8xf32> -> vector<2x8x8xf32>
    "tpu.trace_stop"() : () -> ()
    %282 = vector.extract_strided_slice %239 {offsets = [8, 0], sizes = [8, 32], strides = [1, 1]} : vector<32x32xf32> to vector<8x32xf32>
    "tpu.trace_start"() <{level = 10 : i32, message = "bqd,dh->bqh"}> : () -> ()
    %cst_113 = arith.constant dense<0.000000e+00> : vector<2x8x32xf32>
    %283 = tpu.matmul %281, %282, %cst_113 {dimension_numbers = #tpu.dot_dimension_numbers<[2], [0], [0, 1], [1], [0, 0, 0, 1, 1, 1], [], []>} : vector<2x8x8xf32>, vector<8x32xf32>, vector<2x8x32xf32> -> vector<2x8x32xf32>
    "tpu.trace_stop"() : () -> ()
    %284 = arith.addf %262, %283 : vector<2x8x32xf32>
    %285 = vector.extract_strided_slice %235 {offsets = [0, 0, 16], sizes = [2, 8, 8], strides = [1, 1, 1]} : vector<2x8x32xf32> to vector<2x8x8xf32>
    %286 = vector.extract_strided_slice %236 {offsets = [0, 0, 16], sizes = [2, 8, 8], strides = [1, 1, 1]} : vector<2x8x32xf32> to vector<2x8x8xf32>
    "tpu.trace_start"() <{level = 10 : i32, message = "bqd,bkd->bqk"}> : () -> ()
    %cst_114 = arith.constant dense<0.000000e+00> : vector<2x8x8xf32>
    %287 = tpu.matmul %285, %286, %cst_114 {dimension_numbers = #tpu.dot_dimension_numbers<[2], [2], [1], [1], [0, 0, 0, 1, 1, 1], [0], [0]>} : vector<2x8x8xf32>, vector<2x8x8xf32>, vector<2x8x8xf32> -> vector<2x8x8xf32>
    "tpu.trace_stop"() : () -> ()
    %cst_115 = arith.constant 0.353553385 : f32
    %288 = vector.broadcast %cst_115 : f32 to vector<2x8x8xf32>
    %289 = arith.mulf %287, %288 : vector<2x8x8xf32>
    %290 = vector.broadcast %32 : vector<2x1x8xf32> to vector<2x8x8xf32>
    %291 = arith.addf %289, %290 : vector<2x8x8xf32>
    %cst_116 = arith.constant dense<0xFF800000> : vector<2x8xf32>
    %292 = vector.multi_reduction <maximumf>, %291, %cst_116 [2] : vector<2x8x8xf32> to vector<2x8xf32>
    %293 = vector.shape_cast %292 : vector<2x8xf32> to vector<2x8x1xf32>
    %294 = vector.broadcast %293 : vector<2x8x1xf32> to vector<2x8x8xf32>
    %295 = arith.subf %291, %294 : vector<2x8x8xf32>
    %296 = math.exp %295 : vector<2x8x8xf32>
    %cst_117 = arith.constant dense<0.000000e+00> : vector<2x8xf32>
    %297 = vector.multi_reduction <add>, %296, %cst_117 [2] : vector<2x8x8xf32> to vector<2x8xf32>
    %298 = vector.shape_cast %297 : vector<2x8xf32> to vector<2x8x1xf32>
    %299 = tpu.reciprocal %298 {approx = true} : vector<2x8x1xf32> -> vector<2x8x1xf32>
    %300 = vector.broadcast %299 : vector<2x8x1xf32> to vector<2x8x8xf32>
    %301 = arith.mulf %296, %300 : vector<2x8x8xf32>
    %302 = vector.extract_strided_slice %237 {offsets = [0, 0, 16], sizes = [2, 8, 8], strides = [1, 1, 1]} : vector<2x8x32xf32> to vector<2x8x8xf32>
    "tpu.trace_start"() <{level = 10 : i32, message = "bqk,bkd->bqd"}> : () -> ()
    %cst_118 = arith.constant dense<0.000000e+00> : vector<2x8x8xf32>
    %303 = tpu.matmul %301, %302, %cst_118 {dimension_numbers = #tpu.dot_dimension_numbers<[2], [1], [1], [2], [0, 0, 0, 1, 1, 2], [0], [0]>} : vector<2x8x8xf32>, vector<2x8x8xf32>, vector<2x8x8xf32> -> vector<2x8x8xf32>
    "tpu.trace_stop"() : () -> ()
    %304 = vector.extract_strided_slice %239 {offsets = [16, 0], sizes = [8, 32], strides = [1, 1]} : vector<32x32xf32> to vector<8x32xf32>
    "tpu.trace_start"() <{level = 10 : i32, message = "bqd,dh->bqh"}> : () -> ()
    %cst_119 = arith.constant dense<0.000000e+00> : vector<2x8x32xf32>
    %305 = tpu.matmul %303, %304, %cst_119 {dimension_numbers = #tpu.dot_dimension_numbers<[2], [0], [0, 1], [1], [0, 0, 0, 1, 1, 1], [], []>} : vector<2x8x8xf32>, vector<8x32xf32>, vector<2x8x32xf32> -> vector<2x8x32xf32>
    "tpu.trace_stop"() : () -> ()
    %306 = arith.addf %284, %305 : vector<2x8x32xf32>
    %307 = vector.extract_strided_slice %235 {offsets = [0, 0, 24], sizes = [2, 8, 8], strides = [1, 1, 1]} : vector<2x8x32xf32> to vector<2x8x8xf32>
    %308 = vector.extract_strided_slice %236 {offsets = [0, 0, 24], sizes = [2, 8, 8], strides = [1, 1, 1]} : vector<2x8x32xf32> to vector<2x8x8xf32>
    "tpu.trace_start"() <{level = 10 : i32, message = "bqd,bkd->bqk"}> : () -> ()
    %cst_120 = arith.constant dense<0.000000e+00> : vector<2x8x8xf32>
    %309 = tpu.matmul %307, %308, %cst_120 {dimension_numbers = #tpu.dot_dimension_numbers<[2], [2], [1], [1], [0, 0, 0, 1, 1, 1], [0], [0]>} : vector<2x8x8xf32>, vector<2x8x8xf32>, vector<2x8x8xf32> -> vector<2x8x8xf32>
    "tpu.trace_stop"() : () -> ()
    %cst_121 = arith.constant 0.353553385 : f32
    %310 = vector.broadcast %cst_121 : f32 to vector<2x8x8xf32>
    %311 = arith.mulf %309, %310 : vector<2x8x8xf32>
    %312 = vector.broadcast %32 : vector<2x1x8xf32> to vector<2x8x8xf32>
    %313 = arith.addf %311, %312 : vector<2x8x8xf32>
    %cst_122 = arith.constant dense<0xFF800000> : vector<2x8xf32>
    %314 = vector.multi_reduction <maximumf>, %313, %cst_122 [2] : vector<2x8x8xf32> to vector<2x8xf32>
    %315 = vector.shape_cast %314 : vector<2x8xf32> to vector<2x8x1xf32>
    %316 = vector.broadcast %315 : vector<2x8x1xf32> to vector<2x8x8xf32>
    %317 = arith.subf %313, %316 : vector<2x8x8xf32>
    %318 = math.exp %317 : vector<2x8x8xf32>
    %cst_123 = arith.constant dense<0.000000e+00> : vector<2x8xf32>
    %319 = vector.multi_reduction <add>, %318, %cst_123 [2] : vector<2x8x8xf32> to vector<2x8xf32>
    %320 = vector.shape_cast %319 : vector<2x8xf32> to vector<2x8x1xf32>
    %321 = tpu.reciprocal %320 {approx = true} : vector<2x8x1xf32> -> vector<2x8x1xf32>
    %322 = vector.broadcast %321 : vector<2x8x1xf32> to vector<2x8x8xf32>
    %323 = arith.mulf %318, %322 : vector<2x8x8xf32>
    %324 = vector.extract_strided_slice %237 {offsets = [0, 0, 24], sizes = [2, 8, 8], strides = [1, 1, 1]} : vector<2x8x32xf32> to vector<2x8x8xf32>
    "tpu.trace_start"() <{level = 10 : i32, message = "bqk,bkd->bqd"}> : () -> ()
    %cst_124 = arith.constant dense<0.000000e+00> : vector<2x8x8xf32>
    %325 = tpu.matmul %323, %324, %cst_124 {dimension_numbers = #tpu.dot_dimension_numbers<[2], [1], [1], [2], [0, 0, 0, 1, 1, 2], [0], [0]>} : vector<2x8x8xf32>, vector<2x8x8xf32>, vector<2x8x8xf32> -> vector<2x8x8xf32>
    "tpu.trace_stop"() : () -> ()
    %326 = vector.extract_strided_slice %239 {offsets = [24, 0], sizes = [8, 32], strides = [1, 1]} : vector<32x32xf32> to vector<8x32xf32>
    "tpu.trace_start"() <{level = 10 : i32, message = "bqd,dh->bqh"}> : () -> ()
    %cst_125 = arith.constant dense<0.000000e+00> : vector<2x8x32xf32>
    %327 = tpu.matmul %325, %326, %cst_125 {dimension_numbers = #tpu.dot_dimension_numbers<[2], [0], [0, 1], [1], [0, 0, 0, 1, 1, 1], [], []>} : vector<2x8x8xf32>, vector<8x32xf32>, vector<2x8x32xf32> -> vector<2x8x32xf32>
    "tpu.trace_stop"() : () -> ()
    %328 = arith.addf %306, %327 : vector<2x8x32xf32>
    %c1_126 = arith.constant 1 : index
    %c0_127 = arith.constant 0 : index
    %c0_128 = arith.constant 0 : index
    %329 = vector.load %arg7[%c1_126, %c0_127, %c0_128] : memref<2x1x32xf32, #tpu.memory_space<vmem>>, vector<1x1x32xf32>
    %330 = vector.shape_cast %329 : vector<1x1x32xf32> to vector<1x32xf32>
    %331 = vector.shape_cast %330 : vector<1x32xf32> to vector<1x1x32xf32>
    %332 = vector.broadcast %331 : vector<1x1x32xf32> to vector<2x8x32xf32>
    %333 = arith.addf %328, %332 : vector<2x8x32xf32>
    %334 = arith.addf %226, %333 : vector<2x8x32xf32>
    %c1_129 = arith.constant 1 : index
    %c0_130 = arith.constant 0 : index
    %c0_131 = arith.constant 0 : index
    %335 = vector.load %arg8[%c1_129, %c0_130, %c0_131] : memref<2x1x32xf32, #tpu.memory_space<vmem>>, vector<1x1x32xf32>
    %336 = vector.shape_cast %335 : vector<1x1x32xf32> to vector<1x32xf32>
    %c1_132 = arith.constant 1 : index
    %c0_133 = arith.constant 0 : index
    %c0_134 = arith.constant 0 : index
    %337 = vector.load %arg9[%c1_132, %c0_133, %c0_134] : memref<2x1x32xf32, #tpu.memory_space<vmem>>, vector<1x1x32xf32>
    %338 = vector.shape_cast %337 : vector<1x1x32xf32> to vector<1x32xf32>
    %cst_135 = arith.constant dense<0.000000e+00> : vector<2x8xf32>
    %339 = vector.multi_reduction <add>, %334, %cst_135 [2] : vector<2x8x32xf32> to vector<2x8xf32>
    %340 = vector.shape_cast %339 : vector<2x8xf32> to vector<2x8x1xf32>
    %cst_136 = arith.constant 3.200000e+01 : f32
    %341 = vector.broadcast %cst_136 : f32 to vector<2x8x1xf32>
    %342 = arith.divf %340, %341 : vector<2x8x1xf32>
    %343 = vector.broadcast %342 : vector<2x8x1xf32> to vector<2x8x32xf32>
    %344 = arith.subf %334, %343 : vector<2x8x32xf32>
    %345 = arith.mulf %344, %344 : vector<2x8x32xf32>
    %cst_137 = arith.constant dense<0.000000e+00> : vector<2x8xf32>
    %346 = vector.multi_reduction <add>, %345, %cst_137 [2] : vector<2x8x32xf32> to vector<2x8xf32>
    %347 = vector.shape_cast %346 : vector<2x8xf32> to vector<2x8x1xf32>
    %cst_138 = arith.constant 3.200000e+01 : f32
    %348 = vector.broadcast %cst_138 : f32 to vector<2x8x1xf32>
    %349 = arith.divf %347, %348 : vector<2x8x1xf32>
    %350 = vector.broadcast %342 : vector<2x8x1xf32> to vector<2x8x32xf32>
    %351 = arith.subf %334, %350 : vector<2x8x32xf32>
    %cst_139 = arith.constant 9.99999996E-13 : f32
    %352 = vector.broadcast %cst_139 : f32 to vector<2x8x1xf32>
    %353 = arith.addf %349, %352 : vector<2x8x1xf32>
    %354 = math.rsqrt %353 : vector<2x8x1xf32>
    %355 = vector.broadcast %354 : vector<2x8x1xf32> to vector<2x8x32xf32>
    %356 = arith.mulf %351, %355 : vector<2x8x32xf32>
    %357 = vector.shape_cast %336 : vector<1x32xf32> to vector<1x1x32xf32>
    %358 = vector.broadcast %357 : vector<1x1x32xf32> to vector<2x8x32xf32>
    %359 = arith.mulf %356, %358 : vector<2x8x32xf32>
    %360 = vector.shape_cast %338 : vector<1x32xf32> to vector<1x1x32xf32>
    %361 = vector.broadcast %360 : vector<1x1x32xf32> to vector<2x8x32xf32>
    %362 = arith.addf %359, %361 : vector<2x8x32xf32>
    %c1_140 = arith.constant 1 : index
    %c0_141 = arith.constant 0 : index
    %c0_142 = arith.constant 0 : index
    %363 = vector.load %arg10[%c1_140, %c0_141, %c0_142] : memref<2x32x64xf32, #tpu.memory_space<vmem>>, vector<1x32x64xf32>
    %364 = vector.shape_cast %363 : vector<1x32x64xf32> to vector<32x64xf32>
    "tpu.trace_start"() <{level = 10 : i32, message = "bsh,hi->bsi"}> : () -> ()
    %cst_143 = arith.constant dense<0.000000e+00> : vector<2x8x64xf32>
    %365 = tpu.matmul %362, %364, %cst_143 {dimension_numbers = #tpu.dot_dimension_numbers<[2], [0], [0, 1], [1], [0, 0, 0, 1, 1, 1], [], []>} : vector<2x8x32xf32>, vector<32x64xf32>, vector<2x8x64xf32> -> vector<2x8x64xf32>
    "tpu.trace_stop"() : () -> ()
    %c1_144 = arith.constant 1 : index
    %c0_145 = arith.constant 0 : index
    %c0_146 = arith.constant 0 : index
    %366 = vector.load %arg11[%c1_144, %c0_145, %c0_146] : memref<2x1x64xf32, #tpu.memory_space<vmem>>, vector<1x1x64xf32>
    %367 = vector.shape_cast %366 : vector<1x1x64xf32> to vector<1x64xf32>
    %368 = vector.shape_cast %367 : vector<1x64xf32> to vector<1x1x64xf32>
    %369 = vector.broadcast %368 : vector<1x1x64xf32> to vector<2x8x64xf32>
    %370 = arith.addf %365, %369 : vector<2x8x64xf32>
    %371 = arith.mulf %370, %370 : vector<2x8x64xf32>
    %372 = arith.mulf %370, %371 : vector<2x8x64xf32>
    %cst_147 = arith.constant 4.471500e-02 : f32
    %373 = vector.broadcast %cst_147 : f32 to vector<2x8x64xf32>
    %374 = arith.mulf %373, %372 : vector<2x8x64xf32>
    %375 = arith.addf %370, %374 : vector<2x8x64xf32>
    %cst_148 = arith.constant 0.797884583 : f32
    %376 = vector.broadcast %cst_148 : f32 to vector<2x8x64xf32>
    %377 = arith.mulf %376, %375 : vector<2x8x64xf32>
    %378 = math.tanh %377 : vector<2x8x64xf32>
    %cst_149 = arith.constant 1.000000e+00 : f32
    %379 = vector.broadcast %cst_149 : f32 to vector<2x8x64xf32>
    %380 = arith.addf %379, %378 : vector<2x8x64xf32>
    %cst_150 = arith.constant 5.000000e-01 : f32
    %381 = vector.broadcast %cst_150 : f32 to vector<2x8x64xf32>
    %382 = arith.mulf %381, %380 : vector<2x8x64xf32>
    %383 = arith.mulf %370, %382 : vector<2x8x64xf32>
    %c1_151 = arith.constant 1 : index
    %c0_152 = arith.constant 0 : index
    %c0_153 = arith.constant 0 : index
    %384 = vector.load %arg12[%c1_151, %c0_152, %c0_153] : memref<2x64x32xf32, #tpu.memory_space<vmem>>, vector<1x64x32xf32>
    %385 = vector.shape_cast %384 : vector<1x64x32xf32> to vector<64x32xf32>
    "tpu.trace_start"() <{level = 10 : i32, message = "bsi,ih->bsh"}> : () -> ()
    %cst_154 = arith.constant dense<0.000000e+00> : vector<2x8x32xf32>
    %386 = tpu.matmul %383, %385, %cst_154 {dimension_numbers = #tpu.dot_dimension_numbers<[2], [0], [0, 1], [1], [0, 0, 0, 1, 1, 1], [], []>} : vector<2x8x64xf32>, vector<64x32xf32>, vector<2x8x32xf32> -> vector<2x8x32xf32>
    "tpu.trace_stop"() : () -> ()
    %c1_155 = arith.constant 1 : index
    %c0_156 = arith.constant 0 : index
    %c0_157 = arith.constant 0 : index
    %387 = vector.load %arg13[%c1_155, %c0_156, %c0_157] : memref<2x1x32xf32, #tpu.memory_space<vmem>>, vector<1x1x32xf32>
    %388 = vector.shape_cast %387 : vector<1x1x32xf32> to vector<1x32xf32>
    %389 = vector.shape_cast %388 : vector<1x32xf32> to vector<1x1x32xf32>
    %390 = vector.broadcast %389 : vector<1x1x32xf32> to vector<2x8x32xf32>
    %391 = arith.addf %386, %390 : vector<2x8x32xf32>
    %392 = arith.addf %362, %391 : vector<2x8x32xf32>
    %c1_158 = arith.constant 1 : index
    %c0_159 = arith.constant 0 : index
    %c0_160 = arith.constant 0 : index
    %393 = vector.load %arg14[%c1_158, %c0_159, %c0_160] : memref<2x1x32xf32, #tpu.memory_space<vmem>>, vector<1x1x32xf32>
    %394 = vector.shape_cast %393 : vector<1x1x32xf32> to vector<1x32xf32>
    %c1_161 = arith.constant 1 : index
    %c0_162 = arith.constant 0 : index
    %c0_163 = arith.constant 0 : index
    %395 = vector.load %arg15[%c1_161, %c0_162, %c0_163] : memref<2x1x32xf32, #tpu.memory_space<vmem>>, vector<1x1x32xf32>
    %396 = vector.shape_cast %395 : vector<1x1x32xf32> to vector<1x32xf32>
    %cst_164 = arith.constant dense<0.000000e+00> : vector<2x8xf32>
    %397 = vector.multi_reduction <add>, %392, %cst_164 [2] : vector<2x8x32xf32> to vector<2x8xf32>
    %398 = vector.shape_cast %397 : vector<2x8xf32> to vector<2x8x1xf32>
    %cst_165 = arith.constant 3.200000e+01 : f32
    %399 = vector.broadcast %cst_165 : f32 to vector<2x8x1xf32>
    %400 = arith.divf %398, %399 : vector<2x8x1xf32>
    %401 = vector.broadcast %400 : vector<2x8x1xf32> to vector<2x8x32xf32>
    %402 = arith.subf %392, %401 : vector<2x8x32xf32>
    %403 = arith.mulf %402, %402 : vector<2x8x32xf32>
    %cst_166 = arith.constant dense<0.000000e+00> : vector<2x8xf32>
    %404 = vector.multi_reduction <add>, %403, %cst_166 [2] : vector<2x8x32xf32> to vector<2x8xf32>
    %405 = vector.shape_cast %404 : vector<2x8xf32> to vector<2x8x1xf32>
    %cst_167 = arith.constant 3.200000e+01 : f32
    %406 = vector.broadcast %cst_167 : f32 to vector<2x8x1xf32>
    %407 = arith.divf %405, %406 : vector<2x8x1xf32>
    %408 = vector.broadcast %400 : vector<2x8x1xf32> to vector<2x8x32xf32>
    %409 = arith.subf %392, %408 : vector<2x8x32xf32>
    %cst_168 = arith.constant 9.99999996E-13 : f32
    %410 = vector.broadcast %cst_168 : f32 to vector<2x8x1xf32>
    %411 = arith.addf %407, %410 : vector<2x8x1xf32>
    %412 = math.rsqrt %411 : vector<2x8x1xf32>
    %413 = vector.broadcast %412 : vector<2x8x1xf32> to vector<2x8x32xf32>
    %414 = arith.mulf %409, %413 : vector<2x8x32xf32>
    %415 = vector.shape_cast %394 : vector<1x32xf32> to vector<1x1x32xf32>
    %416 = vector.broadcast %415 : vector<1x1x32xf32> to vector<2x8x32xf32>
    %417 = arith.mulf %414, %416 : vector<2x8x32xf32>
    %418 = vector.shape_cast %396 : vector<1x32xf32> to vector<1x1x32xf32>
    %419 = vector.broadcast %418 : vector<1x1x32xf32> to vector<2x8x32xf32>
    %420 = arith.addf %417, %419 : vector<2x8x32xf32>
    %421 = vector.extract_strided_slice %420 {offsets = [0, 0, 0], sizes = [2, 1, 32], strides = [1, 1, 1]} : vector<2x8x32xf32> to vector<2x1x32xf32>
    %c0_169 = arith.constant 0 : index
    %c0_170 = arith.constant 0 : index
    %422 = vector.load %arg16[%c0_169, %c0_170] : memref<32x32xf32, #tpu.memory_space<vmem>>, vector<32x32xf32>
    "tpu.trace_start"() <{level = 10 : i32, message = "bsh,hd->bsd"}> : () -> ()
    %cst_171 = arith.constant dense<0.000000e+00> : vector<2x1x32xf32>
    %423 = tpu.matmul %421, %422, %cst_171 {dimension_numbers = #tpu.dot_dimension_numbers<[2], [0], [0, 1], [1], [0, 0, 0, 1, 1, 1], [], []>} : vector<2x1x32xf32>, vector<32x32xf32>, vector<2x1x32xf32> -> vector<2x1x32xf32>
    "tpu.trace_stop"() : () -> ()
    %c0_172 = arith.constant 0 : index
    %c0_173 = arith.constant 0 : index
    %424 = vector.load %arg17[%c0_172, %c0_173] : memref<1x32xf32, #tpu.memory_space<vmem>>, vector<1x32xf32>
    %425 = vector.shape_cast %424 : vector<1x32xf32> to vector<1x1x32xf32>
    %426 = vector.broadcast %425 : vector<1x1x32xf32> to vector<2x1x32xf32>
    %427 = arith.addf %423, %426 : vector<2x1x32xf32>
    %428 = math.tanh %427 : vector<2x1x32xf32>
    %c0_174 = arith.constant 0 : index
    %c0_175 = arith.constant 0 : index
    %429 = vector.load %arg18[%c0_174, %c0_175] : memref<32x3xf32, #tpu.memory_space<vmem>>, vector<32x3xf32>
    "tpu.trace_start"() <{level = 10 : i32, message = "bsh,hc->bsc"}> : () -> ()
    %cst_176 = arith.constant dense<0.000000e+00> : vector<2x1x3xf32>
    %430 = tpu.matmul %428, %429, %cst_176 {dimension_numbers = #tpu.dot_dimension_numbers<[2], [0], [0, 1], [1], [0, 0, 0, 1, 1, 1], [], []>} : vector<2x1x32xf32>, vector<32x3xf32>, vector<2x1x3xf32> -> vector<2x1x3xf32>
    "tpu.trace_stop"() : () -> ()
    %c0_177 = arith.constant 0 : index
    %c0_178 = arith.constant 0 : index
    %431 = vector.load %arg19[%c0_177, %c0_178] : memref<1x3xf32, #tpu.memory_space<vmem>>, vector<1x3xf32>
    %432 = vector.shape_cast %431 : vector<1x3xf32> to vector<1x1x3xf32>
    %433 = vector.broadcast %432 : vector<1x1x3xf32> to vector<2x1x3xf32>
    %434 = arith.addf %430, %433 : vector<2x1x3xf32>
    %cst_179 = arith.constant dense<0xFF800000> : vector<2x1xf32>
    %435 = vector.multi_reduction <maximumf>, %434, %cst_179 [2] : vector<2x1x3xf32> to vector<2x1xf32>
    %436 = vector.shape_cast %435 : vector<2x1xf32> to vector<2x1x1xf32>
    %437 = vector.broadcast %436 : vector<2x1x1xf32> to vector<2x1x3xf32>
    %438 = arith.subf %434, %437 : vector<2x1x3xf32>
    %439 = math.exp %438 : vector<2x1x3xf32>
    %cst_180 = arith.constant dense<0.000000e+00> : vector<2x1xf32>
    %440 = vector.multi_reduction <add>, %439, %cst_180 [2] : vector<2x1x3xf32> to vector<2x1xf32>
    %441 = vector.shape_cast %440 : vector<2x1xf32> to vector<2x1x1xf32>
    %442 = vector.broadcast %441 : vector<2x1x1xf32> to vector<2x1x3xf32>
    %443 = arith.divf %439, %442 : vector<2x1x3xf32>
    %c0_181 = arith.constant 0 : index
    %c0_182 = arith.constant 0 : index
    %c0_183 = arith.constant 0 : index
    %444 = vector.load %arg20[%c0_181, %c0_182, %c0_183] : memref<2x1x3xf32, #tpu.memory_space<vmem>>, vector<2x1x3xf32>
    tpu.vector_store %arg20[%c0_181, %c0_182, %c0_183], %443 {strides = array<i32>} : memref<2x1x3xf32, #tpu.memory_space<vmem>>, vector<2x1x3xf32>,
    return
  }
}

</mosaic_0001>

<llo_original>
// kernel: sentiment_classifier_forward.1
$region0: #{sentiment_classifier_forward.1}
  #allocation0 [shape = 'u32[]', space=smem, size = 0x4, offset = 0x4, fixed_abs, tag = 'smem constant byte address 0x4 - core index']
  #allocation1 [shape = 'u32[144,128]{1,0:T(1,128)}', space=vmem, size = 0x12000, scoped, tag = 'internal scratch']
  %s0 = inlined_call_operand.vmem [shape: f32[2,8,32], index: 0, kind: input, shape index: {}]
  %s1 = inlined_call_operand.vmem [shape: f32[2,8], index: 1, kind: input, shape index: {}]
  %s2 = inlined_call_operand.vmem [shape: f32[1,32], index: 2, kind: input, shape index: {}]
  %s3 = inlined_call_operand.vmem [shape: f32[1,32], index: 3, kind: input, shape index: {}]
  %s4 = inlined_call_operand.vmem [shape: f32[2,32,96], index: 4, kind: input, shape index: {}]
  %s5 = inlined_call_operand.vmem [shape: f32[2,1,96], index: 5, kind: input, shape index: {}]
  %s6 = inlined_call_operand.vmem [shape: f32[2,32,32], index: 6, kind: input, shape index: {}]
  %s7 = inlined_call_operand.vmem [shape: f32[2,1,32], index: 7, kind: input, shape index: {}]
  %s8 = inlined_call_operand.vmem [shape: f32[2,1,32], index: 8, kind: input, shape index: {}]
  %s9 = inlined_call_operand.vmem [shape: f32[2,1,32], index: 9, kind: input, shape index: {}]
  %s10 = inlined_call_operand.vmem [shape: f32[2,32,64], index: 10, kind: input, shape index: {}]
  %s11 = inlined_call_operand.vmem [shape: f32[2,1,64], index: 11, kind: input, shape index: {}]
  %s12 = inlined_call_operand.vmem [shape: f32[2,64,32], index: 12, kind: input, shape index: {}]
  %s13 = inlined_call_operand.vmem [shape: f32[2,1,32], index: 13, kind: input, shape index: {}]
  %s14 = inlined_call_operand.vmem [shape: f32[2,1,32], index: 14, kind: input, shape index: {}]
  %s15 = inlined_call_operand.vmem [shape: f32[2,1,32], index: 15, kind: input, shape index: {}]
  %s16 = inlined_call_operand.vmem [shape: f32[32,32], index: 16, kind: input, shape index: {}]
  %s17 = inlined_call_operand.vmem [shape: f32[1,32], index: 17, kind: input, shape index: {}]
  %s18 = inlined_call_operand.vmem [shape: f32[32,3], index: 18, kind: input, shape index: {}]
  %s19 = inlined_call_operand.vmem [shape: f32[1,3], index: 19, kind: input, shape index: {}]
  %s20 = inlined_call_operand.hbm [shape: f32[2,1,3], index: 20, kind: output, shape index: {}]
  %s21 = sld [smem:[#allocation0]]
  $region90: #{sentiment_classifier_forward.1} parent=0
    _
  %s23 = ssub.s32 1, %s21
  %s24 = scalar_select 0, %s23, %s21
  $region1: #{sentiment_classifier_forward.1} parent=0
    #allocation2 [shape = 'u8[1024]{0}', space=vmem, size = 0x400, scoped, tag = 'output window, operand 0, single buffered']
    #allocation3 [shape = 's32[1]{0}', space=sflag, size = 0x4, scoped, tag = 'scoped memory for sentiment_classifier_forward.1']
    %25 = vsyncpa [#allocation3], 0
    // Predicated region
    $region2: #{sentiment_classifier_forward.1} parent=1 // pred_check
      _
    $region3: #{sentiment_classifier_forward.1} parent=1 // pred_check_branch
      %27 = sbr.rel (0) target = $region5
    $region4: #{sentiment_classifier_forward.1} parent=1 // pred_region
      _
    $region5: #{sentiment_classifier_forward.1} parent=1 // pred_fallthru
      _
    // Predicated region
    $region6: #{sentiment_classifier_forward.1} parent=1 // pred_check
      _
    $region7: #{sentiment_classifier_forward.1} parent=1 // pred_check_branch
      %29 = sbr.rel (0) target = $region9
    $region8: #{sentiment_classifier_forward.1} parent=1 // pred_region
      _
    $region9: #{sentiment_classifier_forward.1} parent=1 // pred_fallthru
      _
    // Predicated region
    $region10: #{sentiment_classifier_forward.1} parent=1 // pred_check
      _
    $region11: #{sentiment_classifier_forward.1} parent=1 // pred_check_branch
      %31 = sbr.rel (0) target = $region13
    $region12: #{sentiment_classifier_forward.1} parent=1 // pred_region
      _
    $region13: #{sentiment_classifier_forward.1} parent=1 // pred_fallthru
      _
    // Predicated region
    $region14: #{sentiment_classifier_forward.1} parent=1 // pred_check
      _
    $region15: #{sentiment_classifier_forward.1} parent=1 // pred_check_branch
      %33 = sbr.rel (0) target = $region17
    $region16: #{sentiment_classifier_forward.1} parent=1 // pred_region
      _
    $region17: #{sentiment_classifier_forward.1} parent=1 // pred_fallthru
      _
    // Predicated region
    $region18: #{sentiment_classifier_forward.1} parent=1 // pred_check
      _
    $region19: #{sentiment_classifier_forward.1} parent=1 // pred_check_branch
      %35 = sbr.rel (0) target = $region21
    $region20: #{sentiment_classifier_forward.1} parent=1 // pred_region
      _
    $region21: #{sentiment_classifier_forward.1} parent=1 // pred_fallthru
      _
    // Predicated region
    $region22: #{sentiment_classifier_forward.1} parent=1 // pred_check
      _
    $region23: #{sentiment_classifier_forward.1} parent=1 // pred_check_branch
      %37 = sbr.rel (0) target = $region25
    $region24: #{sentiment_classifier_forward.1} parent=1 // pred_region
      _
    $region25: #{sentiment_classifier_forward.1} parent=1 // pred_fallthru
      _
    // Predicated region
    $region26: #{sentiment_classifier_forward.1} parent=1 // pred_check
      _
    $region27: #{sentiment_classifier_forward.1} parent=1 // pred_check_branch
      %39 = sbr.rel (0) target = $region29
    $region28: #{sentiment_classifier_forward.1} parent=1 // pred_region
      _
    $region29: #{sentiment_classifier_forward.1} parent=1 // pred_fallthru
      _
    // Predicated region
    $region30: #{sentiment_classifier_forward.1} parent=1 // pred_check
      _
    $region31: #{sentiment_classifier_forward.1} parent=1 // pred_check_branch
      %41 = sbr.rel (0) target = $region33
    $region32: #{sentiment_classifier_forward.1} parent=1 // pred_region
      _
    $region33: #{sentiment_classifier_forward.1} parent=1 // pred_fallthru
      _
    // Predicated region
    $region34: #{sentiment_classifier_forward.1} parent=1 // pred_check
      _
    $region35: #{sentiment_classifier_forward.1} parent=1 // pred_check_branch
      %43 = sbr.rel (0) target = $region37
    $region36: #{sentiment_classifier_forward.1} parent=1 // pred_region
      _
    $region37: #{sentiment_classifier_forward.1} parent=1 // pred_fallthru
      _
    // Predicated region
    $region38: #{sentiment_classifier_forward.1} parent=1 // pred_check
      _
    $region39: #{sentiment_classifier_forward.1} parent=1 // pred_check_branch
      %45 = sbr.rel (0) target = $region41
    $region40: #{sentiment_classifier_forward.1} parent=1 // pred_region
      _
    $region41: #{sentiment_classifier_forward.1} parent=1 // pred_fallthru
      _
    // Predicated region
    $region42: #{sentiment_classifier_forward.1} parent=1 // pred_check
      _
    $region43: #{sentiment_classifier_forward.1} parent=1 // pred_check_branch
      %47 = sbr.rel (0) target = $region45
    $region44: #{sentiment_classifier_forward.1} parent=1 // pred_region
      _
    $region45: #{sentiment_classifier_forward.1} parent=1 // pred_fallthru
      _
    // Predicated region
    $region46: #{sentiment_classifier_forward.1} parent=1 // pred_check
      _
    $region47: #{sentiment_classifier_forward.1} parent=1 // pred_check_branch
      %49 = sbr.rel (0) target = $region49
    $region48: #{sentiment_classifier_forward.1} parent=1 // pred_region
      _
    $region49: #{sentiment_classifier_forward.1} parent=1 // pred_fallthru
      _
    // Predicated region
    $region50: #{sentiment_classifier_forward.1} parent=1 // pred_check
      _
    $region51: #{sentiment_classifier_forward.1} parent=1 // pred_check_branch
      %51 = sbr.rel (0) target = $region53
    $region52: #{sentiment_classifier_forward.1} parent=1 // pred_region
      _
    $region53: #{sentiment_classifier_forward.1} parent=1 // pred_fallthru
      _
    // Predicated region
    $region54: #{sentiment_classifier_forward.1} parent=1 // pred_check
      _
    $region55: #{sentiment_classifier_forward.1} parent=1 // pred_check_branch
      %53 = sbr.rel (0) target = $region57
    $region56: #{sentiment_classifier_forward.1} parent=1 // pred_region
      _
    $region57: #{sentiment_classifier_forward.1} parent=1 // pred_fallthru
      _
    // Predicated region
    $region58: #{sentiment_classifier_forward.1} parent=1 // pred_check
      _
    $region59: #{sentiment_classifier_forward.1} parent=1 // pred_check_branch
      %55 = sbr.rel (0) target = $region61
    $region60: #{sentiment_classifier_forward.1} parent=1 // pred_region
      _
    $region61: #{sentiment_classifier_forward.1} parent=1 // pred_fallthru
      _
    // Predicated region
    $region62: #{sentiment_classifier_forward.1} parent=1 // pred_check
      _
    $region63: #{sentiment_classifier_forward.1} parent=1 // pred_check_branch
      %57 = sbr.rel (0) target = $region65
    $region64: #{sentiment_classifier_forward.1} parent=1 // pred_region
      _
    $region65: #{sentiment_classifier_forward.1} parent=1 // pred_fallthru
      _
    // Predicated region
    $region66: #{sentiment_classifier_forward.1} parent=1 // pred_check
      _
    $region67: #{sentiment_classifier_forward.1} parent=1 // pred_check_branch
      %59 = sbr.rel (0) target = $region69
    $region68: #{sentiment_classifier_forward.1} parent=1 // pred_region
      _
    $region69: #{sentiment_classifier_forward.1} parent=1 // pred_fallthru
      _
    // Predicated region
    $region70: #{sentiment_classifier_forward.1} parent=1 // pred_check
      _
    $region71: #{sentiment_classifier_forward.1} parent=1 // pred_check_branch
      %61 = sbr.rel (0) target = $region73
    $region72: #{sentiment_classifier_forward.1} parent=1 // pred_region
      _
    $region73: #{sentiment_classifier_forward.1} parent=1 // pred_fallthru
      _
    // Predicated region
    $region74: #{sentiment_classifier_forward.1} parent=1 // pred_check
      _
    $region75: #{sentiment_classifier_forward.1} parent=1 // pred_check_branch
      %63 = sbr.rel (0) target = $region77
    $region76: #{sentiment_classifier_forward.1} parent=1 // pred_region
      _
    $region77: #{sentiment_classifier_forward.1} parent=1 // pred_fallthru
      _
    // Predicated region
    $region78: #{sentiment_classifier_forward.1} parent=1 // pred_check
      _
    $region79: #{sentiment_classifier_forward.1} parent=1 // pred_check_branch
      %65 = sbr.rel (0) target = $region81
    $region80: #{sentiment_classifier_forward.1} parent=1 // pred_region
      _
    $region81: #{sentiment_classifier_forward.1} parent=1 // pred_fallthru
      _
    %v66 = vld [vmem:[%s0] sm:$0xff]
    %v67 = vld [vmem:[%s0 + $0x8] sm:$0xff]
    %v68 = vld [vmem:[%s2] sm:$0x1]
    %v69 = vld [vmem:[%s3] sm:$0x1]
    %vm70 = vcmask 261120
    %v71 = vsel %vm70, %v66, 0.0
    %72 = vadd.xlane.f32.xlu0 %v71
    %v73 = vpop.xlane.xlu0 %72
    %v74 = vsel %vm70, %v67, 0.0
    %75 = vadd.xlane.f32.xlu0 %v74
    %v76 = vpop.xlane.xlu0 %75
    %v77 = vrcp.pop 32.0
    %v78 = vmul.f32 %v73, %v77
    %v79 = vmul.f32 %v76, %v77
    %v80 = vsub.f32 %v66, %v78
    %v81 = vsub.f32 %v67, %v79
    %v82 = vmul.f32 %v80, %v80
    %v83 = vmul.f32 %v81, %v81
    %v84 = vsel %vm70, %v82, 0.0
    %85 = vadd.xlane.f32.xlu0 %v84
    %v86 = vpop.xlane.xlu0 %85
    %v87 = vsel %vm70, %v83, 0.0
    %88 = vadd.xlane.f32.xlu0 %v87
    %v89 = vpop.xlane.xlu0 %88
    %v90 = vmul.f32 %v86, %v77
    %v91 = vmul.f32 %v89, %v77
    %v92 = vadd.f32 %v90, 1e-12
    %v93 = vadd.f32 %v91, 1e-12
    %v94 = vrsqrt.pop %v92
    %v95 = vrsqrt.pop %v93
    %v96 = vmul.f32 %v80, %v94
    %v97 = vmul.f32 %v81, %v95
    %v99 = vlaneseq
    %v100 = vshrl.u32 %v99, 7
    %v101 = vsub.s32 0, %v100
    %v102 = vrot.slane %v68, %v101
    %v104 = vmul.f32 %v96, %v102
    %v105 = vmul.f32 %v97, %v102
    %v107 = vlaneseq
    %v108 = vshrl.u32 %v107, 7
    %v109 = vsub.s32 0, %v108
    %v110 = vrot.slane %v69, %v109
    %v112 = vadd.f32 %v104, %v110
    %v113 = vadd.f32 %v105, %v110
    %v114 = vld [vmem:[%s1] sm:$0x3]
    %v115 = vsub.f32 1.0, %v114
    %v118 = vunpack.c.l.s4 1966171168
    %v119 = vunpack.c.0.s8 %v118
    %v120 = vlaneseq
    %v121 = vshrl.u32 %v120, 7
    %v122 = vsub.s32 %v119, %v121
    %v123 = vrot.slane %v115, %v122
    %v124 = vcombine.high %v123, %v123
    %v126 = vunpack.c.l.s4 1966171168
    %v127 = vunpack.c.0.s8 %v126
    %v128 = vlaneseq
    %v129 = vshrl.u32 %v128, 7
    %v130 = vsub.s32 %v127, %v129
    %v131 = vrot.slane %v123, %v130
    %v133 = vunpack.c.l.s4 1966171168
    %v134 = vunpack.c.0.s8 %v133
    %v135 = vlaneseq
    %v136 = vshrl.u32 %v135, 7
    %v137 = vsub.s32 %v134, %v136
    %v138 = vrot.slane %v124, %v137
    %v141 = vmul.f32 %v131, -10000.0
    %v142 = vmul.f32 %v138, -10000.0
    %v143 = vld [vmem:[%s4] sm:$0xff]
    %v144 = vld [vmem:[%s4 + $0x8] sm:$0xff]
    %v145 = vld [vmem:[%s4 + $0x10] sm:$0xff]
    %v146 = vld [vmem:[%s4 + $0x18] sm:$0xff]
    %v147 = vld [vmem:[%s5] sm:$0x1]
    %v149 = vlaneseq
    %v150 = vshrl.u32 %v149, 7
    %v151 = vsub.s32 0, %v150
    %v152 = vrot.slane %v147, %v151
    %v155 = vsel %vm70, %v112, 0
    %v158 = vsel %vm70, %v113, 0
    %160 = vmatprep.subr.mxu0 0.0
    %161 = vmatpush1.msra.mxu0 0.0
    %162 = vmatprep.subr.mxu0 0.0
    %163 = vmatpush1.msra.mxu0 0.0
    %164 = vmatprep.subr.mxu0 0.0
    %165 = vmatpush1.msra.mxu0 0.0
    %166 = vmatprep.subr.mxu0 0.0
    %167 = vmatpush1.msra.mxu0 0.0
    %168 = vmatprep.subr.mxu0 0.0
    %169 = vmatpush1.msra.mxu0 0.0
    %170 = vmatprep.subr.mxu0 0.0
    %171 = vmatpush1.msra.mxu0 0.0
    %172 = vmatprep.subr.mxu0 0.0
    %173 = vmatpush1.msra.mxu0 0.0
    %174 = vmatprep.subr.mxu0 0.0
    %175 = vmatpush1.msra.mxu0 0.0
    %176 = vmatprep.subr.mxu0 0.0
    %177 = vmatpush1.msra.mxu0 0.0
    %178 = vmatprep.subr.mxu0 0.0
    %179 = vmatpush1.msra.mxu0 0.0
    %180 = vmatprep.subr.mxu0 0.0
    %181 = vmatpush1.msra.mxu0 0.0
    %182 = vmatprep.subr.mxu0 0.0
    %183 = vmatpush1.msra.mxu0 0.0
    %184 = vmatprep.subr.mxu0 0.0
    %185 = vmatpush1.msra.mxu0 %v146
    %186 = vmatprep.subr.mxu0 0.0
    %187 = vmatpush1.msra.mxu0 %v145
    %188 = vmatprep.subr.mxu0 0.0
    %189 = vmatpush1.msra.mxu0 %v144
    %190 = vmatprep.subr.mxu0 0.0
    %191 = vmatpush1.msra.mxu0 %v143
    %192 = vmatprep.subr.mxu0 0.0
    %193 = vmatpush2.msra.mxu0 0.0
    %194 = vmatprep.subr.mxu0 0.0
    %195 = vmatpush2.msra.mxu0 0.0
    %196 = vmatprep.subr.mxu0 0.0
    %197 = vmatpush2.msra.mxu0 0.0
    %198 = vmatprep.subr.mxu0 0.0
    %199 = vmatpush2.msra.mxu0 0.0
    %200 = vmatprep.subr.mxu0 0.0
    %201 = vmatpush2.msra.mxu0 0.0
    %202 = vmatprep.subr.mxu0 0.0
    %203 = vmatpush2.msra.mxu0 0.0
    %204 = vmatprep.subr.mxu0 0.0
    %205 = vmatpush2.msra.mxu0 0.0
    %206 = vmatprep.subr.mxu0 0.0
    %207 = vmatpush2.msra.mxu0 0.0
    %208 = vmatprep.subr.mxu0 0.0
    %209 = vmatpush2.msra.mxu0 0.0
    %210 = vmatprep.subr.mxu0 0.0
    %211 = vmatpush2.msra.mxu0 0.0
    %212 = vmatprep.subr.mxu0 0.0
    %213 = vmatpush2.msra.mxu0 0.0
    %214 = vmatprep.subr.mxu0 0.0
    %215 = vmatpush2.msra.mxu0 0.0
    %216 = vmatprep.subr.mxu0 0.0
    %217 = vmatpush2.msra.mxu0 0.0
    %218 = vmatprep.subr.mxu0 0.0
    %219 = vmatpush2.msra.mxu0 0.0
    %220 = vmatprep.subr.mxu0 0.0
    %221 = vmatpush2.msra.mxu0 0.0
    %222 = vmatprep.subr.mxu0 0.0
    %223 = vmatpush2.msra.mxu0 0.0
    %224 = vmatprep.mubr.f32.mxu0 0.0
    %225 = vmatmul.mubr.f32.gmra.mxu0 %v155
    %v226 = vpop.f32.mrf.mxu0
    %v227 = vadd.f32 %v152, %v226
    %v228 = vpop.f32.mrf.mxu0
    %229 = vmatprep.mubr.f32.mxu0 0.0
    %230 = vmatmul.mubr.f32.gmra.mxu0 %v158
    %v231 = vpop.f32.mrf.mxu0
    %v232 = vadd.f32 %v152, %v231
    %v233 = vpop.f32.mrf.mxu0
    %234 = vdwg.mxu0
    %v235 = vld [vmem:[%s6] sm:$0xff]
    %v236 = vld [vmem:[%s6 + $0x8] sm:$0xff]
    %v237 = vld [vmem:[%s6 + $0x10] sm:$0xff]
    %v238 = vld [vmem:[%s6 + $0x18] sm:$0xff]
    %240 = vrot.lane.b32.xlu0 %v227, 96
    %v241 = vpop.permute.xlu0 %240
    %vm242 = vcmask 64512
    %v243 = vsel %vm242, %v227, 0
    %v245 = vsel %vm242, %v241, 0
    %247 = vmatprep.subr.mxu0 0.0
    %248 = vmatpush1.xpose.msra.mxu0 0.0
    %249 = vmatprep.subr.mxu0 0.0
    %250 = vmatpush1.xpose.msra.mxu0 0.0
    %251 = vmatprep.subr.mxu0 0.0
    %252 = vmatpush1.xpose.msra.mxu0 0.0
    %253 = vmatprep.subr.mxu0 0.0
    %254 = vmatpush1.xpose.msra.mxu0 0.0
    %255 = vmatprep.subr.mxu0 0.0
    %256 = vmatpush1.xpose.msra.mxu0 0.0
    %257 = vmatprep.subr.mxu0 0.0
    %258 = vmatpush1.xpose.msra.mxu0 0.0
    %259 = vmatprep.subr.mxu0 0.0
    %260 = vmatpush1.xpose.msra.mxu0 0.0
    %261 = vmatprep.subr.mxu0 0.0
    %262 = vmatpush1.xpose.msra.mxu0 0.0
    %263 = vmatprep.subr.mxu0 0.0
    %264 = vmatpush1.xpose.msra.mxu0 0.0
    %265 = vmatprep.subr.mxu0 0.0
    %266 = vmatpush1.xpose.msra.mxu0 0.0
    %267 = vmatprep.subr.mxu0 0.0
    %268 = vmatpush1.xpose.msra.mxu0 0.0
    %269 = vmatprep.subr.mxu0 0.0
    %270 = vmatpush1.xpose.msra.mxu0 0.0
    %271 = vmatprep.subr.mxu0 0.0
    %272 = vmatpush1.xpose.msra.mxu0 0.0
    %273 = vmatprep.subr.mxu0 0.0
    %274 = vmatpush1.xpose.msra.mxu0 0.0
    %275 = vmatprep.subr.mxu0 0.0
    %276 = vmatpush1.xpose.msra.mxu0 0.0
    %277 = vmatprep.subr.mxu0 0.0
    %278 = vmatpush1.xpose.msra.mxu0 %v245
    %279 = vmatprep.subr.mxu0 0.0
    %280 = vmatpush2.xpose.msra.mxu0 0.0
    %281 = vmatprep.subr.mxu0 0.0
    %282 = vmatpush2.xpose.msra.mxu0 0.0
    %283 = vmatprep.subr.mxu0 0.0
    %284 = vmatpush2.xpose.msra.mxu0 0.0
    %285 = vmatprep.subr.mxu0 0.0
    %286 = vmatpush2.xpose.msra.mxu0 0.0
    %287 = vmatprep.subr.mxu0 0.0
    %288 = vmatpush2.xpose.msra.mxu0 0.0
    %289 = vmatprep.subr.mxu0 0.0
    %290 = vmatpush2.xpose.msra.mxu0 0.0
    %291 = vmatprep.subr.mxu0 0.0
    %292 = vmatpush2.xpose.msra.mxu0 0.0
    %293 = vmatprep.subr.mxu0 0.0
    %294 = vmatpush2.xpose.msra.mxu0 0.0
    %295 = vmatprep.subr.mxu0 0.0
    %296 = vmatpush2.xpose.msra.mxu0 0.0
    %297 = vmatprep.subr.mxu0 0.0
    %298 = vmatpush2.xpose.msra.mxu0 0.0
    %299 = vmatprep.subr.mxu0 0.0
    %300 = vmatpush2.xpose.msra.mxu0 0.0
    %301 = vmatprep.subr.mxu0 0.0
    %302 = vmatpush2.xpose.msra.mxu0 0.0
    %303 = vmatprep.subr.mxu0 0.0
    %304 = vmatpush2.xpose.msra.mxu0 0.0
    %305 = vmatprep.subr.mxu0 0.0
    %306 = vmatpush2.xpose.msra.mxu0 0.0
    %307 = vmatprep.subr.mxu0 0.0
    %308 = vmatpush2.xpose.msra.mxu0 0.0
    %309 = vmatprep.subr.mxu0 0.0
    %310 = vmatpush2.xpose.msra.mxu0 0.0
    %311 = vmatprep.mubr.f32.mxu0 0.0
    %312 = vmatmul.mubr.f32.gmra.mxu0 %v243
    %v313 = vpop.f32.mrf.mxu0
    %v314 = vadd.f32 0.0, %v313
    %v315 = vpop.f32.mrf.mxu0
    %316 = vdwg.mxu0
    %318 = vrot.lane.b32.xlu0 %v232, 96
    %v319 = vpop.permute.xlu0 %318
    %v320 = vsel %vm242, %v232, 0
    %v322 = vsel %vm242, %v319, 0
    %324 = vmatprep.subr.mxu0 0.0
    %325 = vmatpush1.xpose.msra.mxu0 0.0
    %326 = vmatprep.subr.mxu0 0.0
    %327 = vmatpush1.xpose.msra.mxu0 0.0
    %328 = vmatprep.subr.mxu0 0.0
    %329 = vmatpush1.xpose.msra.mxu0 0.0
    %330 = vmatprep.subr.mxu0 0.0
    %331 = vmatpush1.xpose.msra.mxu0 0.0
    %332 = vmatprep.subr.mxu0 0.0
    %333 = vmatpush1.xpose.msra.mxu0 0.0
    %334 = vmatprep.subr.mxu0 0.0
    %335 = vmatpush1.xpose.msra.mxu0 0.0
    %336 = vmatprep.subr.mxu0 0.0
    %337 = vmatpush1.xpose.msra.mxu0 0.0
    %338 = vmatprep.subr.mxu0 0.0
    %339 = vmatpush1.xpose.msra.mxu0 0.0
    %340 = vmatprep.subr.mxu0 0.0
    %341 = vmatpush1.xpose.msra.mxu0 0.0
    %342 = vmatprep.subr.mxu0 0.0
    %343 = vmatpush1.xpose.msra.mxu0 0.0
    %344 = vmatprep.subr.mxu0 0.0
    %345 = vmatpush1.xpose.msra.mxu0 0.0
    %346 = vmatprep.subr.mxu0 0.0
    %347 = vmatpush1.xpose.msra.mxu0 0.0
    %348 = vmatprep.subr.mxu0 0.0
    %349 = vmatpush1.xpose.msra.mxu0 0.0
    %350 = vmatprep.subr.mxu0 0.0
    %351 = vmatpush1.xpose.msra.mxu0 0.0
    %352 = vmatprep.subr.mxu0 0.0
    %353 = vmatpush1.xpose.msra.mxu0 0.0
    %354 = vmatprep.subr.mxu0 0.0
    %355 = vmatpush1.xpose.msra.mxu0 %v322
    %356 = vmatprep.subr.mxu0 0.0
    %357 = vmatpush2.xpose.msra.mxu0 0.0
    %358 = vmatprep.subr.mxu0 0.0
    %359 = vmatpush2.xpose.msra.mxu0 0.0
    %360 = vmatprep.subr.mxu0 0.0
    %361 = vmatpush2.xpose.msra.mxu0 0.0
    %362 = vmatprep.subr.mxu0 0.0
    %363 = vmatpush2.xpose.msra.mxu0 0.0
    %364 = vmatprep.subr.mxu0 0.0
    %365 = vmatpush2.xpose.msra.mxu0 0.0
    %366 = vmatprep.subr.mxu0 0.0
    %367 = vmatpush2.xpose.msra.mxu0 0.0
    %368 = vmatprep.subr.mxu0 0.0
    %369 = vmatpush2.xpose.msra.mxu0 0.0
    %370 = vmatprep.subr.mxu0 0.0
    %371 = vmatpush2.xpose.msra.mxu0 0.0
    %372 = vmatprep.subr.mxu0 0.0
    %373 = vmatpush2.xpose.msra.mxu0 0.0
    %374 = vmatprep.subr.mxu0 0.0
    %375 = vmatpush2.xpose.msra.mxu0 0.0
    %376 = vmatprep.subr.mxu0 0.0
    %377 = vmatpush2.xpose.msra.mxu0 0.0
    %378 = vmatprep.subr.mxu0 0.0
    %379 = vmatpush2.xpose.msra.mxu0 0.0
    %380 = vmatprep.subr.mxu0 0.0
    %381 = vmatpush2.xpose.msra.mxu0 0.0
    %382 = vmatprep.subr.mxu0 0.0
    %383 = vmatpush2.xpose.msra.mxu0 0.0
    %384 = vmatprep.subr.mxu0 0.0
    %385 = vmatpush2.xpose.msra.mxu0 0.0
    %386 = vmatprep.subr.mxu0 0.0
    %387 = vmatpush2.xpose.msra.mxu0 0.0
    %388 = vmatprep.mubr.f32.mxu0 0.0
    %389 = vmatmul.mubr.f32.gmra.mxu0 %v320
    %v390 = vpop.f32.mrf.mxu0
    %v391 = vadd.f32 0.0, %v390
    %v392 = vpop.f32.mrf.mxu0
    %393 = vdwg.mxu0
    %v394 = vmul.f32 %v314, 0.35355338
    %v395 = vmul.f32 %v391, 0.35355338
    %v398 = vlaneseq
    %v399 = vshrl.u32 %v398, 7
    %v400 = vsub.s32 0, %v399
    %v401 = vrot.slane %v141, %v400
    %v402 = vlaneseq
    %v403 = vshrl.u32 %v402, 7
    %v404 = vsub.s32 0, %v403
    %v405 = vrot.slane %v142, %v404
    %v408 = vadd.f32 %v394, %v401
    %v409 = vadd.f32 %v395, %v405
    %v410 = vsel %vm242, %v408, -inf
    %411 = vmax.xlane.f32.xlu0 %v410
    %v412 = vpop.xlane.xlu0 %411
    %v413 = vsel %vm242, %v409, -inf
    %414 = vmax.xlane.f32.xlu0 %v413
    %v415 = vpop.xlane.xlu0 %414
    %v416 = vsub.f32 %v408, %v412
    %v417 = vsub.f32 %v409, %v415
    %v418 = vmul.f32 %v416, 1.442695
    %v419 = vpow.pop %v418
    %v420 = vmul.f32 %v417, 1.442695
    %v421 = vpow.pop %v420
    %v422 = vsel %vm242, %v419, 0.0
    %423 = vadd.xlane.f32.xlu0 %v422
    %v424 = vpop.xlane.xlu0 %423
    %v425 = vsel %vm242, %v421, 0.0
    %426 = vadd.xlane.f32.xlu0 %v425
    %v427 = vpop.xlane.xlu0 %426
    %v428 = vrcp.pop %v424
    %v429 = vrcp.pop %v427
    %v430 = vmul.f32 %v419, %v428
    %v431 = vmul.f32 %v421, %v429
    %432 = vrot.lane.b32.xlu0 %v227, 64
    %v433 = vpop.permute.xlu0 %432
    %v436 = vsel %vm242, %v430, 0
    %438 = vmatprep.subr.mxu0 0.0
    %439 = vmatpush1.msra.mxu0 0.0
    %440 = vmatprep.subr.mxu0 0.0
    %441 = vmatpush1.msra.mxu0 0.0
    %442 = vmatprep.subr.mxu0 0.0
    %443 = vmatpush1.msra.mxu0 0.0
    %444 = vmatprep.subr.mxu0 0.0
    %445 = vmatpush1.msra.mxu0 0.0
    %446 = vmatprep.subr.mxu0 0.0
    %447 = vmatpush1.msra.mxu0 0.0
    %448 = vmatprep.subr.mxu0 0.0
    %449 = vmatpush1.msra.mxu0 0.0
    %450 = vmatprep.subr.mxu0 0.0
    %451 = vmatpush1.msra.mxu0 0.0
    %452 = vmatprep.subr.mxu0 0.0
    %453 = vmatpush1.msra.mxu0 0.0
    %454 = vmatprep.subr.mxu0 0.0
    %455 = vmatpush1.msra.mxu0 0.0
    %456 = vmatprep.subr.mxu0 0.0
    %457 = vmatpush1.msra.mxu0 0.0
    %458 = vmatprep.subr.mxu0 0.0
    %459 = vmatpush1.msra.mxu0 0.0
    %460 = vmatprep.subr.mxu0 0.0
    %461 = vmatpush1.msra.mxu0 0.0
    %462 = vmatprep.subr.mxu0 0.0
    %463 = vmatpush1.msra.mxu0 0.0
    %464 = vmatprep.subr.mxu0 0.0
    %465 = vmatpush1.msra.mxu0 0.0
    %466 = vmatprep.subr.mxu0 0.0
    %467 = vmatpush1.msra.mxu0 0.0
    %468 = vmatprep.subr.mxu0 0.0
    %469 = vmatpush1.msra.mxu0 %v433
    %470 = vmatprep.subr.mxu0 0.0
    %471 = vmatpush2.msra.mxu0 0.0
    %472 = vmatprep.subr.mxu0 0.0
    %473 = vmatpush2.msra.mxu0 0.0
    %474 = vmatprep.subr.mxu0 0.0
    %475 = vmatpush2.msra.mxu0 0.0
    %476 = vmatprep.subr.mxu0 0.0
    %477 = vmatpush2.msra.mxu0 0.0
    %478 = vmatprep.subr.mxu0 0.0
    %479 = vmatpush2.msra.mxu0 0.0
    %480 = vmatprep.subr.mxu0 0.0
    %481 = vmatpush2.msra.mxu0 0.0
    %482 = vmatprep.subr.mxu0 0.0
    %483 = vmatpush2.msra.mxu0 0.0
    %484 = vmatprep.subr.mxu0 0.0
    %485 = vmatpush2.msra.mxu0 0.0
    %486 = vmatprep.subr.mxu0 0.0
    %487 = vmatpush2.msra.mxu0 0.0
    %488 = vmatprep.subr.mxu0 0.0
    %489 = vmatpush2.msra.mxu0 0.0
    %490 = vmatprep.subr.mxu0 0.0
    %491 = vmatpush2.msra.mxu0 0.0
    %492 = vmatprep.subr.mxu0 0.0
    %493 = vmatpush2.msra.mxu0 0.0
    %494 = vmatprep.subr.mxu0 0.0
    %495 = vmatpush2.msra.mxu0 0.0
    %496 = vmatprep.subr.mxu0 0.0
    %497 = vmatpush2.msra.mxu0 0.0
    %498 = vmatprep.subr.mxu0 0.0
    %499 = vmatpush2.msra.mxu0 0.0
    %500 = vmatprep.subr.mxu0 0.0
    %501 = vmatpush2.msra.mxu0 0.0
    %502 = vmatprep.mubr.f32.mxu0 0.0
    %503 = vmatmul.mubr.f32.gmra.mxu0 %v436
    %v504 = vpop.f32.mrf.mxu0
    %v505 = vadd.f32 0.0, %v504
    %v506 = vpop.f32.mrf.mxu0
    %507 = vdwg.mxu0
    %508 = vrot.lane.b32.xlu0 %v232, 64
    %v509 = vpop.permute.xlu0 %508
    %v512 = vsel %vm242, %v431, 0
    %514 = vmatprep.subr.mxu0 0.0
    %515 = vmatpush1.msra.mxu0 0.0
    %516 = vmatprep.subr.mxu0 0.0
    %517 = vmatpush1.msra.mxu0 0.0
    %518 = vmatprep.subr.mxu0 0.0
    %519 = vmatpush1.msra.mxu0 0.0
    %520 = vmatprep.subr.mxu0 0.0
    %521 = vmatpush1.msra.mxu0 0.0
    %522 = vmatprep.subr.mxu0 0.0
    %523 = vmatpush1.msra.mxu0 0.0
    %524 = vmatprep.subr.mxu0 0.0
    %525 = vmatpush1.msra.mxu0 0.0
    %526 = vmatprep.subr.mxu0 0.0
    %527 = vmatpush1.msra.mxu0 0.0
    %528 = vmatprep.subr.mxu0 0.0
    %529 = vmatpush1.msra.mxu0 0.0
    %530 = vmatprep.subr.mxu0 0.0
    %531 = vmatpush1.msra.mxu0 0.0
    %532 = vmatprep.subr.mxu0 0.0
    %533 = vmatpush1.msra.mxu0 0.0
    %534 = vmatprep.subr.mxu0 0.0
    %535 = vmatpush1.msra.mxu0 0.0
    %536 = vmatprep.subr.mxu0 0.0
    %537 = vmatpush1.msra.mxu0 0.0
    %538 = vmatprep.subr.mxu0 0.0
    %539 = vmatpush1.msra.mxu0 0.0
    %540 = vmatprep.subr.mxu0 0.0
    %541 = vmatpush1.msra.mxu0 0.0
    %542 = vmatprep.subr.mxu0 0.0
    %543 = vmatpush1.msra.mxu0 0.0
    %544 = vmatprep.subr.mxu0 0.0
    %545 = vmatpush1.msra.mxu0 %v509
    %546 = vmatprep.subr.mxu0 0.0
    %547 = vmatpush2.msra.mxu0 0.0
    %548 = vmatprep.subr.mxu0 0.0
    %549 = vmatpush2.msra.mxu0 0.0
    %550 = vmatprep.subr.mxu0 0.0
    %551 = vmatpush2.msra.mxu0 0.0
    %552 = vmatprep.subr.mxu0 0.0
    %553 = vmatpush2.msra.mxu0 0.0
    %554 = vmatprep.subr.mxu0 0.0
    %555 = vmatpush2.msra.mxu0 0.0
    %556 = vmatprep.subr.mxu0 0.0
    %557 = vmatpush2.msra.mxu0 0.0
    %558 = vmatprep.subr.mxu0 0.0
    %559 = vmatpush2.msra.mxu0 0.0
    %560 = vmatprep.subr.mxu0 0.0
    %561 = vmatpush2.msra.mxu0 0.0
    %562 = vmatprep.subr.mxu0 0.0
    %563 = vmatpush2.msra.mxu0 0.0
    %564 = vmatprep.subr.mxu0 0.0
    %565 = vmatpush2.msra.mxu0 0.0
    %566 = vmatprep.subr.mxu0 0.0
    %567 = vmatpush2.msra.mxu0 0.0
    %568 = vmatprep.subr.mxu0 0.0
    %569 = vmatpush2.msra.mxu0 0.0
    %570 = vmatprep.subr.mxu0 0.0
    %571 = vmatpush2.msra.mxu0 0.0
    %572 = vmatprep.subr.mxu0 0.0
    %573 = vmatpush2.msra.mxu0 0.0
    %574 = vmatprep.subr.mxu0 0.0
    %575 = vmatpush2.msra.mxu0 0.0
    %576 = vmatprep.subr.mxu0 0.0
    %577 = vmatpush2.msra.mxu0 0.0
    %578 = vmatprep.mubr.f32.mxu0 0.0
    %579 = vmatmul.mubr.f32.gmra.mxu0 %v512
    %v580 = vpop.f32.mrf.mxu0
    %v581 = vadd.f32 0.0, %v580
    %v582 = vpop.f32.mrf.mxu0
    %583 = vdwg.mxu0
    %584 = vrot.lane.b32.xlu0 %v227, 120
    %v585 = vpop.permute.xlu0 %584
    %586 = vrot.lane.b32.xlu0 %v227, 88
    %v587 = vpop.permute.xlu0 %586
    %v588 = vsel %vm242, %v585, 0
    %v590 = vsel %vm242, %v587, 0
    %592 = vmatprep.subr.mxu0 0.0
    %593 = vmatpush1.xpose.msra.mxu0 0.0
    %594 = vmatprep.subr.mxu0 0.0
    %595 = vmatpush1.xpose.msra.mxu0 0.0
    %596 = vmatprep.subr.mxu0 0.0
    %597 = vmatpush1.xpose.msra.mxu0 0.0
    %598 = vmatprep.subr.mxu0 0.0
    %599 = vmatpush1.xpose.msra.mxu0 0.0
    %600 = vmatprep.subr.mxu0 0.0
    %601 = vmatpush1.xpose.msra.mxu0 0.0
    %602 = vmatprep.subr.mxu0 0.0
    %603 = vmatpush1.xpose.msra.mxu0 0.0
    %604 = vmatprep.subr.mxu0 0.0
    %605 = vmatpush1.xpose.msra.mxu0 0.0
    %606 = vmatprep.subr.mxu0 0.0
    %607 = vmatpush1.xpose.msra.mxu0 0.0
    %608 = vmatprep.subr.mxu0 0.0
    %609 = vmatpush1.xpose.msra.mxu0 0.0
    %610 = vmatprep.subr.mxu0 0.0
    %611 = vmatpush1.xpose.msra.mxu0 0.0
    %612 = vmatprep.subr.mxu0 0.0
    %613 = vmatpush1.xpose.msra.mxu0 0.0
    %614 = vmatprep.subr.mxu0 0.0
    %615 = vmatpush1.xpose.msra.mxu0 0.0
    %616 = vmatprep.subr.mxu0 0.0
    %617 = vmatpush1.xpose.msra.mxu0 0.0
    %618 = vmatprep.subr.mxu0 0.0
    %619 = vmatpush1.xpose.msra.mxu0 0.0
    %620 = vmatprep.subr.mxu0 0.0
    %621 = vmatpush1.xpose.msra.mxu0 0.0
    %622 = vmatprep.subr.mxu0 0.0
    %623 = vmatpush1.xpose.msra.mxu0 %v590
    %624 = vmatprep.subr.mxu0 0.0
    %625 = vmatpush2.xpose.msra.mxu0 0.0
    %626 = vmatprep.subr.mxu0 0.0
    %627 = vmatpush2.xpose.msra.mxu0 0.0
    %628 = vmatprep.subr.mxu0 0.0
    %629 = vmatpush2.xpose.msra.mxu0 0.0
    %630 = vmatprep.subr.mxu0 0.0
    %631 = vmatpush2.xpose.msra.mxu0 0.0
    %632 = vmatprep.subr.mxu0 0.0
    %633 = vmatpush2.xpose.msra.mxu0 0.0
    %634 = vmatprep.subr.mxu0 0.0
    %635 = vmatpush2.xpose.msra.mxu0 0.0
    %636 = vmatprep.subr.mxu0 0.0
    %637 = vmatpush2.xpose.msra.mxu0 0.0
    %638 = vmatprep.subr.mxu0 0.0
    %639 = vmatpush2.xpose.msra.mxu0 0.0
    %640 = vmatprep.subr.mxu0 0.0
    %641 = vmatpush2.xpose.msra.mxu0 0.0
    %642 = vmatprep.subr.mxu0 0.0
    %643 = vmatpush2.xpose.msra.mxu0 0.0
    %644 = vmatprep.subr.mxu0 0.0
    %645 = vmatpush2.xpose.msra.mxu0 0.0
    %646 = vmatprep.subr.mxu0 0.0
    %647 = vmatpush2.xpose.msra.mxu0 0.0
    %648 = vmatprep.subr.mxu0 0.0
    %649 = vmatpush2.xpose.msra.mxu0 0.0
    %650 = vmatprep.subr.mxu0 0.0
    %651 = vmatpush2.xpose.msra.mxu0 0.0
    %652 = vmatprep.subr.mxu0 0.0
    %653 = vmatpush2.xpose.msra.mxu0 0.0
    %654 = vmatprep.subr.mxu0 0.0
    %655 = vmatpush2.xpose.msra.mxu0 0.0
    %656 = vmatprep.mubr.f32.mxu0 0.0
    %657 = vmatmul.mubr.f32.gmra.mxu0 %v588
    %v658 = vpop.f32.mrf.mxu0
    %v659 = vadd.f32 0.0, %v658
    %v660 = vpop.f32.mrf.mxu0
    %661 = vdwg.mxu0
    %662 = vrot.lane.b32.xlu0 %v232, 120
    %v663 = vpop.permute.xlu0 %662
    %664 = vrot.lane.b32.xlu0 %v232, 88
    %v665 = vpop.permute.xlu0 %664
    %v666 = vsel %vm242, %v663, 0
    %v668 = vsel %vm242, %v665, 0
    %670 = vmatprep.subr.mxu0 0.0
    %671 = vmatpush1.xpose.msra.mxu0 0.0
    %672 = vmatprep.subr.mxu0 0.0
    %673 = vmatpush1.xpose.msra.mxu0 0.0
    %674 = vmatprep.subr.mxu0 0.0
    %675 = vmatpush1.xpose.msra.mxu0 0.0
    %676 = vmatprep.subr.mxu0 0.0
    %677 = vmatpush1.xpose.msra.mxu0 0.0
    %678 = vmatprep.subr.mxu0 0.0
    %679 = vmatpush1.xpose.msra.mxu0 0.0
    %680 = vmatprep.subr.mxu0 0.0
    %681 = vmatpush1.xpose.msra.mxu0 0.0
    %682 = vmatprep.subr.mxu0 0.0
    %683 = vmatpush1.xpose.msra.mxu0 0.0
    %684 = vmatprep.subr.mxu0 0.0
    %685 = vmatpush1.xpose.msra.mxu0 0.0
    %686 = vmatprep.subr.mxu0 0.0
    %687 = vmatpush1.xpose.msra.mxu0 0.0
    %688 = vmatprep.subr.mxu0 0.0
    %689 = vmatpush1.xpose.msra.mxu0 0.0
    %690 = vmatprep.subr.mxu0 0.0
    %691 = vmatpush1.xpose.msra.mxu0 0.0
    %692 = vmatprep.subr.mxu0 0.0
    %693 = vmatpush1.xpose.msra.mxu0 0.0
    %694 = vmatprep.subr.mxu0 0.0
    %695 = vmatpush1.xpose.msra.mxu0 0.0
    %696 = vmatprep.subr.mxu0 0.0
    %697 = vmatpush1.xpose.msra.mxu0 0.0
    %698 = vmatprep.subr.mxu0 0.0
    %699 = vmatpush1.xpose.msra.mxu0 0.0
    %700 = vmatprep.subr.mxu0 0.0
    %701 = vmatpush1.xpose.msra.mxu0 %v668
    %702 = vmatprep.subr.mxu0 0.0
    %703 = vmatpush2.xpose.msra.mxu0 0.0
    %704 = vmatprep.subr.mxu0 0.0
    %705 = vmatpush2.xpose.msra.mxu0 0.0
    %706 = vmatprep.subr.mxu0 0.0
    %707 = vmatpush2.xpose.msra.mxu0 0.0
    %708 = vmatprep.subr.mxu0 0.0
    %709 = vmatpush2.xpose.msra.mxu0 0.0
    %710 = vmatprep.subr.mxu0 0.0
    %711 = vmatpush2.xpose.msra.mxu0 0.0
    %712 = vmatprep.subr.mxu0 0.0
    %713 = vmatpush2.xpose.msra.mxu0 0.0
    %714 = vmatprep.subr.mxu0 0.0
    %715 = vmatpush2.xpose.msra.mxu0 0.0
    %716 = vmatprep.subr.mxu0 0.0
    %717 = vmatpush2.xpose.msra.mxu0 0.0
    %718 = vmatprep.subr.mxu0 0.0
    %719 = vmatpush2.xpose.msra.mxu0 0.0
    %720 = vmatprep.subr.mxu0 0.0
    %721 = vmatpush2.xpose.msra.mxu0 0.0
    %722 = vmatprep.subr.mxu0 0.0
    %723 = vmatpush2.xpose.msra.mxu0 0.0
    %724 = vmatprep.subr.mxu0 0.0
    %725 = vmatpush2.xpose.msra.mxu0 0.0
    %726 = vmatprep.subr.mxu0 0.0
    %727 = vmatpush2.xpose.msra.mxu0 0.0
    %728 = vmatprep.subr.mxu0 0.0
    %729 = vmatpush2.xpose.msra.mxu0 0.0
    %730 = vmatprep.subr.mxu0 0.0
    %731 = vmatpush2.xpose.msra.mxu0 0.0
    %732 = vmatprep.subr.mxu0 0.0
    %733 = vmatpush2.xpose.msra.mxu0 0.0
    %734 = vmatprep.mubr.f32.mxu0 0.0
    %735 = vmatmul.mubr.f32.gmra.mxu0 %v666
    %v736 = vpop.f32.mrf.mxu0
    %v737 = vadd.f32 0.0, %v736
    %v738 = vpop.f32.mrf.mxu0
    %739 = vdwg.mxu0
    %v740 = vmul.f32 %v659, 0.35355338
    %v741 = vmul.f32 %v737, 0.35355338
    %v742 = vadd.f32 %v740, %v401
    %v743 = vadd.f32 %v741, %v405
    %v744 = vsel %vm242, %v742, -inf
    %745 = vmax.xlane.f32.xlu0 %v744
    %v746 = vpop.xlane.xlu0 %745
    %v747 = vsel %vm242, %v743, -inf
    %748 = vmax.xlane.f32.xlu0 %v747
    %v749 = vpop.xlane.xlu0 %748
    %v750 = vsub.f32 %v742, %v746
    %v751 = vsub.f32 %v743, %v749
    %v752 = vmul.f32 %v750, 1.442695
    %v753 = vpow.pop %v752
    %v754 = vmul.f32 %v751, 1.442695
    %v755 = vpow.pop %v754
    %v756 = vsel %vm242, %v753, 0.0
    %757 = vadd.xlane.f32.xlu0 %v756
    %v758 = vpop.xlane.xlu0 %757
    %v759 = vsel %vm242, %v755, 0.0
    %760 = vadd.xlane.f32.xlu0 %v759
    %v761 = vpop.xlane.xlu0 %760
    %v762 = vrcp.pop %v758
    %v763 = vrcp.pop %v761
    %v764 = vmul.f32 %v753, %v762
    %v765 = vmul.f32 %v755, %v763
    %766 = vrot.lane.b32.xlu0 %v227, 56
    %v767 = vpop.permute.xlu0 %766
    %v770 = vsel %vm242, %v764, 0
    %772 = vmatprep.subr.mxu0 0.0
    %773 = vmatpush1.msra.mxu0 0.0
    %774 = vmatprep.subr.mxu0 0.0
    %775 = vmatpush1.msra.mxu0 0.0
    %776 = vmatprep.subr.mxu0 0.0
    %777 = vmatpush1.msra.mxu0 0.0
    %778 = vmatprep.subr.mxu0 0.0
    %779 = vmatpush1.msra.mxu0 0.0
    %780 = vmatprep.subr.mxu0 0.0
    %781 = vmatpush1.msra.mxu0 0.0
    %782 = vmatprep.subr.mxu0 0.0
    %783 = vmatpush1.msra.mxu0 0.0
    %784 = vmatprep.subr.mxu0 0.0
    %785 = vmatpush1.msra.mxu0 0.0
    %786 = vmatprep.subr.mxu0 0.0
    %787 = vmatpush1.msra.mxu0 0.0
    %788 = vmatprep.subr.mxu0 0.0
    %789 = vmatpush1.msra.mxu0 0.0
    %790 = vmatprep.subr.mxu0 0.0
    %791 = vmatpush1.msra.mxu0 0.0
    %792 = vmatprep.subr.mxu0 0.0
    %793 = vmatpush1.msra.mxu0 0.0
    %794 = vmatprep.subr.mxu0 0.0
    %795 = vmatpush1.msra.mxu0 0.0
    %796 = vmatprep.subr.mxu0 0.0
    %797 = vmatpush1.msra.mxu0 0.0
    %798 = vmatprep.subr.mxu0 0.0
    %799 = vmatpush1.msra.mxu0 0.0
    %800 = vmatprep.subr.mxu0 0.0
    %801 = vmatpush1.msra.mxu0 0.0
    %802 = vmatprep.subr.mxu0 0.0
    %803 = vmatpush1.msra.mxu0 %v767
    %804 = vmatprep.subr.mxu0 0.0
    %805 = vmatpush2.msra.mxu0 0.0
    %806 = vmatprep.subr.mxu0 0.0
    %807 = vmatpush2.msra.mxu0 0.0
    %808 = vmatprep.subr.mxu0 0.0
    %809 = vmatpush2.msra.mxu0 0.0
    %810 = vmatprep.subr.mxu0 0.0
    %811 = vmatpush2.msra.mxu0 0.0
    %812 = vmatprep.subr.mxu0 0.0
    %813 = vmatpush2.msra.mxu0 0.0
    %814 = vmatprep.subr.mxu0 0.0
    %815 = vmatpush2.msra.mxu0 0.0
    %816 = vmatprep.subr.mxu0 0.0
    %817 = vmatpush2.msra.mxu0 0.0
    %818 = vmatprep.subr.mxu0 0.0
    %819 = vmatpush2.msra.mxu0 0.0
    %820 = vmatprep.subr.mxu0 0.0
    %821 = vmatpush2.msra.mxu0 0.0
    %822 = vmatprep.subr.mxu0 0.0
    %823 = vmatpush2.msra.mxu0 0.0
    %824 = vmatprep.subr.mxu0 0.0
    %825 = vmatpush2.msra.mxu0 0.0
    %826 = vmatprep.subr.mxu0 0.0
    %827 = vmatpush2.msra.mxu0 0.0
    %828 = vmatprep.subr.mxu0 0.0
    %829 = vmatpush2.msra.mxu0 0.0
    %830 = vmatprep.subr.mxu0 0.0
    %831 = vmatpush2.msra.mxu0 0.0
    %832 = vmatprep.subr.mxu0 0.0
    %833 = vmatpush2.msra.mxu0 0.0
    %834 = vmatprep.subr.mxu0 0.0
    %835 = vmatpush2.msra.mxu0 0.0
    %836 = vmatprep.mubr.f32.mxu0 0.0
    %837 = vmatmul.mubr.f32.gmra.mxu0 %v770
    %v838 = vpop.f32.mrf.mxu0
    %v839 = vadd.f32 0.0, %v838
    %v840 = vpop.f32.mrf.mxu0
    %841 = vdwg.mxu0
    %842 = vrot.lane.b32.xlu0 %v232, 56
    %v843 = vpop.permute.xlu0 %842
    %v846 = vsel %vm242, %v765, 0
    %848 = vmatprep.subr.mxu0 0.0
    %849 = vmatpush1.msra.mxu0 0.0
    %850 = vmatprep.subr.mxu0 0.0
    %851 = vmatpush1.msra.mxu0 0.0
    %852 = vmatprep.subr.mxu0 0.0
    %853 = vmatpush1.msra.mxu0 0.0
    %854 = vmatprep.subr.mxu0 0.0
    %855 = vmatpush1.msra.mxu0 0.0
    %856 = vmatprep.subr.mxu0 0.0
    %857 = vmatpush1.msra.mxu0 0.0
    %858 = vmatprep.subr.mxu0 0.0
    %859 = vmatpush1.msra.mxu0 0.0
    %860 = vmatprep.subr.mxu0 0.0
    %861 = vmatpush1.msra.mxu0 0.0
    %862 = vmatprep.subr.mxu0 0.0
    %863 = vmatpush1.msra.mxu0 0.0
    %864 = vmatprep.subr.mxu0 0.0
    %865 = vmatpush1.msra.mxu0 0.0
    %866 = vmatprep.subr.mxu0 0.0
    %867 = vmatpush1.msra.mxu0 0.0
    %868 = vmatprep.subr.mxu0 0.0
    %869 = vmatpush1.msra.mxu0 0.0
    %870 = vmatprep.subr.mxu0 0.0
    %871 = vmatpush1.msra.mxu0 0.0
    %872 = vmatprep.subr.mxu0 0.0
    %873 = vmatpush1.msra.mxu0 0.0
    %874 = vmatprep.subr.mxu0 0.0
    %875 = vmatpush1.msra.mxu0 0.0
    %876 = vmatprep.subr.mxu0 0.0
    %877 = vmatpush1.msra.mxu0 0.0
    %878 = vmatprep.subr.mxu0 0.0
    %879 = vmatpush1.msra.mxu0 %v843
    %880 = vmatprep.subr.mxu0 0.0
    %881 = vmatpush2.msra.mxu0 0.0
    %882 = vmatprep.subr.mxu0 0.0
    %883 = vmatpush2.msra.mxu0 0.0
    %884 = vmatprep.subr.mxu0 0.0
    %885 = vmatpush2.msra.mxu0 0.0
    %886 = vmatprep.subr.mxu0 0.0
    %887 = vmatpush2.msra.mxu0 0.0
    %888 = vmatprep.subr.mxu0 0.0
    %889 = vmatpush2.msra.mxu0 0.0
    %890 = vmatprep.subr.mxu0 0.0
    %891 = vmatpush2.msra.mxu0 0.0
    %892 = vmatprep.subr.mxu0 0.0
    %893 = vmatpush2.msra.mxu0 0.0
    %894 = vmatprep.subr.mxu0 0.0
    %895 = vmatpush2.msra.mxu0 0.0
    %896 = vmatprep.subr.mxu0 0.0
    %897 = vmatpush2.msra.mxu0 0.0
    %898 = vmatprep.subr.mxu0 0.0
    %899 = vmatpush2.msra.mxu0 0.0
    %900 = vmatprep.subr.mxu0 0.0
    %901 = vmatpush2.msra.mxu0 0.0
    %902 = vmatprep.subr.mxu0 0.0
    %903 = vmatpush2.msra.mxu0 0.0
    %904 = vmatprep.subr.mxu0 0.0
    %905 = vmatpush2.msra.mxu0 0.0
    %906 = vmatprep.subr.mxu0 0.0
    %907 = vmatpush2.msra.mxu0 0.0
    %908 = vmatprep.subr.mxu0 0.0
    %909 = vmatpush2.msra.mxu0 0.0
    %910 = vmatprep.subr.mxu0 0.0
    %911 = vmatpush2.msra.mxu0 0.0
    %912 = vmatprep.mubr.f32.mxu0 0.0
    %913 = vmatmul.mubr.f32.gmra.mxu0 %v846
    %v914 = vpop.f32.mrf.mxu0
    %v915 = vadd.f32 0.0, %v914
    %v916 = vpop.f32.mrf.mxu0
    %917 = vdwg.mxu0
    %v919 = vsel %vm242, %v839, 0
    %v922 = vsel %vm242, %v915, 0
    %924 = vmatprep.subr.mxu0 0.0
    %925 = vmatpush1.msra.mxu0 0.0
    %926 = vmatprep.subr.mxu0 0.0
    %927 = vmatpush1.msra.mxu0 0.0
    %928 = vmatprep.subr.mxu0 0.0
    %929 = vmatpush1.msra.mxu0 0.0
    %930 = vmatprep.subr.mxu0 0.0
    %931 = vmatpush1.msra.mxu0 0.0
    %932 = vmatprep.subr.mxu0 0.0
    %933 = vmatpush1.msra.mxu0 0.0
    %934 = vmatprep.subr.mxu0 0.0
    %935 = vmatpush1.msra.mxu0 0.0
    %936 = vmatprep.subr.mxu0 0.0
    %937 = vmatpush1.msra.mxu0 0.0
    %938 = vmatprep.subr.mxu0 0.0
    %939 = vmatpush1.msra.mxu0 0.0
    %940 = vmatprep.subr.mxu0 0.0
    %941 = vmatpush1.msra.mxu0 0.0
    %942 = vmatprep.subr.mxu0 0.0
    %943 = vmatpush1.msra.mxu0 0.0
    %944 = vmatprep.subr.mxu0 0.0
    %945 = vmatpush1.msra.mxu0 0.0
    %946 = vmatprep.subr.mxu0 0.0
    %947 = vmatpush1.msra.mxu0 0.0
    %948 = vmatprep.subr.mxu0 0.0
    %949 = vmatpush1.msra.mxu0 0.0
    %950 = vmatprep.subr.mxu0 0.0
    %951 = vmatpush1.msra.mxu0 0.0
    %952 = vmatprep.subr.mxu0 0.0
    %953 = vmatpush1.msra.mxu0 0.0
    %954 = vmatprep.subr.mxu0 0.0
    %955 = vmatpush1.msra.mxu0 %v236
    %956 = vmatprep.subr.mxu0 0.0
    %957 = vmatpush2.msra.mxu0 0.0
    %958 = vmatprep.subr.mxu0 0.0
    %959 = vmatpush2.msra.mxu0 0.0
    %960 = vmatprep.subr.mxu0 0.0
    %961 = vmatpush2.msra.mxu0 0.0
    %962 = vmatprep.subr.mxu0 0.0
    %963 = vmatpush2.msra.mxu0 0.0
    %964 = vmatprep.subr.mxu0 0.0
    %965 = vmatpush2.msra.mxu0 0.0
    %966 = vmatprep.subr.mxu0 0.0
    %967 = vmatpush2.msra.mxu0 0.0
    %968 = vmatprep.subr.mxu0 0.0
    %969 = vmatpush2.msra.mxu0 0.0
    %970 = vmatprep.subr.mxu0 0.0
    %971 = vmatpush2.msra.mxu0 0.0
    %972 = vmatprep.subr.mxu0 0.0
    %973 = vmatpush2.msra.mxu0 0.0
    %974 = vmatprep.subr.mxu0 0.0
    %975 = vmatpush2.msra.mxu0 0.0
    %976 = vmatprep.subr.mxu0 0.0
    %977 = vmatpush2.msra.mxu0 0.0
    %978 = vmatprep.subr.mxu0 0.0
    %979 = vmatpush2.msra.mxu0 0.0
    %980 = vmatprep.subr.mxu0 0.0
    %981 = vmatpush2.msra.mxu0 0.0
    %982 = vmatprep.subr.mxu0 0.0
    %983 = vmatpush2.msra.mxu0 0.0
    %984 = vmatprep.subr.mxu0 0.0
    %985 = vmatpush2.msra.mxu0 0.0
    %986 = vmatprep.subr.mxu0 0.0
    %987 = vmatpush2.msra.mxu0 0.0
    %988 = vmatprep.mubr.f32.mxu0 0.0
    %989 = vmatmul.mubr.f32.gmra.mxu0 %v919
    %v990 = vpop.f32.mrf.mxu0
    %v991 = vadd.f32 0.0, %v990
    %v992 = vpop.f32.mrf.mxu0
    %993 = vmatprep.mubr.f32.mxu0 0.0
    %994 = vmatmul.mubr.f32.gmra.mxu0 %v922
    %v995 = vpop.f32.mrf.mxu0
    %v996 = vadd.f32 0.0, %v995
    %v997 = vpop.f32.mrf.mxu0
    %998 = vdwg.mxu0
    %v1000 = vsel %vm242, %v505, 0
    %v1003 = vsel %vm242, %v581, 0
    %1005 = vmatprep.subr.mxu0 0.0
    %1006 = vmatpush1.msra.mxu0 0.0
    %1007 = vmatprep.subr.mxu0 0.0
    %1008 = vmatpush1.msra.mxu0 0.0
    %1009 = vmatprep.subr.mxu0 0.0
    %1010 = vmatpush1.msra.mxu0 0.0
    %1011 = vmatprep.subr.mxu0 0.0
    %1012 = vmatpush1.msra.mxu0 0.0
    %1013 = vmatprep.subr.mxu0 0.0
    %1014 = vmatpush1.msra.mxu0 0.0
    %1015 = vmatprep.subr.mxu0 0.0
    %1016 = vmatpush1.msra.mxu0 0.0
    %1017 = vmatprep.subr.mxu0 0.0
    %1018 = vmatpush1.msra.mxu0 0.0
    %1019 = vmatprep.subr.mxu0 0.0
    %1020 = vmatpush1.msra.mxu0 0.0
    %1021 = vmatprep.subr.mxu0 0.0
    %1022 = vmatpush1.msra.mxu0 0.0
    %1023 = vmatprep.subr.mxu0 0.0
    %1024 = vmatpush1.msra.mxu0 0.0
    %1025 = vmatprep.subr.mxu0 0.0
    %1026 = vmatpush1.msra.mxu0 0.0
    %1027 = vmatprep.subr.mxu0 0.0
    %1028 = vmatpush1.msra.mxu0 0.0
    %1029 = vmatprep.subr.mxu0 0.0
    %1030 = vmatpush1.msra.mxu0 0.0
    %1031 = vmatprep.subr.mxu0 0.0
    %1032 = vmatpush1.msra.mxu0 0.0
    %1033 = vmatprep.subr.mxu0 0.0
    %1034 = vmatpush1.msra.mxu0 0.0
    %1035 = vmatprep.subr.mxu0 0.0
    %1036 = vmatpush1.msra.mxu0 %v235
    %1037 = vmatprep.subr.mxu0 0.0
    %1038 = vmatpush2.msra.mxu0 0.0
    %1039 = vmatprep.subr.mxu0 0.0
    %1040 = vmatpush2.msra.mxu0 0.0
    %1041 = vmatprep.subr.mxu0 0.0
    %1042 = vmatpush2.msra.mxu0 0.0
    %1043 = vmatprep.subr.mxu0 0.0
    %1044 = vmatpush2.msra.mxu0 0.0
    %1045 = vmatprep.subr.mxu0 0.0
    %1046 = vmatpush2.msra.mxu0 0.0
    %1047 = vmatprep.subr.mxu0 0.0
    %1048 = vmatpush2.msra.mxu0 0.0
    %1049 = vmatprep.subr.mxu0 0.0
    %1050 = vmatpush2.msra.mxu0 0.0
    %1051 = vmatprep.subr.mxu0 0.0
    %1052 = vmatpush2.msra.mxu0 0.0
    %1053 = vmatprep.subr.mxu0 0.0
    %1054 = vmatpush2.msra.mxu0 0.0
    %1055 = vmatprep.subr.mxu0 0.0
    %1056 = vmatpush2.msra.mxu0 0.0
    %1057 = vmatprep.subr.mxu0 0.0
    %1058 = vmatpush2.msra.mxu0 0.0
    %1059 = vmatprep.subr.mxu0 0.0
    %1060 = vmatpush2.msra.mxu0 0.0
    %1061 = vmatprep.subr.mxu0 0.0
    %1062 = vmatpush2.msra.mxu0 0.0
    %1063 = vmatprep.subr.mxu0 0.0
    %1064 = vmatpush2.msra.mxu0 0.0
    %1065 = vmatprep.subr.mxu0 0.0
    %1066 = vmatpush2.msra.mxu0 0.0
    %1067 = vmatprep.subr.mxu0 0.0
    %1068 = vmatpush2.msra.mxu0 0.0
    %1069 = vmatprep.mubr.f32.mxu0 0.0
    %1070 = vmatmul.mubr.f32.gmra.mxu0 %v1000
    %v1071 = vpop.f32.mrf.mxu0
    %v1072 = vadd.f32 %v991, %v1071
    %v1073 = vpop.f32.mrf.mxu0
    %1074 = vmatprep.mubr.f32.mxu0 0.0
    %1075 = vmatmul.mubr.f32.gmra.mxu0 %v1003
    %v1076 = vpop.f32.mrf.mxu0
    %v1077 = vadd.f32 %v996, %v1076
    %v1078 = vpop.f32.mrf.mxu0
    %1079 = vdwg.mxu0
    %1080 = vrot.lane.b32.xlu0 %v227, 112
    %v1081 = vpop.permute.xlu0 %1080
    %1082 = vrot.lane.b32.xlu0 %v227, 80
    %v1083 = vpop.permute.xlu0 %1082
    %v1084 = vsel %vm242, %v1081, 0
    %v1086 = vsel %vm242, %v1083, 0
    %1088 = vmatprep.subr.mxu0 0.0
    %1089 = vmatpush1.xpose.msra.mxu0 0.0
    %1090 = vmatprep.subr.mxu0 0.0
    %1091 = vmatpush1.xpose.msra.mxu0 0.0
    %1092 = vmatprep.subr.mxu0 0.0
    %1093 = vmatpush1.xpose.msra.mxu0 0.0
    %1094 = vmatprep.subr.mxu0 0.0
    %1095 = vmatpush1.xpose.msra.mxu0 0.0
    %1096 = vmatprep.subr.mxu0 0.0
    %1097 = vmatpush1.xpose.msra.mxu0 0.0
    %1098 = vmatprep.subr.mxu0 0.0
    %1099 = vmatpush1.xpose.msra.mxu0 0.0
    %1100 = vmatprep.subr.mxu0 0.0
    %1101 = vmatpush1.xpose.msra.mxu0 0.0
    %1102 = vmatprep.subr.mxu0 0.0
    %1103 = vmatpush1.xpose.msra.mxu0 0.0
    %1104 = vmatprep.subr.mxu0 0.0
    %1105 = vmatpush1.xpose.msra.mxu0 0.0
    %1106 = vmatprep.subr.mxu0 0.0
    %1107 = vmatpush1.xpose.msra.mxu0 0.0
    %1108 = vmatprep.subr.mxu0 0.0
    %1109 = vmatpush1.xpose.msra.mxu0 0.0
    %1110 = vmatprep.subr.mxu0 0.0
    %1111 = vmatpush1.xpose.msra.mxu0 0.0
    %1112 = vmatprep.subr.mxu0 0.0
    %1113 = vmatpush1.xpose.msra.mxu0 0.0
    %1114 = vmatprep.subr.mxu0 0.0
    %1115 = vmatpush1.xpose.msra.mxu0 0.0
    %1116 = vmatprep.subr.mxu0 0.0
    %1117 = vmatpush1.xpose.msra.mxu0 0.0
    %1118 = vmatprep.subr.mxu0 0.0
    %1119 = vmatpush1.xpose.msra.mxu0 %v1086
    %1120 = vmatprep.subr.mxu0 0.0
    %1121 = vmatpush2.xpose.msra.mxu0 0.0
    %1122 = vmatprep.subr.mxu0 0.0
    %1123 = vmatpush2.xpose.msra.mxu0 0.0
    %1124 = vmatprep.subr.mxu0 0.0
    %1125 = vmatpush2.xpose.msra.mxu0 0.0
    %1126 = vmatprep.subr.mxu0 0.0
    %1127 = vmatpush2.xpose.msra.mxu0 0.0
    %1128 = vmatprep.subr.mxu0 0.0
    %1129 = vmatpush2.xpose.msra.mxu0 0.0
    %1130 = vmatprep.subr.mxu0 0.0
    %1131 = vmatpush2.xpose.msra.mxu0 0.0
    %1132 = vmatprep.subr.mxu0 0.0
    %1133 = vmatpush2.xpose.msra.mxu0 0.0
    %1134 = vmatprep.subr.mxu0 0.0
    %1135 = vmatpush2.xpose.msra.mxu0 0.0
    %1136 = vmatprep.subr.mxu0 0.0
    %1137 = vmatpush2.xpose.msra.mxu0 0.0
    %1138 = vmatprep.subr.mxu0 0.0
    %1139 = vmatpush2.xpose.msra.mxu0 0.0
    %1140 = vmatprep.subr.mxu0 0.0
    %1141 = vmatpush2.xpose.msra.mxu0 0.0
    %1142 = vmatprep.subr.mxu0 0.0
    %1143 = vmatpush2.xpose.msra.mxu0 0.0
    %1144 = vmatprep.subr.mxu0 0.0
    %1145 = vmatpush2.xpose.msra.mxu0 0.0
    %1146 = vmatprep.subr.mxu0 0.0
    %1147 = vmatpush2.xpose.msra.mxu0 0.0
    %1148 = vmatprep.subr.mxu0 0.0
    %1149 = vmatpush2.xpose.msra.mxu0 0.0
    %1150 = vmatprep.subr.mxu0 0.0
    %1151 = vmatpush2.xpose.msra.mxu0 0.0
    %1152 = vmatprep.mubr.f32.mxu0 0.0
    %1153 = vmatmul.mubr.f32.gmra.mxu0 %v1084
    %v1154 = vpop.f32.mrf.mxu0
    %v1155 = vadd.f32 0.0, %v1154
    %v1156 = vpop.f32.mrf.mxu0
    %1157 = vdwg.mxu0
    %1158 = vrot.lane.b32.xlu0 %v232, 112
    %v1159 = vpop.permute.xlu0 %1158
    %1160 = vrot.lane.b32.xlu0 %v232, 80
    %v1161 = vpop.permute.xlu0 %1160
    %v1162 = vsel %vm242, %v1159, 0
    %v1164 = vsel %vm242, %v1161, 0
    %1166 = vmatprep.subr.mxu0 0.0
    %1167 = vmatpush1.xpose.msra.mxu0 0.0
    %1168 = vmatprep.subr.mxu0 0.0
    %1169 = vmatpush1.xpose.msra.mxu0 0.0
    %1170 = vmatprep.subr.mxu0 0.0
    %1171 = vmatpush1.xpose.msra.mxu0 0.0
    %1172 = vmatprep.subr.mxu0 0.0
    %1173 = vmatpush1.xpose.msra.mxu0 0.0
    %1174 = vmatprep.subr.mxu0 0.0
    %1175 = vmatpush1.xpose.msra.mxu0 0.0
    %1176 = vmatprep.subr.mxu0 0.0
    %1177 = vmatpush1.xpose.msra.mxu0 0.0
    %1178 = vmatprep.subr.mxu0 0.0
    %1179 = vmatpush1.xpose.msra.mxu0 0.0
    %1180 = vmatprep.subr.mxu0 0.0
    %1181 = vmatpush1.xpose.msra.mxu0 0.0
    %1182 = vmatprep.subr.mxu0 0.0
    %1183 = vmatpush1.xpose.msra.mxu0 0.0
    %1184 = vmatprep.subr.mxu0 0.0
    %1185 = vmatpush1.xpose.msra.mxu0 0.0
    %1186 = vmatprep.subr.mxu0 0.0
    %1187 = vmatpush1.xpose.msra.mxu0 0.0
    %1188 = vmatprep.subr.mxu0 0.0
    %1189 = vmatpush1.xpose.msra.mxu0 0.0
    %1190 = vmatprep.subr.mxu0 0.0
    %1191 = vmatpush1.xpose.msra.mxu0 0.0
    %1192 = vmatprep.subr.mxu0 0.0
    %1193 = vmatpush1.xpose.msra.mxu0 0.0
    %1194 = vmatprep.subr.mxu0 0.0
    %1195 = vmatpush1.xpose.msra.mxu0 0.0
    %1196 = vmatprep.subr.mxu0 0.0
    %1197 = vmatpush1.xpose.msra.mxu0 %v1164
    %1198 = vmatprep.subr.mxu0 0.0
    %1199 = vmatpush2.xpose.msra.mxu0 0.0
    %1200 = vmatprep.subr.mxu0 0.0
    %1201 = vmatpush2.xpose.msra.mxu0 0.0
    %1202 = vmatprep.subr.mxu0 0.0
    %1203 = vmatpush2.xpose.msra.mxu0 0.0
    %1204 = vmatprep.subr.mxu0 0.0
    %1205 = vmatpush2.xpose.msra.mxu0 0.0
    %1206 = vmatprep.subr.mxu0 0.0
    %1207 = vmatpush2.xpose.msra.mxu0 0.0
    %1208 = vmatprep.subr.mxu0 0.0
    %1209 = vmatpush2.xpose.msra.mxu0 0.0
    %1210 = vmatprep.subr.mxu0 0.0
    %1211 = vmatpush2.xpose.msra.mxu0 0.0
    %1212 = vmatprep.subr.mxu0 0.0
    %1213 = vmatpush2.xpose.msra.mxu0 0.0
    %1214 = vmatprep.subr.mxu0 0.0
    %1215 = vmatpush2.xpose.msra.mxu0 0.0
    %1216 = vmatprep.subr.mxu0 0.0
    %1217 = vmatpush2.xpose.msra.mxu0 0.0
    %1218 = vmatprep.subr.mxu0 0.0
    %1219 = vmatpush2.xpose.msra.mxu0 0.0
    %1220 = vmatprep.subr.mxu0 0.0
    %1221 = vmatpush2.xpose.msra.mxu0 0.0
    %1222 = vmatprep.subr.mxu0 0.0
    %1223 = vmatpush2.xpose.msra.mxu0 0.0
    %1224 = vmatprep.subr.mxu0 0.0
    %1225 = vmatpush2.xpose.msra.mxu0 0.0
    %1226 = vmatprep.subr.mxu0 0.0
    %1227 = vmatpush2.xpose.msra.mxu0 0.0
    %1228 = vmatprep.subr.mxu0 0.0
    %1229 = vmatpush2.xpose.msra.mxu0 0.0
    %1230 = vmatprep.mubr.f32.mxu0 0.0
    %1231 = vmatmul.mubr.f32.gmra.mxu0 %v1162
    %v1232 = vpop.f32.mrf.mxu0
    %v1233 = vadd.f32 0.0, %v1232
    %v1234 = vpop.f32.mrf.mxu0
    %1235 = vdwg.mxu0
    %v1236 = vmul.f32 %v1155, 0.35355338
    %v1237 = vmul.f32 %v1233, 0.35355338
    %v1238 = vadd.f32 %v1236, %v401
    %v1239 = vadd.f32 %v1237, %v405
    %v1240 = vsel %vm242, %v1238, -inf
    %1241 = vmax.xlane.f32.xlu0 %v1240
    %v1242 = vpop.xlane.xlu0 %1241
    %v1243 = vsel %vm242, %v1239, -inf
    %1244 = vmax.xlane.f32.xlu0 %v1243
    %v1245 = vpop.xlane.xlu0 %1244
    %v1246 = vsub.f32 %v1238, %v1242
    %v1247 = vsub.f32 %v1239, %v1245
    %v1248 = vmul.f32 %v1246, 1.442695
    %v1249 = vpow.pop %v1248
    %v1250 = vmul.f32 %v1247, 1.442695
    %v1251 = vpow.pop %v1250
    %v1252 = vsel %vm242, %v1249, 0.0
    %1253 = vadd.xlane.f32.xlu0 %v1252
    %v1254 = vpop.xlane.xlu0 %1253
    %v1255 = vsel %vm242, %v1251, 0.0
    %1256 = vadd.xlane.f32.xlu0 %v1255
    %v1257 = vpop.xlane.xlu0 %1256
    %v1258 = vrcp.pop %v1254
    %v1259 = vrcp.pop %v1257
    %v1260 = vmul.f32 %v1249, %v1258
    %v1261 = vmul.f32 %v1251, %v1259
    %1262 = vrot.lane.b32.xlu0 %v227, 48
    %v1263 = vpop.permute.xlu0 %1262
    %v1266 = vsel %vm242, %v1260, 0
    %1268 = vmatprep.subr.mxu0 0.0
    %1269 = vmatpush1.msra.mxu0 0.0
    %1270 = vmatprep.subr.mxu0 0.0
    %1271 = vmatpush1.msra.mxu0 0.0
    %1272 = vmatprep.subr.mxu0 0.0
    %1273 = vmatpush1.msra.mxu0 0.0
    %1274 = vmatprep.subr.mxu0 0.0
    %1275 = vmatpush1.msra.mxu0 0.0
    %1276 = vmatprep.subr.mxu0 0.0
    %1277 = vmatpush1.msra.mxu0 0.0
    %1278 = vmatprep.subr.mxu0 0.0
    %1279 = vmatpush1.msra.mxu0 0.0
    %1280 = vmatprep.subr.mxu0 0.0
    %1281 = vmatpush1.msra.mxu0 0.0
    %1282 = vmatprep.subr.mxu0 0.0
    %1283 = vmatpush1.msra.mxu0 0.0
    %1284 = vmatprep.subr.mxu0 0.0
    %1285 = vmatpush1.msra.mxu0 0.0
    %1286 = vmatprep.subr.mxu0 0.0
    %1287 = vmatpush1.msra.mxu0 0.0
    %1288 = vmatprep.subr.mxu0 0.0
    %1289 = vmatpush1.msra.mxu0 0.0
    %1290 = vmatprep.subr.mxu0 0.0
    %1291 = vmatpush1.msra.mxu0 0.0
    %1292 = vmatprep.subr.mxu0 0.0
    %1293 = vmatpush1.msra.mxu0 0.0
    %1294 = vmatprep.subr.mxu0 0.0
    %1295 = vmatpush1.msra.mxu0 0.0
    %1296 = vmatprep.subr.mxu0 0.0
    %1297 = vmatpush1.msra.mxu0 0.0
    %1298 = vmatprep.subr.mxu0 0.0
    %1299 = vmatpush1.msra.mxu0 %v1263
    %1300 = vmatprep.subr.mxu0 0.0
    %1301 = vmatpush2.msra.mxu0 0.0
    %1302 = vmatprep.subr.mxu0 0.0
    %1303 = vmatpush2.msra.mxu0 0.0
    %1304 = vmatprep.subr.mxu0 0.0
    %1305 = vmatpush2.msra.mxu0 0.0
    %1306 = vmatprep.subr.mxu0 0.0
    %1307 = vmatpush2.msra.mxu0 0.0
    %1308 = vmatprep.subr.mxu0 0.0
    %1309 = vmatpush2.msra.mxu0 0.0
    %1310 = vmatprep.subr.mxu0 0.0
    %1311 = vmatpush2.msra.mxu0 0.0
    %1312 = vmatprep.subr.mxu0 0.0
    %1313 = vmatpush2.msra.mxu0 0.0
    %1314 = vmatprep.subr.mxu0 0.0
    %1315 = vmatpush2.msra.mxu0 0.0
    %1316 = vmatprep.subr.mxu0 0.0
    %1317 = vmatpush2.msra.mxu0 0.0
    %1318 = vmatprep.subr.mxu0 0.0
    %1319 = vmatpush2.msra.mxu0 0.0
    %1320 = vmatprep.subr.mxu0 0.0
    %1321 = vmatpush2.msra.mxu0 0.0
    %1322 = vmatprep.subr.mxu0 0.0
    %1323 = vmatpush2.msra.mxu0 0.0
    %1324 = vmatprep.subr.mxu0 0.0
    %1325 = vmatpush2.msra.mxu0 0.0
    %1326 = vmatprep.subr.mxu0 0.0
    %1327 = vmatpush2.msra.mxu0 0.0
    %1328 = vmatprep.subr.mxu0 0.0
    %1329 = vmatpush2.msra.mxu0 0.0
    %1330 = vmatprep.subr.mxu0 0.0
    %1331 = vmatpush2.msra.mxu0 0.0
    %1332 = vmatprep.mubr.f32.mxu0 0.0
    %1333 = vmatmul.mubr.f32.gmra.mxu0 %v1266
    %v1334 = vpop.f32.mrf.mxu0
    %v1335 = vadd.f32 0.0, %v1334
    %v1336 = vpop.f32.mrf.mxu0
    %1337 = vdwg.mxu0
    %1338 = vrot.lane.b32.xlu0 %v232, 48
    %v1339 = vpop.permute.xlu0 %1338
    %v1342 = vsel %vm242, %v1261, 0
    %1344 = vmatprep.subr.mxu0 0.0
    %1345 = vmatpush1.msra.mxu0 0.0
    %1346 = vmatprep.subr.mxu0 0.0
    %1347 = vmatpush1.msra.mxu0 0.0
    %1348 = vmatprep.subr.mxu0 0.0
    %1349 = vmatpush1.msra.mxu0 0.0
    %1350 = vmatprep.subr.mxu0 0.0
    %1351 = vmatpush1.msra.mxu0 0.0
    %1352 = vmatprep.subr.mxu0 0.0
    %1353 = vmatpush1.msra.mxu0 0.0
    %1354 = vmatprep.subr.mxu0 0.0
    %1355 = vmatpush1.msra.mxu0 0.0
    %1356 = vmatprep.subr.mxu0 0.0
    %1357 = vmatpush1.msra.mxu0 0.0
    %1358 = vmatprep.subr.mxu0 0.0
    %1359 = vmatpush1.msra.mxu0 0.0
    %1360 = vmatprep.subr.mxu0 0.0
    %1361 = vmatpush1.msra.mxu0 0.0
    %1362 = vmatprep.subr.mxu0 0.0
    %1363 = vmatpush1.msra.mxu0 0.0
    %1364 = vmatprep.subr.mxu0 0.0
    %1365 = vmatpush1.msra.mxu0 0.0
    %1366 = vmatprep.subr.mxu0 0.0
    %1367 = vmatpush1.msra.mxu0 0.0
    %1368 = vmatprep.subr.mxu0 0.0
    %1369 = vmatpush1.msra.mxu0 0.0
    %1370 = vmatprep.subr.mxu0 0.0
    %1371 = vmatpush1.msra.mxu0 0.0
    %1372 = vmatprep.subr.mxu0 0.0
    %1373 = vmatpush1.msra.mxu0 0.0
    %1374 = vmatprep.subr.mxu0 0.0
    %1375 = vmatpush1.msra.mxu0 %v1339
    %1376 = vmatprep.subr.mxu0 0.0
    %1377 = vmatpush2.msra.mxu0 0.0
    %1378 = vmatprep.subr.mxu0 0.0
    %1379 = vmatpush2.msra.mxu0 0.0
    %1380 = vmatprep.subr.mxu0 0.0
    %1381 = vmatpush2.msra.mxu0 0.0
    %1382 = vmatprep.subr.mxu0 0.0
    %1383 = vmatpush2.msra.mxu0 0.0
    %1384 = vmatprep.subr.mxu0 0.0
    %1385 = vmatpush2.msra.mxu0 0.0
    %1386 = vmatprep.subr.mxu0 0.0
    %1387 = vmatpush2.msra.mxu0 0.0
    %1388 = vmatprep.subr.mxu0 0.0
    %1389 = vmatpush2.msra.mxu0 0.0
    %1390 = vmatprep.subr.mxu0 0.0
    %1391 = vmatpush2.msra.mxu0 0.0
    %1392 = vmatprep.subr.mxu0 0.0
    %1393 = vmatpush2.msra.mxu0 0.0
    %1394 = vmatprep.subr.mxu0 0.0
    %1395 = vmatpush2.msra.mxu0 0.0
    %1396 = vmatprep.subr.mxu0 0.0
    %1397 = vmatpush2.msra.mxu0 0.0
    %1398 = vmatprep.subr.mxu0 0.0
    %1399 = vmatpush2.msra.mxu0 0.0
    %1400 = vmatprep.subr.mxu0 0.0
    %1401 = vmatpush2.msra.mxu0 0.0
    %1402 = vmatprep.subr.mxu0 0.0
    %1403 = vmatpush2.msra.mxu0 0.0
    %1404 = vmatprep.subr.mxu0 0.0
    %1405 = vmatpush2.msra.mxu0 0.0
    %1406 = vmatprep.subr.mxu0 0.0
    %1407 = vmatpush2.msra.mxu0 0.0
    %1408 = vmatprep.mubr.f32.mxu0 0.0
    %1409 = vmatmul.mubr.f32.gmra.mxu0 %v1342
    %v1410 = vpop.f32.mrf.mxu0
    %v1411 = vadd.f32 0.0, %v1410
    %v1412 = vpop.f32.mrf.mxu0
    %1413 = vdwg.mxu0
    %v1415 = vsel %vm242, %v1335, 0
    %v1418 = vsel %vm242, %v1411, 0
    %1420 = vmatprep.subr.mxu0 0.0
    %1421 = vmatpush1.msra.mxu0 0.0
    %1422 = vmatprep.subr.mxu0 0.0
    %1423 = vmatpush1.msra.mxu0 0.0
    %1424 = vmatprep.subr.mxu0 0.0
    %1425 = vmatpush1.msra.mxu0 0.0
    %1426 = vmatprep.subr.mxu0 0.0
    %1427 = vmatpush1.msra.mxu0 0.0
    %1428 = vmatprep.subr.mxu0 0.0
    %1429 = vmatpush1.msra.mxu0 0.0
    %1430 = vmatprep.subr.mxu0 0.0
    %1431 = vmatpush1.msra.mxu0 0.0
    %1432 = vmatprep.subr.mxu0 0.0
    %1433 = vmatpush1.msra.mxu0 0.0
    %1434 = vmatprep.subr.mxu0 0.0
    %1435 = vmatpush1.msra.mxu0 0.0
    %1436 = vmatprep.subr.mxu0 0.0
    %1437 = vmatpush1.msra.mxu0 0.0
    %1438 = vmatprep.subr.mxu0 0.0
    %1439 = vmatpush1.msra.mxu0 0.0
    %1440 = vmatprep.subr.mxu0 0.0
    %1441 = vmatpush1.msra.mxu0 0.0
    %1442 = vmatprep.subr.mxu0 0.0
    %1443 = vmatpush1.msra.mxu0 0.0
    %1444 = vmatprep.subr.mxu0 0.0
    %1445 = vmatpush1.msra.mxu0 0.0
    %1446 = vmatprep.subr.mxu0 0.0
    %1447 = vmatpush1.msra.mxu0 0.0
    %1448 = vmatprep.subr.mxu0 0.0
    %1449 = vmatpush1.msra.mxu0 0.0
    %1450 = vmatprep.subr.mxu0 0.0
    %1451 = vmatpush1.msra.mxu0 %v237
    %1452 = vmatprep.subr.mxu0 0.0
    %1453 = vmatpush2.msra.mxu0 0.0
    %1454 = vmatprep.subr.mxu0 0.0
    %1455 = vmatpush2.msra.mxu0 0.0
    %1456 = vmatprep.subr.mxu0 0.0
    %1457 = vmatpush2.msra.mxu0 0.0
    %1458 = vmatprep.subr.mxu0 0.0
    %1459 = vmatpush2.msra.mxu0 0.0
    %1460 = vmatprep.subr.mxu0 0.0
    %1461 = vmatpush2.msra.mxu0 0.0
    %1462 = vmatprep.subr.mxu0 0.0
    %1463 = vmatpush2.msra.mxu0 0.0
    %1464 = vmatprep.subr.mxu0 0.0
    %1465 = vmatpush2.msra.mxu0 0.0
    %1466 = vmatprep.subr.mxu0 0.0
    %1467 = vmatpush2.msra.mxu0 0.0
    %1468 = vmatprep.subr.mxu0 0.0
    %1469 = vmatpush2.msra.mxu0 0.0
    %1470 = vmatprep.subr.mxu0 0.0
    %1471 = vmatpush2.msra.mxu0 0.0
    %1472 = vmatprep.subr.mxu0 0.0
    %1473 = vmatpush2.msra.mxu0 0.0
    %1474 = vmatprep.subr.mxu0 0.0
    %1475 = vmatpush2.msra.mxu0 0.0
    %1476 = vmatprep.subr.mxu0 0.0
    %1477 = vmatpush2.msra.mxu0 0.0
    %1478 = vmatprep.subr.mxu0 0.0
    %1479 = vmatpush2.msra.mxu0 0.0
    %1480 = vmatprep.subr.mxu0 0.0
    %1481 = vmatpush2.msra.mxu0 0.0
    %1482 = vmatprep.subr.mxu0 0.0
    %1483 = vmatpush2.msra.mxu0 0.0
    %1484 = vmatprep.mubr.f32.mxu0 0.0
    %1485 = vmatmul.mubr.f32.gmra.mxu0 %v1415
    %v1486 = vpop.f32.mrf.mxu0
    %v1487 = vadd.f32 0.0, %v1486
    %v1488 = vpop.f32.mrf.mxu0
    %1489 = vmatprep.mubr.f32.mxu0 0.0
    %1490 = vmatmul.mubr.f32.gmra.mxu0 %v1418
    %v1491 = vpop.f32.mrf.mxu0
    %v1492 = vadd.f32 0.0, %v1491
    %v1493 = vpop.f32.mrf.mxu0
    %1494 = vdwg.mxu0
    %v1495 = vadd.f32 %v1072, %v1487
    %v1496 = vadd.f32 %v1077, %v1492
    %1497 = vrot.lane.b32.xlu0 %v227, 104
    %v1498 = vpop.permute.xlu0 %1497
    %1499 = vrot.lane.b32.xlu0 %v227, 72
    %v1500 = vpop.permute.xlu0 %1499
    %v1501 = vsel %vm242, %v1498, 0
    %v1503 = vsel %vm242, %v1500, 0
    %1505 = vmatprep.subr.mxu0 0.0
    %1506 = vmatpush1.xpose.msra.mxu0 0.0
    %1507 = vmatprep.subr.mxu0 0.0
    %1508 = vmatpush1.xpose.msra.mxu0 0.0
    %1509 = vmatprep.subr.mxu0 0.0
    %1510 = vmatpush1.xpose.msra.mxu0 0.0
    %1511 = vmatprep.subr.mxu0 0.0
    %1512 = vmatpush1.xpose.msra.mxu0 0.0
    %1513 = vmatprep.subr.mxu0 0.0
    %1514 = vmatpush1.xpose.msra.mxu0 0.0
    %1515 = vmatprep.subr.mxu0 0.0
    %1516 = vmatpush1.xpose.msra.mxu0 0.0
    %1517 = vmatprep.subr.mxu0 0.0
    %1518 = vmatpush1.xpose.msra.mxu0 0.0
    %1519 = vmatprep.subr.mxu0 0.0
    %1520 = vmatpush1.xpose.msra.mxu0 0.0
    %1521 = vmatprep.subr.mxu0 0.0
    %1522 = vmatpush1.xpose.msra.mxu0 0.0
    %1523 = vmatprep.subr.mxu0 0.0
    %1524 = vmatpush1.xpose.msra.mxu0 0.0
    %1525 = vmatprep.subr.mxu0 0.0
    %1526 = vmatpush1.xpose.msra.mxu0 0.0
    %1527 = vmatprep.subr.mxu0 0.0
    %1528 = vmatpush1.xpose.msra.mxu0 0.0
    %1529 = vmatprep.subr.mxu0 0.0
    %1530 = vmatpush1.xpose.msra.mxu0 0.0
    %1531 = vmatprep.subr.mxu0 0.0
    %1532 = vmatpush1.xpose.msra.mxu0 0.0
    %1533 = vmatprep.subr.mxu0 0.0
    %1534 = vmatpush1.xpose.msra.mxu0 0.0
    %1535 = vmatprep.subr.mxu0 0.0
    %1536 = vmatpush1.xpose.msra.mxu0 %v1503
    %1537 = vmatprep.subr.mxu0 0.0
    %1538 = vmatpush2.xpose.msra.mxu0 0.0
    %1539 = vmatprep.subr.mxu0 0.0
    %1540 = vmatpush2.xpose.msra.mxu0 0.0
    %1541 = vmatprep.subr.mxu0 0.0
    %1542 = vmatpush2.xpose.msra.mxu0 0.0
    %1543 = vmatprep.subr.mxu0 0.0
    %1544 = vmatpush2.xpose.msra.mxu0 0.0
    %1545 = vmatprep.subr.mxu0 0.0
    %1546 = vmatpush2.xpose.msra.mxu0 0.0
    %1547 = vmatprep.subr.mxu0 0.0
    %1548 = vmatpush2.xpose.msra.mxu0 0.0
    %1549 = vmatprep.subr.mxu0 0.0
    %1550 = vmatpush2.xpose.msra.mxu0 0.0
    %1551 = vmatprep.subr.mxu0 0.0
    %1552 = vmatpush2.xpose.msra.mxu0 0.0
    %1553 = vmatprep.subr.mxu0 0.0
    %1554 = vmatpush2.xpose.msra.mxu0 0.0
    %1555 = vmatprep.subr.mxu0 0.0
    %1556 = vmatpush2.xpose.msra.mxu0 0.0
    %1557 = vmatprep.subr.mxu0 0.0
    %1558 = vmatpush2.xpose.msra.mxu0 0.0
    %1559 = vmatprep.subr.mxu0 0.0
    %1560 = vmatpush2.xpose.msra.mxu0 0.0
    %1561 = vmatprep.subr.mxu0 0.0
    %1562 = vmatpush2.xpose.msra.mxu0 0.0
    %1563 = vmatprep.subr.mxu0 0.0
    %1564 = vmatpush2.xpose.msra.mxu0 0.0
    %1565 = vmatprep.subr.mxu0 0.0
    %1566 = vmatpush2.xpose.msra.mxu0 0.0
    %1567 = vmatprep.subr.mxu0 0.0
    %1568 = vmatpush2.xpose.msra.mxu0 0.0
    %1569 = vmatprep.mubr.f32.mxu0 0.0
    %1570 = vmatmul.mubr.f32.gmra.mxu0 %v1501
    %v1571 = vpop.f32.mrf.mxu0
    %v1572 = vadd.f32 0.0, %v1571
    %v1573 = vpop.f32.mrf.mxu0
    %1574 = vdwg.mxu0
    %1575 = vrot.lane.b32.xlu0 %v232, 104
    %v1576 = vpop.permute.xlu0 %1575
    %1577 = vrot.lane.b32.xlu0 %v232, 72
    %v1578 = vpop.permute.xlu0 %1577
    %v1579 = vsel %vm242, %v1576, 0
    %v1581 = vsel %vm242, %v1578, 0
    %1583 = vmatprep.subr.mxu0 0.0
    %1584 = vmatpush1.xpose.msra.mxu0 0.0
    %1585 = vmatprep.subr.mxu0 0.0
    %1586 = vmatpush1.xpose.msra.mxu0 0.0
    %1587 = vmatprep.subr.mxu0 0.0
    %1588 = vmatpush1.xpose.msra.mxu0 0.0
    %1589 = vmatprep.subr.mxu0 0.0
    %1590 = vmatpush1.xpose.msra.mxu0 0.0
    %1591 = vmatprep.subr.mxu0 0.0
    %1592 = vmatpush1.xpose.msra.mxu0 0.0
    %1593 = vmatprep.subr.mxu0 0.0
    %1594 = vmatpush1.xpose.msra.mxu0 0.0
    %1595 = vmatprep.subr.mxu0 0.0
    %1596 = vmatpush1.xpose.msra.mxu0 0.0
    %1597 = vmatprep.subr.mxu0 0.0
    %1598 = vmatpush1.xpose.msra.mxu0 0.0
    %1599 = vmatprep.subr.mxu0 0.0
    %1600 = vmatpush1.xpose.msra.mxu0 0.0
    %1601 = vmatprep.subr.mxu0 0.0
    %1602 = vmatpush1.xpose.msra.mxu0 0.0
    %1603 = vmatprep.subr.mxu0 0.0
    %1604 = vmatpush1.xpose.msra.mxu0 0.0
    %1605 = vmatprep.subr.mxu0 0.0
    %1606 = vmatpush1.xpose.msra.mxu0 0.0
    %1607 = vmatprep.subr.mxu0 0.0
    %1608 = vmatpush1.xpose.msra.mxu0 0.0
    %1609 = vmatprep.subr.mxu0 0.0
    %1610 = vmatpush1.xpose.msra.mxu0 0.0
    %1611 = vmatprep.subr.mxu0 0.0
    %1612 = vmatpush1.xpose.msra.mxu0 0.0
    %1613 = vmatprep.subr.mxu0 0.0
    %1614 = vmatpush1.xpose.msra.mxu0 %v1581
    %1615 = vmatprep.subr.mxu0 0.0
    %1616 = vmatpush2.xpose.msra.mxu0 0.0
    %1617 = vmatprep.subr.mxu0 0.0
    %1618 = vmatpush2.xpose.msra.mxu0 0.0
    %1619 = vmatprep.subr.mxu0 0.0
    %1620 = vmatpush2.xpose.msra.mxu0 0.0
    %1621 = vmatprep.subr.mxu0 0.0
    %1622 = vmatpush2.xpose.msra.mxu0 0.0
    %1623 = vmatprep.subr.mxu0 0.0
    %1624 = vmatpush2.xpose.msra.mxu0 0.0
    %1625 = vmatprep.subr.mxu0 0.0
    %1626 = vmatpush2.xpose.msra.mxu0 0.0
    %1627 = vmatprep.subr.mxu0 0.0
    %1628 = vmatpush2.xpose.msra.mxu0 0.0
    %1629 = vmatprep.subr.mxu0 0.0
    %1630 = vmatpush2.xpose.msra.mxu0 0.0
    %1631 = vmatprep.subr.mxu0 0.0
    %1632 = vmatpush2.xpose.msra.mxu0 0.0
    %1633 = vmatprep.subr.mxu0 0.0
    %1634 = vmatpush2.xpose.msra.mxu0 0.0
    %1635 = vmatprep.subr.mxu0 0.0
    %1636 = vmatpush2.xpose.msra.mxu0 0.0
    %1637 = vmatprep.subr.mxu0 0.0
    %1638 = vmatpush2.xpose.msra.mxu0 0.0
    %1639 = vmatprep.subr.mxu0 0.0
    %1640 = vmatpush2.xpose.msra.mxu0 0.0
    %1641 = vmatprep.subr.mxu0 0.0
    %1642 = vmatpush2.xpose.msra.mxu0 0.0
    %1643 = vmatprep.subr.mxu0 0.0
    %1644 = vmatpush2.xpose.msra.mxu0 0.0
    %1645 = vmatprep.subr.mxu0 0.0
    %1646 = vmatpush2.xpose.msra.mxu0 0.0
    %1647 = vmatprep.mubr.f32.mxu0 0.0
    %1648 = vmatmul.mubr.f32.gmra.mxu0 %v1579
    %v1649 = vpop.f32.mrf.mxu0
    %v1650 = vadd.f32 0.0, %v1649
    %v1651 = vpop.f32.mrf.mxu0
    %1652 = vdwg.mxu0
    %v1653 = vmul.f32 %v1572, 0.35355338
    %v1654 = vmul.f32 %v1650, 0.35355338
    %v1655 = vadd.f32 %v1653, %v401
    %v1656 = vadd.f32 %v1654, %v405
    %v1657 = vsel %vm242, %v1655, -inf
    %1658 = vmax.xlane.f32.xlu0 %v1657
    %v1659 = vpop.xlane.xlu0 %1658
    %v1660 = vsel %vm242, %v1656, -inf
    %1661 = vmax.xlane.f32.xlu0 %v1660
    %v1662 = vpop.xlane.xlu0 %1661
    %v1663 = vsub.f32 %v1655, %v1659
    %v1664 = vsub.f32 %v1656, %v1662
    %v1665 = vmul.f32 %v1663, 1.442695
    %v1666 = vpow.pop %v1665
    %v1667 = vmul.f32 %v1664, 1.442695
    %v1668 = vpow.pop %v1667
    %v1669 = vsel %vm242, %v1666, 0.0
    %1670 = vadd.xlane.f32.xlu0 %v1669
    %v1671 = vpop.xlane.xlu0 %1670
    %v1672 = vsel %vm242, %v1668, 0.0
    %1673 = vadd.xlane.f32.xlu0 %v1672
    %v1674 = vpop.xlane.xlu0 %1673
    %v1675 = vrcp.pop %v1671
    %v1676 = vrcp.pop %v1674
    %v1677 = vmul.f32 %v1666, %v1675
    %v1678 = vmul.f32 %v1668, %v1676
    %1679 = vrot.lane.b32.xlu0 %v227, 40
    %v1680 = vpop.permute.xlu0 %1679
    %v1683 = vsel %vm242, %v1677, 0
    %1685 = vmatprep.subr.mxu0 0.0
    %1686 = vmatpush1.msra.mxu0 0.0
    %1687 = vmatprep.subr.mxu0 0.0
    %1688 = vmatpush1.msra.mxu0 0.0
    %1689 = vmatprep.subr.mxu0 0.0
    %1690 = vmatpush1.msra.mxu0 0.0
    %1691 = vmatprep.subr.mxu0 0.0
    %1692 = vmatpush1.msra.mxu0 0.0
    %1693 = vmatprep.subr.mxu0 0.0
    %1694 = vmatpush1.msra.mxu0 0.0
    %1695 = vmatprep.subr.mxu0 0.0
    %1696 = vmatpush1.msra.mxu0 0.0
    %1697 = vmatprep.subr.mxu0 0.0
    %1698 = vmatpush1.msra.mxu0 0.0
    %1699 = vmatprep.subr.mxu0 0.0
    %1700 = vmatpush1.msra.mxu0 0.0
    %1701 = vmatprep.subr.mxu0 0.0
    %1702 = vmatpush1.msra.mxu0 0.0
    %1703 = vmatprep.subr.mxu0 0.0
    %1704 = vmatpush1.msra.mxu0 0.0
    %1705 = vmatprep.subr.mxu0 0.0
    %1706 = vmatpush1.msra.mxu0 0.0
    %1707 = vmatprep.subr.mxu0 0.0
    %1708 = vmatpush1.msra.mxu0 0.0
    %1709 = vmatprep.subr.mxu0 0.0
    %1710 = vmatpush1.msra.mxu0 0.0
    %1711 = vmatprep.subr.mxu0 0.0
    %1712 = vmatpush1.msra.mxu0 0.0
    %1713 = vmatprep.subr.mxu0 0.0
    %1714 = vmatpush1.msra.mxu0 0.0
    %1715 = vmatprep.subr.mxu0 0.0
    %1716 = vmatpush1.msra.mxu0 %v1680
    %1717 = vmatprep.subr.mxu0 0.0
    %1718 = vmatpush2.msra.mxu0 0.0
    %1719 = vmatprep.subr.mxu0 0.0
    %1720 = vmatpush2.msra.mxu0 0.0
    %1721 = vmatprep.subr.mxu0 0.0
    %1722 = vmatpush2.msra.mxu0 0.0
    %1723 = vmatprep.subr.mxu0 0.0
    %1724 = vmatpush2.msra.mxu0 0.0
    %1725 = vmatprep.subr.mxu0 0.0
    %1726 = vmatpush2.msra.mxu0 0.0
    %1727 = vmatprep.subr.mxu0 0.0
    %1728 = vmatpush2.msra.mxu0 0.0
    %1729 = vmatprep.subr.mxu0 0.0
    %1730 = vmatpush2.msra.mxu0 0.0
    %1731 = vmatprep.subr.mxu0 0.0
    %1732 = vmatpush2.msra.mxu0 0.0
    %1733 = vmatprep.subr.mxu0 0.0
    %1734 = vmatpush2.msra.mxu0 0.0
    %1735 = vmatprep.subr.mxu0 0.0
    %1736 = vmatpush2.msra.mxu0 0.0
    %1737 = vmatprep.subr.mxu0 0.0
    %1738 = vmatpush2.msra.mxu0 0.0
    %1739 = vmatprep.subr.mxu0 0.0
    %1740 = vmatpush2.msra.mxu0 0.0
    %1741 = vmatprep.subr.mxu0 0.0
    %1742 = vmatpush2.msra.mxu0 0.0
    %1743 = vmatprep.subr.mxu0 0.0
    %1744 = vmatpush2.msra.mxu0 0.0
    %1745 = vmatprep.subr.mxu0 0.0
    %1746 = vmatpush2.msra.mxu0 0.0
    %1747 = vmatprep.subr.mxu0 0.0
    %1748 = vmatpush2.msra.mxu0 0.0
    %1749 = vmatprep.mubr.f32.mxu0 0.0
    %1750 = vmatmul.mubr.f32.gmra.mxu0 %v1683
    %v1751 = vpop.f32.mrf.mxu0
    %v1752 = vadd.f32 0.0, %v1751
    %v1753 = vpop.f32.mrf.mxu0
    %1754 = vdwg.mxu0
    %1755 = vrot.lane.b32.xlu0 %v232, 40
    %v1756 = vpop.permute.xlu0 %1755
    %v1759 = vsel %vm242, %v1678, 0
    %1761 = vmatprep.subr.mxu0 0.0
    %1762 = vmatpush1.msra.mxu0 0.0
    %1763 = vmatprep.subr.mxu0 0.0
    %1764 = vmatpush1.msra.mxu0 0.0
    %1765 = vmatprep.subr.mxu0 0.0
    %1766 = vmatpush1.msra.mxu0 0.0
    %1767 = vmatprep.subr.mxu0 0.0
    %1768 = vmatpush1.msra.mxu0 0.0
    %1769 = vmatprep.subr.mxu0 0.0
    %1770 = vmatpush1.msra.mxu0 0.0
    %1771 = vmatprep.subr.mxu0 0.0
    %1772 = vmatpush1.msra.mxu0 0.0
    %1773 = vmatprep.subr.mxu0 0.0
    %1774 = vmatpush1.msra.mxu0 0.0
    %1775 = vmatprep.subr.mxu0 0.0
    %1776 = vmatpush1.msra.mxu0 0.0
    %1777 = vmatprep.subr.mxu0 0.0
    %1778 = vmatpush1.msra.mxu0 0.0
    %1779 = vmatprep.subr.mxu0 0.0
    %1780 = vmatpush1.msra.mxu0 0.0
    %1781 = vmatprep.subr.mxu0 0.0
    %1782 = vmatpush1.msra.mxu0 0.0
    %1783 = vmatprep.subr.mxu0 0.0
    %1784 = vmatpush1.msra.mxu0 0.0
    %1785 = vmatprep.subr.mxu0 0.0
    %1786 = vmatpush1.msra.mxu0 0.0
    %1787 = vmatprep.subr.mxu0 0.0
    %1788 = vmatpush1.msra.mxu0 0.0
    %1789 = vmatprep.subr.mxu0 0.0
    %1790 = vmatpush1.msra.mxu0 0.0
    %1791 = vmatprep.subr.mxu0 0.0
    %1792 = vmatpush1.msra.mxu0 %v1756
    %1793 = vmatprep.subr.mxu0 0.0
    %1794 = vmatpush2.msra.mxu0 0.0
    %1795 = vmatprep.subr.mxu0 0.0
    %1796 = vmatpush2.msra.mxu0 0.0
    %1797 = vmatprep.subr.mxu0 0.0
    %1798 = vmatpush2.msra.mxu0 0.0
    %1799 = vmatprep.subr.mxu0 0.0
    %1800 = vmatpush2.msra.mxu0 0.0
    %1801 = vmatprep.subr.mxu0 0.0
    %1802 = vmatpush2.msra.mxu0 0.0
    %1803 = vmatprep.subr.mxu0 0.0
    %1804 = vmatpush2.msra.mxu0 0.0
    %1805 = vmatprep.subr.mxu0 0.0
    %1806 = vmatpush2.msra.mxu0 0.0
    %1807 = vmatprep.subr.mxu0 0.0
    %1808 = vmatpush2.msra.mxu0 0.0
    %1809 = vmatprep.subr.mxu0 0.0
    %1810 = vmatpush2.msra.mxu0 0.0
    %1811 = vmatprep.subr.mxu0 0.0
    %1812 = vmatpush2.msra.mxu0 0.0
    %1813 = vmatprep.subr.mxu0 0.0
    %1814 = vmatpush2.msra.mxu0 0.0
    %1815 = vmatprep.subr.mxu0 0.0
    %1816 = vmatpush2.msra.mxu0 0.0
    %1817 = vmatprep.subr.mxu0 0.0
    %1818 = vmatpush2.msra.mxu0 0.0
    %1819 = vmatprep.subr.mxu0 0.0
    %1820 = vmatpush2.msra.mxu0 0.0
    %1821 = vmatprep.subr.mxu0 0.0
    %1822 = vmatpush2.msra.mxu0 0.0
    %1823 = vmatprep.subr.mxu0 0.0
    %1824 = vmatpush2.msra.mxu0 0.0
    %1825 = vmatprep.mubr.f32.mxu0 0.0
    %1826 = vmatmul.mubr.f32.gmra.mxu0 %v1759
    %v1827 = vpop.f32.mrf.mxu0
    %v1828 = vadd.f32 0.0, %v1827
    %v1829 = vpop.f32.mrf.mxu0
    %1830 = vdwg.mxu0
    %v1832 = vsel %vm242, %v1752, 0
    %v1835 = vsel %vm242, %v1828, 0
    %1837 = vmatprep.subr.mxu0 0.0
    %1838 = vmatpush1.msra.mxu0 0.0
    %1839 = vmatprep.subr.mxu0 0.0
    %1840 = vmatpush1.msra.mxu0 0.0
    %1841 = vmatprep.subr.mxu0 0.0
    %1842 = vmatpush1.msra.mxu0 0.0
    %1843 = vmatprep.subr.mxu0 0.0
    %1844 = vmatpush1.msra.mxu0 0.0
    %1845 = vmatprep.subr.mxu0 0.0
    %1846 = vmatpush1.msra.mxu0 0.0
    %1847 = vmatprep.subr.mxu0 0.0
    %1848 = vmatpush1.msra.mxu0 0.0
    %1849 = vmatprep.subr.mxu0 0.0
    %1850 = vmatpush1.msra.mxu0 0.0
    %1851 = vmatprep.subr.mxu0 0.0
    %1852 = vmatpush1.msra.mxu0 0.0
    %1853 = vmatprep.subr.mxu0 0.0
    %1854 = vmatpush1.msra.mxu0 0.0
    %1855 = vmatprep.subr.mxu0 0.0
    %1856 = vmatpush1.msra.mxu0 0.0
    %1857 = vmatprep.subr.mxu0 0.0
    %1858 = vmatpush1.msra.mxu0 0.0
    %1859 = vmatprep.subr.mxu0 0.0
    %1860 = vmatpush1.msra.mxu0 0.0
    %1861 = vmatprep.subr.mxu0 0.0
    %1862 = vmatpush1.msra.mxu0 0.0
    %1863 = vmatprep.subr.mxu0 0.0
    %1864 = vmatpush1.msra.mxu0 0.0
    %1865 = vmatprep.subr.mxu0 0.0
    %1866 = vmatpush1.msra.mxu0 0.0
    %1867 = vmatprep.subr.mxu0 0.0
    %1868 = vmatpush1.msra.mxu0 %v238
    %1869 = vmatprep.subr.mxu0 0.0
    %1870 = vmatpush2.msra.mxu0 0.0
    %1871 = vmatprep.subr.mxu0 0.0
    %1872 = vmatpush2.msra.mxu0 0.0
    %1873 = vmatprep.subr.mxu0 0.0
    %1874 = vmatpush2.msra.mxu0 0.0
    %1875 = vmatprep.subr.mxu0 0.0
    %1876 = vmatpush2.msra.mxu0 0.0
    %1877 = vmatprep.subr.mxu0 0.0
    %1878 = vmatpush2.msra.mxu0 0.0
    %1879 = vmatprep.subr.mxu0 0.0
    %1880 = vmatpush2.msra.mxu0 0.0
    %1881 = vmatprep.subr.mxu0 0.0
    %1882 = vmatpush2.msra.mxu0 0.0
    %1883 = vmatprep.subr.mxu0 0.0
    %1884 = vmatpush2.msra.mxu0 0.0
    %1885 = vmatprep.subr.mxu0 0.0
    %1886 = vmatpush2.msra.mxu0 0.0
    %1887 = vmatprep.subr.mxu0 0.0
    %1888 = vmatpush2.msra.mxu0 0.0
    %1889 = vmatprep.subr.mxu0 0.0
    %1890 = vmatpush2.msra.mxu0 0.0
    %1891 = vmatprep.subr.mxu0 0.0
    %1892 = vmatpush2.msra.mxu0 0.0
    %1893 = vmatprep.subr.mxu0 0.0
    %1894 = vmatpush2.msra.mxu0 0.0
    %1895 = vmatprep.subr.mxu0 0.0
    %1896 = vmatpush2.msra.mxu0 0.0
    %1897 = vmatprep.subr.mxu0 0.0
    %1898 = vmatpush2.msra.mxu0 0.0
    %1899 = vmatprep.subr.mxu0 0.0
    %1900 = vmatpush2.msra.mxu0 0.0
    %1901 = vmatprep.mubr.f32.mxu0 0.0
    %1902 = vmatmul.mubr.f32.gmra.mxu0 %v1832
    %v1903 = vpop.f32.mrf.mxu0
    %v1904 = vadd.f32 0.0, %v1903
    %v1905 = vpop.f32.mrf.mxu0
    %1906 = vmatprep.mubr.f32.mxu0 0.0
    %1907 = vmatmul.mubr.f32.gmra.mxu0 %v1835
    %v1908 = vpop.f32.mrf.mxu0
    %v1909 = vadd.f32 0.0, %v1908
    %v1910 = vpop.f32.mrf.mxu0
    %1911 = vdwg.mxu0
    %v1912 = vadd.f32 %v1495, %v1904
    %v1913 = vadd.f32 %v1496, %v1909
    %v1914 = vld [vmem:[%s7] sm:$0x1]
    %v1916 = vlaneseq
    %v1917 = vshrl.u32 %v1916, 7
    %v1918 = vsub.s32 0, %v1917
    %v1919 = vrot.slane %v1914, %v1918
    %v1921 = vadd.f32 %v1912, %v1919
    %v1922 = vadd.f32 %v1913, %v1919
    %v1923 = vadd.f32 %v112, %v1921
    %v1924 = vadd.f32 %v113, %v1922
    %v1925 = vld [vmem:[%s8] sm:$0x1]
    %v1926 = vld [vmem:[%s9] sm:$0x1]
    %v1927 = vsel %vm70, %v1923, 0.0
    %1928 = vadd.xlane.f32.xlu0 %v1927
    %v1929 = vpop.xlane.xlu0 %1928
    %v1930 = vsel %vm70, %v1924, 0.0
    %1931 = vadd.xlane.f32.xlu0 %v1930
    %v1932 = vpop.xlane.xlu0 %1931
    %v1933 = vmul.f32 %v1929, %v77
    %v1934 = vmul.f32 %v1932, %v77
    %v1935 = vsub.f32 %v1923, %v1933
    %v1936 = vsub.f32 %v1924, %v1934
    %v1937 = vmul.f32 %v1935, %v1935
    %v1938 = vmul.f32 %v1936, %v1936
    %v1939 = vsel %vm70, %v1937, 0.0
    %1940 = vadd.xlane.f32.xlu0 %v1939
    %v1941 = vpop.xlane.xlu0 %1940
    %v1942 = vsel %vm70, %v1938, 0.0
    %1943 = vadd.xlane.f32.xlu0 %v1942
    %v1944 = vpop.xlane.xlu0 %1943
    %v1945 = vmul.f32 %v1941, %v77
    %v1946 = vmul.f32 %v1944, %v77
    %v1947 = vadd.f32 %v1945, 1e-12
    %v1948 = vadd.f32 %v1946, 1e-12
    %v1949 = vrsqrt.pop %v1947
    %v1950 = vrsqrt.pop %v1948
    %v1951 = vmul.f32 %v1935, %v1949
    %v1952 = vmul.f32 %v1936, %v1950
    %v1954 = vlaneseq
    %v1955 = vshrl.u32 %v1954, 7
    %v1956 = vsub.s32 0, %v1955
    %v1957 = vrot.slane %v1925, %v1956
    %v1959 = vmul.f32 %v1951, %v1957
    %v1960 = vmul.f32 %v1952, %v1957
    %v1962 = vlaneseq
    %v1963 = vshrl.u32 %v1962, 7
    %v1964 = vsub.s32 0, %v1963
    %v1965 = vrot.slane %v1926, %v1964
    %v1967 = vadd.f32 %v1959, %v1965
    %v1968 = vadd.f32 %v1960, %v1965
    %v1969 = vld [vmem:[%s10] sm:$0xff]
    %v1970 = vld [vmem:[%s10 + $0x8] sm:$0xff]
    %v1971 = vld [vmem:[%s10 + $0x10] sm:$0xff]
    %v1972 = vld [vmem:[%s10 + $0x18] sm:$0xff]
    %v1973 = vld [vmem:[%s11] sm:$0x1]
    %v1975 = vlaneseq
    %v1976 = vshrl.u32 %v1975, 7
    %v1977 = vsub.s32 0, %v1976
    %v1978 = vrot.slane %v1973, %v1977
    %v1981 = vsel %vm70, %v1967, 0
    %v1984 = vsel %vm70, %v1968, 0
    %1986 = vmatprep.subr.mxu0 0.0
    %1987 = vmatpush1.msra.mxu0 0.0
    %1988 = vmatprep.subr.mxu0 0.0
    %1989 = vmatpush1.msra.mxu0 0.0
    %1990 = vmatprep.subr.mxu0 0.0
    %1991 = vmatpush1.msra.mxu0 0.0
    %1992 = vmatprep.subr.mxu0 0.0
    %1993 = vmatpush1.msra.mxu0 0.0
    %1994 = vmatprep.subr.mxu0 0.0
    %1995 = vmatpush1.msra.mxu0 0.0
    %1996 = vmatprep.subr.mxu0 0.0
    %1997 = vmatpush1.msra.mxu0 0.0
    %1998 = vmatprep.subr.mxu0 0.0
    %1999 = vmatpush1.msra.mxu0 0.0
    %2000 = vmatprep.subr.mxu0 0.0
    %2001 = vmatpush1.msra.mxu0 0.0
    %2002 = vmatprep.subr.mxu0 0.0
    %2003 = vmatpush1.msra.mxu0 0.0
    %2004 = vmatprep.subr.mxu0 0.0
    %2005 = vmatpush1.msra.mxu0 0.0
    %2006 = vmatprep.subr.mxu0 0.0
    %2007 = vmatpush1.msra.mxu0 0.0
    %2008 = vmatprep.subr.mxu0 0.0
    %2009 = vmatpush1.msra.mxu0 0.0
    %2010 = vmatprep.subr.mxu0 0.0
    %2011 = vmatpush1.msra.mxu0 %v1972
    %2012 = vmatprep.subr.mxu0 0.0
    %2013 = vmatpush1.msra.mxu0 %v1971
    %2014 = vmatprep.subr.mxu0 0.0
    %2015 = vmatpush1.msra.mxu0 %v1970
    %2016 = vmatprep.subr.mxu0 0.0
    %2017 = vmatpush1.msra.mxu0 %v1969
    %2018 = vmatprep.subr.mxu0 0.0
    %2019 = vmatpush2.msra.mxu0 0.0
    %2020 = vmatprep.subr.mxu0 0.0
    %2021 = vmatpush2.msra.mxu0 0.0
    %2022 = vmatprep.subr.mxu0 0.0
    %2023 = vmatpush2.msra.mxu0 0.0
    %2024 = vmatprep.subr.mxu0 0.0
    %2025 = vmatpush2.msra.mxu0 0.0
    %2026 = vmatprep.subr.mxu0 0.0
    %2027 = vmatpush2.msra.mxu0 0.0
    %2028 = vmatprep.subr.mxu0 0.0
    %2029 = vmatpush2.msra.mxu0 0.0
    %2030 = vmatprep.subr.mxu0 0.0
    %2031 = vmatpush2.msra.mxu0 0.0
    %2032 = vmatprep.subr.mxu0 0.0
    %2033 = vmatpush2.msra.mxu0 0.0
    %2034 = vmatprep.subr.mxu0 0.0
    %2035 = vmatpush2.msra.mxu0 0.0
    %2036 = vmatprep.subr.mxu0 0.0
    %2037 = vmatpush2.msra.mxu0 0.0
    %2038 = vmatprep.subr.mxu0 0.0
    %2039 = vmatpush2.msra.mxu0 0.0
    %2040 = vmatprep.subr.mxu0 0.0
    %2041 = vmatpush2.msra.mxu0 0.0
    %2042 = vmatprep.subr.mxu0 0.0
    %2043 = vmatpush2.msra.mxu0 0.0
    %2044 = vmatprep.subr.mxu0 0.0
    %2045 = vmatpush2.msra.mxu0 0.0
    %2046 = vmatprep.subr.mxu0 0.0
    %2047 = vmatpush2.msra.mxu0 0.0
    %2048 = vmatprep.subr.mxu0 0.0
    %2049 = vmatpush2.msra.mxu0 0.0
    %2050 = vmatprep.mubr.f32.mxu0 0.0
    %2051 = vmatmul.mubr.f32.gmra.mxu0 %v1981
    %v2052 = vpop.f32.mrf.mxu0
    %v2053 = vadd.f32 %v1978, %v2052
    %v2054 = vpop.f32.mrf.mxu0
    %2055 = vmatprep.mubr.f32.mxu0 0.0
    %2056 = vmatmul.mubr.f32.gmra.mxu0 %v1984
    %v2057 = vpop.f32.mrf.mxu0
    %v2058 = vadd.f32 %v1978, %v2057
    %v2059 = vpop.f32.mrf.mxu0
    %2060 = vdwg.mxu0
    %v2061 = vmul.f32 %v2053, %v2053
    %v2062 = vmul.f32 %v2058, %v2058
    %v2063 = vmul.f32 %v2053, %v2061
    %v2064 = vmul.f32 %v2058, %v2062
    %v2065 = vmul.f32 %v2063, 0.044715
    %v2066 = vmul.f32 %v2064, 0.044715
    %v2067 = vadd.f32 %v2053, %v2065
    %v2068 = vadd.f32 %v2058, %v2066
    %v2069 = vmul.f32 %v2067, 0.7978846
    %v2070 = vmul.f32 %v2068, 0.7978846
    %v2071 = vtanh.pop %v2069
    %v2072 = vtanh.pop %v2070
    %v2073 = vadd.f32 %v2071, 1.0
    %v2074 = vadd.f32 %v2072, 1.0
    %v2075 = vmul.f32 %v2073, 0.5
    %v2076 = vmul.f32 %v2074, 0.5
    %v2077 = vmul.f32 %v2053, %v2075
    %v2078 = vmul.f32 %v2058, %v2076
    %v2079 = vld [vmem:[%s12] sm:$0xff]
    %v2080 = vld [vmem:[%s12 + $0x8] sm:$0xff]
    %v2081 = vld [vmem:[%s12 + $0x10] sm:$0xff]
    %v2082 = vld [vmem:[%s12 + $0x18] sm:$0xff]
    %v2083 = vld [vmem:[%s12 + $0x20] sm:$0xff]
    %v2084 = vld [vmem:[%s12 + $0x28] sm:$0xff]
    %v2085 = vld [vmem:[%s12 + $0x30] sm:$0xff]
    %v2086 = vld [vmem:[%s12 + $0x38] sm:$0xff]
    %v2087 = vld [vmem:[%s13] sm:$0x1]
    %v2089 = vlaneseq
    %v2090 = vshrl.u32 %v2089, 7
    %v2091 = vsub.s32 0, %v2090
    %v2092 = vrot.slane %v2087, %v2091
    %vm2094 = vcmask 523264
    %v2096 = vsel %vm2094, %v2077, 0
    %v2099 = vsel %vm2094, %v2078, 0
    %2101 = vmatprep.subr.mxu0 0.0
    %2102 = vmatpush1.msra.mxu0 0.0
    %2103 = vmatprep.subr.mxu0 0.0
    %2104 = vmatpush1.msra.mxu0 0.0
    %2105 = vmatprep.subr.mxu0 0.0
    %2106 = vmatpush1.msra.mxu0 0.0
    %2107 = vmatprep.subr.mxu0 0.0
    %2108 = vmatpush1.msra.mxu0 0.0
    %2109 = vmatprep.subr.mxu0 0.0
    %2110 = vmatpush1.msra.mxu0 0.0
    %2111 = vmatprep.subr.mxu0 0.0
    %2112 = vmatpush1.msra.mxu0 0.0
    %2113 = vmatprep.subr.mxu0 0.0
    %2114 = vmatpush1.msra.mxu0 0.0
    %2115 = vmatprep.subr.mxu0 0.0
    %2116 = vmatpush1.msra.mxu0 0.0
    %2117 = vmatprep.subr.mxu0 0.0
    %2118 = vmatpush1.msra.mxu0 %v2086
    %2119 = vmatprep.subr.mxu0 0.0
    %2120 = vmatpush1.msra.mxu0 %v2085
    %2121 = vmatprep.subr.mxu0 0.0
    %2122 = vmatpush1.msra.mxu0 %v2084
    %2123 = vmatprep.subr.mxu0 0.0
    %2124 = vmatpush1.msra.mxu0 %v2083
    %2125 = vmatprep.subr.mxu0 0.0
    %2126 = vmatpush1.msra.mxu0 %v2082
    %2127 = vmatprep.subr.mxu0 0.0
    %2128 = vmatpush1.msra.mxu0 %v2081
    %2129 = vmatprep.subr.mxu0 0.0
    %2130 = vmatpush1.msra.mxu0 %v2080
    %2131 = vmatprep.subr.mxu0 0.0
    %2132 = vmatpush1.msra.mxu0 %v2079
    %2133 = vmatprep.subr.mxu0 0.0
    %2134 = vmatpush2.msra.mxu0 0.0
    %2135 = vmatprep.subr.mxu0 0.0
    %2136 = vmatpush2.msra.mxu0 0.0
    %2137 = vmatprep.subr.mxu0 0.0
    %2138 = vmatpush2.msra.mxu0 0.0
    %2139 = vmatprep.subr.mxu0 0.0
    %2140 = vmatpush2.msra.mxu0 0.0
    %2141 = vmatprep.subr.mxu0 0.0
    %2142 = vmatpush2.msra.mxu0 0.0
    %2143 = vmatprep.subr.mxu0 0.0
    %2144 = vmatpush2.msra.mxu0 0.0
    %2145 = vmatprep.subr.mxu0 0.0
    %2146 = vmatpush2.msra.mxu0 0.0
    %2147 = vmatprep.subr.mxu0 0.0
    %2148 = vmatpush2.msra.mxu0 0.0
    %2149 = vmatprep.subr.mxu0 0.0
    %2150 = vmatpush2.msra.mxu0 0.0
    %2151 = vmatprep.subr.mxu0 0.0
    %2152 = vmatpush2.msra.mxu0 0.0
    %2153 = vmatprep.subr.mxu0 0.0
    %2154 = vmatpush2.msra.mxu0 0.0
    %2155 = vmatprep.subr.mxu0 0.0
    %2156 = vmatpush2.msra.mxu0 0.0
    %2157 = vmatprep.subr.mxu0 0.0
    %2158 = vmatpush2.msra.mxu0 0.0
    %2159 = vmatprep.subr.mxu0 0.0
    %2160 = vmatpush2.msra.mxu0 0.0
    %2161 = vmatprep.subr.mxu0 0.0
    %2162 = vmatpush2.msra.mxu0 0.0
    %2163 = vmatprep.subr.mxu0 0.0
    %2164 = vmatpush2.msra.mxu0 0.0
    %2165 = vmatprep.mubr.f32.mxu0 0.0
    %2166 = vmatmul.mubr.f32.gmra.mxu0 %v2096
    %v2167 = vpop.f32.mrf.mxu0
    %v2168 = vadd.f32 %v2092, %v2167
    %v2169 = vpop.f32.mrf.mxu0
    %2170 = vmatprep.mubr.f32.mxu0 0.0
    %2171 = vmatmul.mubr.f32.gmra.mxu0 %v2099
    %v2172 = vpop.f32.mrf.mxu0
    %v2173 = vadd.f32 %v2092, %v2172
    %v2174 = vpop.f32.mrf.mxu0
    %2175 = vdwg.mxu0
    %v2176 = vadd.f32 %v1967, %v2168
    %v2177 = vadd.f32 %v1968, %v2173
    %v2178 = vld [vmem:[%s14] sm:$0x1]
    %v2179 = vld [vmem:[%s15] sm:$0x1]
    %v2180 = vsel %vm70, %v2176, 0.0
    %2181 = vadd.xlane.f32.xlu0 %v2180
    %v2182 = vpop.xlane.xlu0 %2181
    %v2183 = vsel %vm70, %v2177, 0.0
    %2184 = vadd.xlane.f32.xlu0 %v2183
    %v2185 = vpop.xlane.xlu0 %2184
    %v2186 = vmul.f32 %v2182, %v77
    %v2187 = vmul.f32 %v2185, %v77
    %v2188 = vsub.f32 %v2176, %v2186
    %v2189 = vsub.f32 %v2177, %v2187
    %v2190 = vmul.f32 %v2188, %v2188
    %v2191 = vmul.f32 %v2189, %v2189
    %v2192 = vsel %vm70, %v2190, 0.0
    %2193 = vadd.xlane.f32.xlu0 %v2192
    %v2194 = vpop.xlane.xlu0 %2193
    %v2195 = vsel %vm70, %v2191, 0.0
    %2196 = vadd.xlane.f32.xlu0 %v2195
    %v2197 = vpop.xlane.xlu0 %2196
    %v2198 = vmul.f32 %v2194, %v77
    %v2199 = vmul.f32 %v2197, %v77
    %v2200 = vadd.f32 %v2198, 1e-12
    %v2201 = vadd.f32 %v2199, 1e-12
    %v2202 = vrsqrt.pop %v2200
    %v2203 = vrsqrt.pop %v2201
    %v2204 = vmul.f32 %v2188, %v2202
    %v2205 = vmul.f32 %v2189, %v2203
    %v2207 = vlaneseq
    %v2208 = vshrl.u32 %v2207, 7
    %v2209 = vsub.s32 0, %v2208
    %v2210 = vrot.slane %v2178, %v2209
    %v2212 = vmul.f32 %v2204, %v2210
    %v2213 = vmul.f32 %v2205, %v2210
    %v2215 = vlaneseq
    %v2216 = vshrl.u32 %v2215, 7
    %v2217 = vsub.s32 0, %v2216
    %v2218 = vrot.slane %v2179, %v2217
    %v2220 = vadd.f32 %v2212, %v2218
    %v2221 = vadd.f32 %v2213, %v2218
    %s2222 = scalar_lea.vmem %s4, 32
    %v2223 = vld [vmem:[%s2222] sm:$0xff]
    %v2224 = vld [vmem:[%s2222 + $0x8] sm:$0xff]
    %v2225 = vld [vmem:[%s2222 + $0x10] sm:$0xff]
    %v2226 = vld [vmem:[%s2222 + $0x18] sm:$0xff]
    %s2227 = scalar_lea.vmem %s5, 1
    %v2228 = vld [vmem:[%s2227] sm:$0x1]
    %v2230 = vlaneseq
    %v2231 = vshrl.u32 %v2230, 7
    %v2232 = vsub.s32 0, %v2231
    %v2233 = vrot.slane %v2228, %v2232
    %v2236 = vsel %vm70, %v2220, 0
    %v2239 = vsel %vm70, %v2221, 0
    %2241 = vmatprep.subr.mxu0 0.0
    %2242 = vmatpush1.msra.mxu0 0.0
    %2243 = vmatprep.subr.mxu0 0.0
    %2244 = vmatpush1.msra.mxu0 0.0
    %2245 = vmatprep.subr.mxu0 0.0
    %2246 = vmatpush1.msra.mxu0 0.0
    %2247 = vmatprep.subr.mxu0 0.0
    %2248 = vmatpush1.msra.mxu0 0.0
    %2249 = vmatprep.subr.mxu0 0.0
    %2250 = vmatpush1.msra.mxu0 0.0
    %2251 = vmatprep.subr.mxu0 0.0
    %2252 = vmatpush1.msra.mxu0 0.0
    %2253 = vmatprep.subr.mxu0 0.0
    %2254 = vmatpush1.msra.mxu0 0.0
    %2255 = vmatprep.subr.mxu0 0.0
    %2256 = vmatpush1.msra.mxu0 0.0
    %2257 = vmatprep.subr.mxu0 0.0
    %2258 = vmatpush1.msra.mxu0 0.0
    %2259 = vmatprep.subr.mxu0 0.0
    %2260 = vmatpush1.msra.mxu0 0.0
    %2261 = vmatprep.subr.mxu0 0.0
    %2262 = vmatpush1.msra.mxu0 0.0
    %2263 = vmatprep.subr.mxu0 0.0
    %2264 = vmatpush1.msra.mxu0 0.0
    %2265 = vmatprep.subr.mxu0 0.0
    %2266 = vmatpush1.msra.mxu0 %v2226
    %2267 = vmatprep.subr.mxu0 0.0
    %2268 = vmatpush1.msra.mxu0 %v2225
    %2269 = vmatprep.subr.mxu0 0.0
    %2270 = vmatpush1.msra.mxu0 %v2224
    %2271 = vmatprep.subr.mxu0 0.0
    %2272 = vmatpush1.msra.mxu0 %v2223
    %2273 = vmatprep.subr.mxu0 0.0
    %2274 = vmatpush2.msra.mxu0 0.0
    %2275 = vmatprep.subr.mxu0 0.0
    %2276 = vmatpush2.msra.mxu0 0.0
    %2277 = vmatprep.subr.mxu0 0.0
    %2278 = vmatpush2.msra.mxu0 0.0
    %2279 = vmatprep.subr.mxu0 0.0
    %2280 = vmatpush2.msra.mxu0 0.0
    %2281 = vmatprep.subr.mxu0 0.0
    %2282 = vmatpush2.msra.mxu0 0.0
    %2283 = vmatprep.subr.mxu0 0.0
    %2284 = vmatpush2.msra.mxu0 0.0
    %2285 = vmatprep.subr.mxu0 0.0
    %2286 = vmatpush2.msra.mxu0 0.0
    %2287 = vmatprep.subr.mxu0 0.0
    %2288 = vmatpush2.msra.mxu0 0.0
    %2289 = vmatprep.subr.mxu0 0.0
    %2290 = vmatpush2.msra.mxu0 0.0
    %2291 = vmatprep.subr.mxu0 0.0
    %2292 = vmatpush2.msra.mxu0 0.0
    %2293 = vmatprep.subr.mxu0 0.0
    %2294 = vmatpush2.msra.mxu0 0.0
    %2295 = vmatprep.subr.mxu0 0.0
    %2296 = vmatpush2.msra.mxu0 0.0
    %2297 = vmatprep.subr.mxu0 0.0
    %2298 = vmatpush2.msra.mxu0 0.0
    %2299 = vmatprep.subr.mxu0 0.0
    %2300 = vmatpush2.msra.mxu0 0.0
    %2301 = vmatprep.subr.mxu0 0.0
    %2302 = vmatpush2.msra.mxu0 0.0
    %2303 = vmatprep.subr.mxu0 0.0
    %2304 = vmatpush2.msra.mxu0 0.0
    %2305 = vmatprep.mubr.f32.mxu0 0.0
    %2306 = vmatmul.mubr.f32.gmra.mxu0 %v2236
    %v2307 = vpop.f32.mrf.mxu0
    %v2308 = vadd.f32 %v2233, %v2307
    %v2309 = vpop.f32.mrf.mxu0
    %2310 = vmatprep.mubr.f32.mxu0 0.0
    %2311 = vmatmul.mubr.f32.gmra.mxu0 %v2239
    %v2312 = vpop.f32.mrf.mxu0
    %v2313 = vadd.f32 %v2233, %v2312
    %v2314 = vpop.f32.mrf.mxu0
    %2315 = vdwg.mxu0
    %s2316 = scalar_lea.vmem %s6, 32
    %v2317 = vld [vmem:[%s2316] sm:$0xff]
    %v2318 = vld [vmem:[%s2316 + $0x8] sm:$0xff]
    %v2319 = vld [vmem:[%s2316 + $0x10] sm:$0xff]
    %v2320 = vld [vmem:[%s2316 + $0x18] sm:$0xff]
    %2322 = vrot.lane.b32.xlu0 %v2308, 96
    %v2323 = vpop.permute.xlu0 %2322
    %v2324 = vsel %vm242, %v2308, 0
    %v2326 = vsel %vm242, %v2323, 0
    %2328 = vmatprep.subr.mxu0 0.0
    %2329 = vmatpush1.xpose.msra.mxu0 0.0
    %2330 = vmatprep.subr.mxu0 0.0
    %2331 = vmatpush1.xpose.msra.mxu0 0.0
    %2332 = vmatprep.subr.mxu0 0.0
    %2333 = vmatpush1.xpose.msra.mxu0 0.0
    %2334 = vmatprep.subr.mxu0 0.0
    %2335 = vmatpush1.xpose.msra.mxu0 0.0
    %2336 = vmatprep.subr.mxu0 0.0
    %2337 = vmatpush1.xpose.msra.mxu0 0.0
    %2338 = vmatprep.subr.mxu0 0.0
    %2339 = vmatpush1.xpose.msra.mxu0 0.0
    %2340 = vmatprep.subr.mxu0 0.0
    %2341 = vmatpush1.xpose.msra.mxu0 0.0
    %2342 = vmatprep.subr.mxu0 0.0
    %2343 = vmatpush1.xpose.msra.mxu0 0.0
    %2344 = vmatprep.subr.mxu0 0.0
    %2345 = vmatpush1.xpose.msra.mxu0 0.0
    %2346 = vmatprep.subr.mxu0 0.0
    %2347 = vmatpush1.xpose.msra.mxu0 0.0
    %2348 = vmatprep.subr.mxu0 0.0
    %2349 = vmatpush1.xpose.msra.mxu0 0.0
    %2350 = vmatprep.subr.mxu0 0.0
    %2351 = vmatpush1.xpose.msra.mxu0 0.0
    %2352 = vmatprep.subr.mxu0 0.0
    %2353 = vmatpush1.xpose.msra.mxu0 0.0
    %2354 = vmatprep.subr.mxu0 0.0
    %2355 = vmatpush1.xpose.msra.mxu0 0.0
    %2356 = vmatprep.subr.mxu0 0.0
    %2357 = vmatpush1.xpose.msra.mxu0 0.0
    %2358 = vmatprep.subr.mxu0 0.0
    %2359 = vmatpush1.xpose.msra.mxu0 %v2326
    %2360 = vmatprep.subr.mxu0 0.0
    %2361 = vmatpush2.xpose.msra.mxu0 0.0
    %2362 = vmatprep.subr.mxu0 0.0
    %2363 = vmatpush2.xpose.msra.mxu0 0.0
    %2364 = vmatprep.subr.mxu0 0.0
    %2365 = vmatpush2.xpose.msra.mxu0 0.0
    %2366 = vmatprep.subr.mxu0 0.0
    %2367 = vmatpush2.xpose.msra.mxu0 0.0
    %2368 = vmatprep.subr.mxu0 0.0
    %2369 = vmatpush2.xpose.msra.mxu0 0.0
    %2370 = vmatprep.subr.mxu0 0.0
    %2371 = vmatpush2.xpose.msra.mxu0 0.0
    %2372 = vmatprep.subr.mxu0 0.0
    %2373 = vmatpush2.xpose.msra.mxu0 0.0
    %2374 = vmatprep.subr.mxu0 0.0
    %2375 = vmatpush2.xpose.msra.mxu0 0.0
    %2376 = vmatprep.subr.mxu0 0.0
    %2377 = vmatpush2.xpose.msra.mxu0 0.0
    %2378 = vmatprep.subr.mxu0 0.0
    %2379 = vmatpush2.xpose.msra.mxu0 0.0
    %2380 = vmatprep.subr.mxu0 0.0
    %2381 = vmatpush2.xpose.msra.mxu0 0.0
    %2382 = vmatprep.subr.mxu0 0.0
    %2383 = vmatpush2.xpose.msra.mxu0 0.0
    %2384 = vmatprep.subr.mxu0 0.0
    %2385 = vmatpush2.xpose.msra.mxu0 0.0
    %2386 = vmatprep.subr.mxu0 0.0
    %2387 = vmatpush2.xpose.msra.mxu0 0.0
    %2388 = vmatprep.subr.mxu0 0.0
    %2389 = vmatpush2.xpose.msra.mxu0 0.0
    %2390 = vmatprep.subr.mxu0 0.0
    %2391 = vmatpush2.xpose.msra.mxu0 0.0
    %2392 = vmatprep.mubr.f32.mxu0 0.0
    %2393 = vmatmul.mubr.f32.gmra.mxu0 %v2324
    %v2394 = vpop.f32.mrf.mxu0
    %v2395 = vadd.f32 0.0, %v2394
    %v2396 = vpop.f32.mrf.mxu0
    %2397 = vdwg.mxu0
    %2399 = vrot.lane.b32.xlu0 %v2313, 96
    %v2400 = vpop.permute.xlu0 %2399
    %v2401 = vsel %vm242, %v2313, 0
    %v2403 = vsel %vm242, %v2400, 0
    %2405 = vmatprep.subr.mxu0 0.0
    %2406 = vmatpush1.xpose.msra.mxu0 0.0
    %2407 = vmatprep.subr.mxu0 0.0
    %2408 = vmatpush1.xpose.msra.mxu0 0.0
    %2409 = vmatprep.subr.mxu0 0.0
    %2410 = vmatpush1.xpose.msra.mxu0 0.0
    %2411 = vmatprep.subr.mxu0 0.0
    %2412 = vmatpush1.xpose.msra.mxu0 0.0
    %2413 = vmatprep.subr.mxu0 0.0
    %2414 = vmatpush1.xpose.msra.mxu0 0.0
    %2415 = vmatprep.subr.mxu0 0.0
    %2416 = vmatpush1.xpose.msra.mxu0 0.0
    %2417 = vmatprep.subr.mxu0 0.0
    %2418 = vmatpush1.xpose.msra.mxu0 0.0
    %2419 = vmatprep.subr.mxu0 0.0
    %2420 = vmatpush1.xpose.msra.mxu0 0.0
    %2421 = vmatprep.subr.mxu0 0.0
    %2422 = vmatpush1.xpose.msra.mxu0 0.0
    %2423 = vmatprep.subr.mxu0 0.0
    %2424 = vmatpush1.xpose.msra.mxu0 0.0
    %2425 = vmatprep.subr.mxu0 0.0
    %2426 = vmatpush1.xpose.msra.mxu0 0.0
    %2427 = vmatprep.subr.mxu0 0.0
    %2428 = vmatpush1.xpose.msra.mxu0 0.0
    %2429 = vmatprep.subr.mxu0 0.0
    %2430 = vmatpush1.xpose.msra.mxu0 0.0
    %2431 = vmatprep.subr.mxu0 0.0
    %2432 = vmatpush1.xpose.msra.mxu0 0.0
    %2433 = vmatprep.subr.mxu0 0.0
    %2434 = vmatpush1.xpose.msra.mxu0 0.0
    %2435 = vmatprep.subr.mxu0 0.0
    %2436 = vmatpush1.xpose.msra.mxu0 %v2403
    %2437 = vmatprep.subr.mxu0 0.0
    %2438 = vmatpush2.xpose.msra.mxu0 0.0
    %2439 = vmatprep.subr.mxu0 0.0
    %2440 = vmatpush2.xpose.msra.mxu0 0.0
    %2441 = vmatprep.subr.mxu0 0.0
    %2442 = vmatpush2.xpose.msra.mxu0 0.0
    %2443 = vmatprep.subr.mxu0 0.0
    %2444 = vmatpush2.xpose.msra.mxu0 0.0
    %2445 = vmatprep.subr.mxu0 0.0
    %2446 = vmatpush2.xpose.msra.mxu0 0.0
    %2447 = vmatprep.subr.mxu0 0.0
    %2448 = vmatpush2.xpose.msra.mxu0 0.0
    %2449 = vmatprep.subr.mxu0 0.0
    %2450 = vmatpush2.xpose.msra.mxu0 0.0
    %2451 = vmatprep.subr.mxu0 0.0
    %2452 = vmatpush2.xpose.msra.mxu0 0.0
    %2453 = vmatprep.subr.mxu0 0.0
    %2454 = vmatpush2.xpose.msra.mxu0 0.0
    %2455 = vmatprep.subr.mxu0 0.0
    %2456 = vmatpush2.xpose.msra.mxu0 0.0
    %2457 = vmatprep.subr.mxu0 0.0
    %2458 = vmatpush2.xpose.msra.mxu0 0.0
    %2459 = vmatprep.subr.mxu0 0.0
    %2460 = vmatpush2.xpose.msra.mxu0 0.0
    %2461 = vmatprep.subr.mxu0 0.0
    %2462 = vmatpush2.xpose.msra.mxu0 0.0
    %2463 = vmatprep.subr.mxu0 0.0
    %2464 = vmatpush2.xpose.msra.mxu0 0.0
    %2465 = vmatprep.subr.mxu0 0.0
    %2466 = vmatpush2.xpose.msra.mxu0 0.0
    %2467 = vmatprep.subr.mxu0 0.0
    %2468 = vmatpush2.xpose.msra.mxu0 0.0
    %2469 = vmatprep.mubr.f32.mxu0 0.0
    %2470 = vmatmul.mubr.f32.gmra.mxu0 %v2401
    %v2471 = vpop.f32.mrf.mxu0
    %v2472 = vadd.f32 0.0, %v2471
    %v2473 = vpop.f32.mrf.mxu0
    %2474 = vdwg.mxu0
    %v2475 = vmul.f32 %v2395, 0.35355338
    %v2476 = vmul.f32 %v2472, 0.35355338
    %v2477 = vadd.f32 %v2475, %v401
    %v2478 = vadd.f32 %v2476, %v405
    %v2479 = vsel %vm242, %v2477, -inf
    %2480 = vmax.xlane.f32.xlu0 %v2479
    %v2481 = vpop.xlane.xlu0 %2480
    %v2482 = vsel %vm242, %v2478, -inf
    %2483 = vmax.xlane.f32.xlu0 %v2482
    %v2484 = vpop.xlane.xlu0 %2483
    %v2485 = vsub.f32 %v2477, %v2481
    %v2486 = vsub.f32 %v2478, %v2484
    %v2487 = vmul.f32 %v2485, 1.442695
    %v2488 = vpow.pop %v2487
    %v2489 = vmul.f32 %v2486, 1.442695
    %v2490 = vpow.pop %v2489
    %v2491 = vsel %vm242, %v2488, 0.0
    %2492 = vadd.xlane.f32.xlu0 %v2491
    %v2493 = vpop.xlane.xlu0 %2492
    %v2494 = vsel %vm242, %v2490, 0.0
    %2495 = vadd.xlane.f32.xlu0 %v2494
    %v2496 = vpop.xlane.xlu0 %2495
    %v2497 = vrcp.pop %v2493
    %v2498 = vrcp.pop %v2496
    %v2499 = vmul.f32 %v2488, %v2497
    %v2500 = vmul.f32 %v2490, %v2498
    %2501 = vrot.lane.b32.xlu0 %v2308, 64
    %v2502 = vpop.permute.xlu0 %2501
    %v2505 = vsel %vm242, %v2499, 0
    %2507 = vmatprep.subr.mxu0 0.0
    %2508 = vmatpush1.msra.mxu0 0.0
    %2509 = vmatprep.subr.mxu0 0.0
    %2510 = vmatpush1.msra.mxu0 0.0
    %2511 = vmatprep.subr.mxu0 0.0
    %2512 = vmatpush1.msra.mxu0 0.0
    %2513 = vmatprep.subr.mxu0 0.0
    %2514 = vmatpush1.msra.mxu0 0.0
    %2515 = vmatprep.subr.mxu0 0.0
    %2516 = vmatpush1.msra.mxu0 0.0
    %2517 = vmatprep.subr.mxu0 0.0
    %2518 = vmatpush1.msra.mxu0 0.0
    %2519 = vmatprep.subr.mxu0 0.0
    %2520 = vmatpush1.msra.mxu0 0.0
    %2521 = vmatprep.subr.mxu0 0.0
    %2522 = vmatpush1.msra.mxu0 0.0
    %2523 = vmatprep.subr.mxu0 0.0
    %2524 = vmatpush1.msra.mxu0 0.0
    %2525 = vmatprep.subr.mxu0 0.0
    %2526 = vmatpush1.msra.mxu0 0.0
    %2527 = vmatprep.subr.mxu0 0.0
    %2528 = vmatpush1.msra.mxu0 0.0
    %2529 = vmatprep.subr.mxu0 0.0
    %2530 = vmatpush1.msra.mxu0 0.0
    %2531 = vmatprep.subr.mxu0 0.0
    %2532 = vmatpush1.msra.mxu0 0.0
    %2533 = vmatprep.subr.mxu0 0.0
    %2534 = vmatpush1.msra.mxu0 0.0
    %2535 = vmatprep.subr.mxu0 0.0
    %2536 = vmatpush1.msra.mxu0 0.0
    %2537 = vmatprep.subr.mxu0 0.0
    %2538 = vmatpush1.msra.mxu0 %v2502
    %2539 = vmatprep.subr.mxu0 0.0
    %2540 = vmatpush2.msra.mxu0 0.0
    %2541 = vmatprep.subr.mxu0 0.0
    %2542 = vmatpush2.msra.mxu0 0.0
    %2543 = vmatprep.subr.mxu0 0.0
    %2544 = vmatpush2.msra.mxu0 0.0
    %2545 = vmatprep.subr.mxu0 0.0
    %2546 = vmatpush2.msra.mxu0 0.0
    %2547 = vmatprep.subr.mxu0 0.0
    %2548 = vmatpush2.msra.mxu0 0.0
    %2549 = vmatprep.subr.mxu0 0.0
    %2550 = vmatpush2.msra.mxu0 0.0
    %2551 = vmatprep.subr.mxu0 0.0
    %2552 = vmatpush2.msra.mxu0 0.0
    %2553 = vmatprep.subr.mxu0 0.0
    %2554 = vmatpush2.msra.mxu0 0.0
    %2555 = vmatprep.subr.mxu0 0.0
    %2556 = vmatpush2.msra.mxu0 0.0
    %2557 = vmatprep.subr.mxu0 0.0
    %2558 = vmatpush2.msra.mxu0 0.0
    %2559 = vmatprep.subr.mxu0 0.0
    %2560 = vmatpush2.msra.mxu0 0.0
    %2561 = vmatprep.subr.mxu0 0.0
    %2562 = vmatpush2.msra.mxu0 0.0
    %2563 = vmatprep.subr.mxu0 0.0
    %2564 = vmatpush2.msra.mxu0 0.0
    %2565 = vmatprep.subr.mxu0 0.0
    %2566 = vmatpush2.msra.mxu0 0.0
    %2567 = vmatprep.subr.mxu0 0.0
    %2568 = vmatpush2.msra.mxu0 0.0
    %2569 = vmatprep.subr.mxu0 0.0
    %2570 = vmatpush2.msra.mxu0 0.0
    %2571 = vmatprep.mubr.f32.mxu0 0.0
    %2572 = vmatmul.mubr.f32.gmra.mxu0 %v2505
    %v2573 = vpop.f32.mrf.mxu0
    %v2574 = vadd.f32 0.0, %v2573
    %v2575 = vpop.f32.mrf.mxu0
    %2576 = vdwg.mxu0
    %2577 = vrot.lane.b32.xlu0 %v2313, 64
    %v2578 = vpop.permute.xlu0 %2577
    %v2581 = vsel %vm242, %v2500, 0
    %2583 = vmatprep.subr.mxu0 0.0
    %2584 = vmatpush1.msra.mxu0 0.0
    %2585 = vmatprep.subr.mxu0 0.0
    %2586 = vmatpush1.msra.mxu0 0.0
    %2587 = vmatprep.subr.mxu0 0.0
    %2588 = vmatpush1.msra.mxu0 0.0
    %2589 = vmatprep.subr.mxu0 0.0
    %2590 = vmatpush1.msra.mxu0 0.0
    %2591 = vmatprep.subr.mxu0 0.0
    %2592 = vmatpush1.msra.mxu0 0.0
    %2593 = vmatprep.subr.mxu0 0.0
    %2594 = vmatpush1.msra.mxu0 0.0
    %2595 = vmatprep.subr.mxu0 0.0
    %2596 = vmatpush1.msra.mxu0 0.0
    %2597 = vmatprep.subr.mxu0 0.0
    %2598 = vmatpush1.msra.mxu0 0.0
    %2599 = vmatprep.subr.mxu0 0.0
    %2600 = vmatpush1.msra.mxu0 0.0
    %2601 = vmatprep.subr.mxu0 0.0
    %2602 = vmatpush1.msra.mxu0 0.0
    %2603 = vmatprep.subr.mxu0 0.0
    %2604 = vmatpush1.msra.mxu0 0.0
    %2605 = vmatprep.subr.mxu0 0.0
    %2606 = vmatpush1.msra.mxu0 0.0
    %2607 = vmatprep.subr.mxu0 0.0
    %2608 = vmatpush1.msra.mxu0 0.0
    %2609 = vmatprep.subr.mxu0 0.0
    %2610 = vmatpush1.msra.mxu0 0.0
    %2611 = vmatprep.subr.mxu0 0.0
    %2612 = vmatpush1.msra.mxu0 0.0
    %2613 = vmatprep.subr.mxu0 0.0
    %2614 = vmatpush1.msra.mxu0 %v2578
    %2615 = vmatprep.subr.mxu0 0.0
    %2616 = vmatpush2.msra.mxu0 0.0
    %2617 = vmatprep.subr.mxu0 0.0
    %2618 = vmatpush2.msra.mxu0 0.0
    %2619 = vmatprep.subr.mxu0 0.0
    %2620 = vmatpush2.msra.mxu0 0.0
    %2621 = vmatprep.subr.mxu0 0.0
    %2622 = vmatpush2.msra.mxu0 0.0
    %2623 = vmatprep.subr.mxu0 0.0
    %2624 = vmatpush2.msra.mxu0 0.0
    %2625 = vmatprep.subr.mxu0 0.0
    %2626 = vmatpush2.msra.mxu0 0.0
    %2627 = vmatprep.subr.mxu0 0.0
    %2628 = vmatpush2.msra.mxu0 0.0
    %2629 = vmatprep.subr.mxu0 0.0
    %2630 = vmatpush2.msra.mxu0 0.0
    %2631 = vmatprep.subr.mxu0 0.0
    %2632 = vmatpush2.msra.mxu0 0.0
    %2633 = vmatprep.subr.mxu0 0.0
    %2634 = vmatpush2.msra.mxu0 0.0
    %2635 = vmatprep.subr.mxu0 0.0
    %2636 = vmatpush2.msra.mxu0 0.0
    %2637 = vmatprep.subr.mxu0 0.0
    %2638 = vmatpush2.msra.mxu0 0.0
    %2639 = vmatprep.subr.mxu0 0.0
    %2640 = vmatpush2.msra.mxu0 0.0
    %2641 = vmatprep.subr.mxu0 0.0
    %2642 = vmatpush2.msra.mxu0 0.0
    %2643 = vmatprep.subr.mxu0 0.0
    %2644 = vmatpush2.msra.mxu0 0.0
    %2645 = vmatprep.subr.mxu0 0.0
    %2646 = vmatpush2.msra.mxu0 0.0
    %2647 = vmatprep.mubr.f32.mxu0 0.0
    %2648 = vmatmul.mubr.f32.gmra.mxu0 %v2581
    %v2649 = vpop.f32.mrf.mxu0
    %v2650 = vadd.f32 0.0, %v2649
    %v2651 = vpop.f32.mrf.mxu0
    %2652 = vdwg.mxu0
    %2653 = vrot.lane.b32.xlu0 %v2308, 120
    %v2654 = vpop.permute.xlu0 %2653
    %2655 = vrot.lane.b32.xlu0 %v2308, 88
    %v2656 = vpop.permute.xlu0 %2655
    %v2657 = vsel %vm242, %v2654, 0
    %v2659 = vsel %vm242, %v2656, 0
    %2661 = vmatprep.subr.mxu0 0.0
    %2662 = vmatpush1.xpose.msra.mxu0 0.0
    %2663 = vmatprep.subr.mxu0 0.0
    %2664 = vmatpush1.xpose.msra.mxu0 0.0
    %2665 = vmatprep.subr.mxu0 0.0
    %2666 = vmatpush1.xpose.msra.mxu0 0.0
    %2667 = vmatprep.subr.mxu0 0.0
    %2668 = vmatpush1.xpose.msra.mxu0 0.0
    %2669 = vmatprep.subr.mxu0 0.0
    %2670 = vmatpush1.xpose.msra.mxu0 0.0
    %2671 = vmatprep.subr.mxu0 0.0
    %2672 = vmatpush1.xpose.msra.mxu0 0.0
    %2673 = vmatprep.subr.mxu0 0.0
    %2674 = vmatpush1.xpose.msra.mxu0 0.0
    %2675 = vmatprep.subr.mxu0 0.0
    %2676 = vmatpush1.xpose.msra.mxu0 0.0
    %2677 = vmatprep.subr.mxu0 0.0
    %2678 = vmatpush1.xpose.msra.mxu0 0.0
    %2679 = vmatprep.subr.mxu0 0.0
    %2680 = vmatpush1.xpose.msra.mxu0 0.0
    %2681 = vmatprep.subr.mxu0 0.0
    %2682 = vmatpush1.xpose.msra.mxu0 0.0
    %2683 = vmatprep.subr.mxu0 0.0
    %2684 = vmatpush1.xpose.msra.mxu0 0.0
    %2685 = vmatprep.subr.mxu0 0.0
    %2686 = vmatpush1.xpose.msra.mxu0 0.0
    %2687 = vmatprep.subr.mxu0 0.0
    %2688 = vmatpush1.xpose.msra.mxu0 0.0
    %2689 = vmatprep.subr.mxu0 0.0
    %2690 = vmatpush1.xpose.msra.mxu0 0.0
    %2691 = vmatprep.subr.mxu0 0.0
    %2692 = vmatpush1.xpose.msra.mxu0 %v2659
    %2693 = vmatprep.subr.mxu0 0.0
    %2694 = vmatpush2.xpose.msra.mxu0 0.0
    %2695 = vmatprep.subr.mxu0 0.0
    %2696 = vmatpush2.xpose.msra.mxu0 0.0
    %2697 = vmatprep.subr.mxu0 0.0
    %2698 = vmatpush2.xpose.msra.mxu0 0.0
    %2699 = vmatprep.subr.mxu0 0.0
    %2700 = vmatpush2.xpose.msra.mxu0 0.0
    %2701 = vmatprep.subr.mxu0 0.0
    %2702 = vmatpush2.xpose.msra.mxu0 0.0
    %2703 = vmatprep.subr.mxu0 0.0
    %2704 = vmatpush2.xpose.msra.mxu0 0.0
    %2705 = vmatprep.subr.mxu0 0.0
    %2706 = vmatpush2.xpose.msra.mxu0 0.0
    %2707 = vmatprep.subr.mxu0 0.0
    %2708 = vmatpush2.xpose.msra.mxu0 0.0
    %2709 = vmatprep.subr.mxu0 0.0
    %2710 = vmatpush2.xpose.msra.mxu0 0.0
    %2711 = vmatprep.subr.mxu0 0.0
    %2712 = vmatpush2.xpose.msra.mxu0 0.0
    %2713 = vmatprep.subr.mxu0 0.0
    %2714 = vmatpush2.xpose.msra.mxu0 0.0
    %2715 = vmatprep.subr.mxu0 0.0
    %2716 = vmatpush2.xpose.msra.mxu0 0.0
    %2717 = vmatprep.subr.mxu0 0.0
    %2718 = vmatpush2.xpose.msra.mxu0 0.0
    %2719 = vmatprep.subr.mxu0 0.0
    %2720 = vmatpush2.xpose.msra.mxu0 0.0
    %2721 = vmatprep.subr.mxu0 0.0
    %2722 = vmatpush2.xpose.msra.mxu0 0.0
    %2723 = vmatprep.subr.mxu0 0.0
    %2724 = vmatpush2.xpose.msra.mxu0 0.0
    %2725 = vmatprep.mubr.f32.mxu0 0.0
    %2726 = vmatmul.mubr.f32.gmra.mxu0 %v2657
    %v2727 = vpop.f32.mrf.mxu0
    %v2728 = vadd.f32 0.0, %v2727
    %v2729 = vpop.f32.mrf.mxu0
    %2730 = vdwg.mxu0
    %2731 = vrot.lane.b32.xlu0 %v2313, 120
    %v2732 = vpop.permute.xlu0 %2731
    %2733 = vrot.lane.b32.xlu0 %v2313, 88
    %v2734 = vpop.permute.xlu0 %2733
    %v2735 = vsel %vm242, %v2732, 0
    %v2737 = vsel %vm242, %v2734, 0
    %2739 = vmatprep.subr.mxu0 0.0
    %2740 = vmatpush1.xpose.msra.mxu0 0.0
    %2741 = vmatprep.subr.mxu0 0.0
    %2742 = vmatpush1.xpose.msra.mxu0 0.0
    %2743 = vmatprep.subr.mxu0 0.0
    %2744 = vmatpush1.xpose.msra.mxu0 0.0
    %2745 = vmatprep.subr.mxu0 0.0
    %2746 = vmatpush1.xpose.msra.mxu0 0.0
    %2747 = vmatprep.subr.mxu0 0.0
    %2748 = vmatpush1.xpose.msra.mxu0 0.0
    %2749 = vmatprep.subr.mxu0 0.0
    %2750 = vmatpush1.xpose.msra.mxu0 0.0
    %2751 = vmatprep.subr.mxu0 0.0
    %2752 = vmatpush1.xpose.msra.mxu0 0.0
    %2753 = vmatprep.subr.mxu0 0.0
    %2754 = vmatpush1.xpose.msra.mxu0 0.0
    %2755 = vmatprep.subr.mxu0 0.0
    %2756 = vmatpush1.xpose.msra.mxu0 0.0
    %2757 = vmatprep.subr.mxu0 0.0
    %2758 = vmatpush1.xpose.msra.mxu0 0.0
    %2759 = vmatprep.subr.mxu0 0.0
    %2760 = vmatpush1.xpose.msra.mxu0 0.0
    %2761 = vmatprep.subr.mxu0 0.0
    %2762 = vmatpush1.xpose.msra.mxu0 0.0
    %2763 = vmatprep.subr.mxu0 0.0
    %2764 = vmatpush1.xpose.msra.mxu0 0.0
    %2765 = vmatprep.subr.mxu0 0.0
    %2766 = vmatpush1.xpose.msra.mxu0 0.0
    %2767 = vmatprep.subr.mxu0 0.0
    %2768 = vmatpush1.xpose.msra.mxu0 0.0
    %2769 = vmatprep.subr.mxu0 0.0
    %2770 = vmatpush1.xpose.msra.mxu0 %v2737
    %2771 = vmatprep.subr.mxu0 0.0
    %2772 = vmatpush2.xpose.msra.mxu0 0.0
    %2773 = vmatprep.subr.mxu0 0.0
    %2774 = vmatpush2.xpose.msra.mxu0 0.0
    %2775 = vmatprep.subr.mxu0 0.0
    %2776 = vmatpush2.xpose.msra.mxu0 0.0
    %2777 = vmatprep.subr.mxu0 0.0
    %2778 = vmatpush2.xpose.msra.mxu0 0.0
    %2779 = vmatprep.subr.mxu0 0.0
    %2780 = vmatpush2.xpose.msra.mxu0 0.0
    %2781 = vmatprep.subr.mxu0 0.0
    %2782 = vmatpush2.xpose.msra.mxu0 0.0
    %2783 = vmatprep.subr.mxu0 0.0
    %2784 = vmatpush2.xpose.msra.mxu0 0.0
    %2785 = vmatprep.subr.mxu0 0.0
    %2786 = vmatpush2.xpose.msra.mxu0 0.0
    %2787 = vmatprep.subr.mxu0 0.0
    %2788 = vmatpush2.xpose.msra.mxu0 0.0
    %2789 = vmatprep.subr.mxu0 0.0
    %2790 = vmatpush2.xpose.msra.mxu0 0.0
    %2791 = vmatprep.subr.mxu0 0.0
    %2792 = vmatpush2.xpose.msra.mxu0 0.0
    %2793 = vmatprep.subr.mxu0 0.0
    %2794 = vmatpush2.xpose.msra.mxu0 0.0
    %2795 = vmatprep.subr.mxu0 0.0
    %2796 = vmatpush2.xpose.msra.mxu0 0.0
    %2797 = vmatprep.subr.mxu0 0.0
    %2798 = vmatpush2.xpose.msra.mxu0 0.0
    %2799 = vmatprep.subr.mxu0 0.0
    %2800 = vmatpush2.xpose.msra.mxu0 0.0
    %2801 = vmatprep.subr.mxu0 0.0
    %2802 = vmatpush2.xpose.msra.mxu0 0.0
    %2803 = vmatprep.mubr.f32.mxu0 0.0
    %2804 = vmatmul.mubr.f32.gmra.mxu0 %v2735
    %v2805 = vpop.f32.mrf.mxu0
    %v2806 = vadd.f32 0.0, %v2805
    %v2807 = vpop.f32.mrf.mxu0
    %2808 = vdwg.mxu0
    %v2809 = vmul.f32 %v2728, 0.35355338
    %v2810 = vmul.f32 %v2806, 0.35355338
    %v2811 = vadd.f32 %v2809, %v401
    %v2812 = vadd.f32 %v2810, %v405
    %v2813 = vsel %vm242, %v2811, -inf
    %2814 = vmax.xlane.f32.xlu0 %v2813
    %v2815 = vpop.xlane.xlu0 %2814
    %v2816 = vsel %vm242, %v2812, -inf
    %2817 = vmax.xlane.f32.xlu0 %v2816
    %v2818 = vpop.xlane.xlu0 %2817
    %v2819 = vsub.f32 %v2811, %v2815
    %v2820 = vsub.f32 %v2812, %v2818
    %v2821 = vmul.f32 %v2819, 1.442695
    %v2822 = vpow.pop %v2821
    %v2823 = vmul.f32 %v2820, 1.442695
    %v2824 = vpow.pop %v2823
    %v2825 = vsel %vm242, %v2822, 0.0
    %2826 = vadd.xlane.f32.xlu0 %v2825
    %v2827 = vpop.xlane.xlu0 %2826
    %v2828 = vsel %vm242, %v2824, 0.0
    %2829 = vadd.xlane.f32.xlu0 %v2828
    %v2830 = vpop.xlane.xlu0 %2829
    %v2831 = vrcp.pop %v2827
    %v2832 = vrcp.pop %v2830
    %v2833 = vmul.f32 %v2822, %v2831
    %v2834 = vmul.f32 %v2824, %v2832
    %2835 = vrot.lane.b32.xlu0 %v2308, 56
    %v2836 = vpop.permute.xlu0 %2835
    %v2839 = vsel %vm242, %v2833, 0
    %2841 = vmatprep.subr.mxu0 0.0
    %2842 = vmatpush1.msra.mxu0 0.0
    %2843 = vmatprep.subr.mxu0 0.0
    %2844 = vmatpush1.msra.mxu0 0.0
    %2845 = vmatprep.subr.mxu0 0.0
    %2846 = vmatpush1.msra.mxu0 0.0
    %2847 = vmatprep.subr.mxu0 0.0
    %2848 = vmatpush1.msra.mxu0 0.0
    %2849 = vmatprep.subr.mxu0 0.0
    %2850 = vmatpush1.msra.mxu0 0.0
    %2851 = vmatprep.subr.mxu0 0.0
    %2852 = vmatpush1.msra.mxu0 0.0
    %2853 = vmatprep.subr.mxu0 0.0
    %2854 = vmatpush1.msra.mxu0 0.0
    %2855 = vmatprep.subr.mxu0 0.0
    %2856 = vmatpush1.msra.mxu0 0.0
    %2857 = vmatprep.subr.mxu0 0.0
    %2858 = vmatpush1.msra.mxu0 0.0
    %2859 = vmatprep.subr.mxu0 0.0
    %2860 = vmatpush1.msra.mxu0 0.0
    %2861 = vmatprep.subr.mxu0 0.0
    %2862 = vmatpush1.msra.mxu0 0.0
    %2863 = vmatprep.subr.mxu0 0.0
    %2864 = vmatpush1.msra.mxu0 0.0
    %2865 = vmatprep.subr.mxu0 0.0
    %2866 = vmatpush1.msra.mxu0 0.0
    %2867 = vmatprep.subr.mxu0 0.0
    %2868 = vmatpush1.msra.mxu0 0.0
    %2869 = vmatprep.subr.mxu0 0.0
    %2870 = vmatpush1.msra.mxu0 0.0
    %2871 = vmatprep.subr.mxu0 0.0
    %2872 = vmatpush1.msra.mxu0 %v2836
    %2873 = vmatprep.subr.mxu0 0.0
    %2874 = vmatpush2.msra.mxu0 0.0
    %2875 = vmatprep.subr.mxu0 0.0
    %2876 = vmatpush2.msra.mxu0 0.0
    %2877 = vmatprep.subr.mxu0 0.0
    %2878 = vmatpush2.msra.mxu0 0.0
    %2879 = vmatprep.subr.mxu0 0.0
    %2880 = vmatpush2.msra.mxu0 0.0
    %2881 = vmatprep.subr.mxu0 0.0
    %2882 = vmatpush2.msra.mxu0 0.0
    %2883 = vmatprep.subr.mxu0 0.0
    %2884 = vmatpush2.msra.mxu0 0.0
    %2885 = vmatprep.subr.mxu0 0.0
    %2886 = vmatpush2.msra.mxu0 0.0
    %2887 = vmatprep.subr.mxu0 0.0
    %2888 = vmatpush2.msra.mxu0 0.0
    %2889 = vmatprep.subr.mxu0 0.0
    %2890 = vmatpush2.msra.mxu0 0.0
    %2891 = vmatprep.subr.mxu0 0.0
    %2892 = vmatpush2.msra.mxu0 0.0
    %2893 = vmatprep.subr.mxu0 0.0
    %2894 = vmatpush2.msra.mxu0 0.0
    %2895 = vmatprep.subr.mxu0 0.0
    %2896 = vmatpush2.msra.mxu0 0.0
    %2897 = vmatprep.subr.mxu0 0.0
    %2898 = vmatpush2.msra.mxu0 0.0
    %2899 = vmatprep.subr.mxu0 0.0
    %2900 = vmatpush2.msra.mxu0 0.0
    %2901 = vmatprep.subr.mxu0 0.0
    %2902 = vmatpush2.msra.mxu0 0.0
    %2903 = vmatprep.subr.mxu0 0.0
    %2904 = vmatpush2.msra.mxu0 0.0
    %2905 = vmatprep.mubr.f32.mxu0 0.0
    %2906 = vmatmul.mubr.f32.gmra.mxu0 %v2839
    %v2907 = vpop.f32.mrf.mxu0
    %v2908 = vadd.f32 0.0, %v2907
    %v2909 = vpop.f32.mrf.mxu0
    %2910 = vdwg.mxu0
    %2911 = vrot.lane.b32.xlu0 %v2313, 56
    %v2912 = vpop.permute.xlu0 %2911
    %v2915 = vsel %vm242, %v2834, 0
    %2917 = vmatprep.subr.mxu0 0.0
    %2918 = vmatpush1.msra.mxu0 0.0
    %2919 = vmatprep.subr.mxu0 0.0
    %2920 = vmatpush1.msra.mxu0 0.0
    %2921 = vmatprep.subr.mxu0 0.0
    %2922 = vmatpush1.msra.mxu0 0.0
    %2923 = vmatprep.subr.mxu0 0.0
    %2924 = vmatpush1.msra.mxu0 0.0
    %2925 = vmatprep.subr.mxu0 0.0
    %2926 = vmatpush1.msra.mxu0 0.0
    %2927 = vmatprep.subr.mxu0 0.0
    %2928 = vmatpush1.msra.mxu0 0.0
    %2929 = vmatprep.subr.mxu0 0.0
    %2930 = vmatpush1.msra.mxu0 0.0
    %2931 = vmatprep.subr.mxu0 0.0
    %2932 = vmatpush1.msra.mxu0 0.0
    %2933 = vmatprep.subr.mxu0 0.0
    %2934 = vmatpush1.msra.mxu0 0.0
    %2935 = vmatprep.subr.mxu0 0.0
    %2936 = vmatpush1.msra.mxu0 0.0
    %2937 = vmatprep.subr.mxu0 0.0
    %2938 = vmatpush1.msra.mxu0 0.0
    %2939 = vmatprep.subr.mxu0 0.0
    %2940 = vmatpush1.msra.mxu0 0.0
    %2941 = vmatprep.subr.mxu0 0.0
    %2942 = vmatpush1.msra.mxu0 0.0
    %2943 = vmatprep.subr.mxu0 0.0
    %2944 = vmatpush1.msra.mxu0 0.0
    %2945 = vmatprep.subr.mxu0 0.0
    %2946 = vmatpush1.msra.mxu0 0.0
    %2947 = vmatprep.subr.mxu0 0.0
    %2948 = vmatpush1.msra.mxu0 %v2912
    %2949 = vmatprep.subr.mxu0 0.0
    %2950 = vmatpush2.msra.mxu0 0.0
    %2951 = vmatprep.subr.mxu0 0.0
    %2952 = vmatpush2.msra.mxu0 0.0
    %2953 = vmatprep.subr.mxu0 0.0
    %2954 = vmatpush2.msra.mxu0 0.0
    %2955 = vmatprep.subr.mxu0 0.0
    %2956 = vmatpush2.msra.mxu0 0.0
    %2957 = vmatprep.subr.mxu0 0.0
    %2958 = vmatpush2.msra.mxu0 0.0
    %2959 = vmatprep.subr.mxu0 0.0
    %2960 = vmatpush2.msra.mxu0 0.0
    %2961 = vmatprep.subr.mxu0 0.0
    %2962 = vmatpush2.msra.mxu0 0.0
    %2963 = vmatprep.subr.mxu0 0.0
    %2964 = vmatpush2.msra.mxu0 0.0
    %2965 = vmatprep.subr.mxu0 0.0
    %2966 = vmatpush2.msra.mxu0 0.0
    %2967 = vmatprep.subr.mxu0 0.0
    %2968 = vmatpush2.msra.mxu0 0.0
    %2969 = vmatprep.subr.mxu0 0.0
    %2970 = vmatpush2.msra.mxu0 0.0
    %2971 = vmatprep.subr.mxu0 0.0
    %2972 = vmatpush2.msra.mxu0 0.0
    %2973 = vmatprep.subr.mxu0 0.0
    %2974 = vmatpush2.msra.mxu0 0.0
    %2975 = vmatprep.subr.mxu0 0.0
    %2976 = vmatpush2.msra.mxu0 0.0
    %2977 = vmatprep.subr.mxu0 0.0
    %2978 = vmatpush2.msra.mxu0 0.0
    %2979 = vmatprep.subr.mxu0 0.0
    %2980 = vmatpush2.msra.mxu0 0.0
    %2981 = vmatprep.mubr.f32.mxu0 0.0
    %2982 = vmatmul.mubr.f32.gmra.mxu0 %v2915
    %v2983 = vpop.f32.mrf.mxu0
    %v2984 = vadd.f32 0.0, %v2983
    %v2985 = vpop.f32.mrf.mxu0
    %2986 = vdwg.mxu0
    %v2988 = vsel %vm242, %v2908, 0
    %v2991 = vsel %vm242, %v2984, 0
    %2993 = vmatprep.subr.mxu0 0.0
    %2994 = vmatpush1.msra.mxu0 0.0
    %2995 = vmatprep.subr.mxu0 0.0
    %2996 = vmatpush1.msra.mxu0 0.0
    %2997 = vmatprep.subr.mxu0 0.0
    %2998 = vmatpush1.msra.mxu0 0.0
    %2999 = vmatprep.subr.mxu0 0.0
    %3000 = vmatpush1.msra.mxu0 0.0
    %3001 = vmatprep.subr.mxu0 0.0
    %3002 = vmatpush1.msra.mxu0 0.0
    %3003 = vmatprep.subr.mxu0 0.0
    %3004 = vmatpush1.msra.mxu0 0.0
    %3005 = vmatprep.subr.mxu0 0.0
    %3006 = vmatpush1.msra.mxu0 0.0
    %3007 = vmatprep.subr.mxu0 0.0
    %3008 = vmatpush1.msra.mxu0 0.0
    %3009 = vmatprep.subr.mxu0 0.0
    %3010 = vmatpush1.msra.mxu0 0.0
    %3011 = vmatprep.subr.mxu0 0.0
    %3012 = vmatpush1.msra.mxu0 0.0
    %3013 = vmatprep.subr.mxu0 0.0
    %3014 = vmatpush1.msra.mxu0 0.0
    %3015 = vmatprep.subr.mxu0 0.0
    %3016 = vmatpush1.msra.mxu0 0.0
    %3017 = vmatprep.subr.mxu0 0.0
    %3018 = vmatpush1.msra.mxu0 0.0
    %3019 = vmatprep.subr.mxu0 0.0
    %3020 = vmatpush1.msra.mxu0 0.0
    %3021 = vmatprep.subr.mxu0 0.0
    %3022 = vmatpush1.msra.mxu0 0.0
    %3023 = vmatprep.subr.mxu0 0.0
    %3024 = vmatpush1.msra.mxu0 %v2318
    %3025 = vmatprep.subr.mxu0 0.0
    %3026 = vmatpush2.msra.mxu0 0.0
    %3027 = vmatprep.subr.mxu0 0.0
    %3028 = vmatpush2.msra.mxu0 0.0
    %3029 = vmatprep.subr.mxu0 0.0
    %3030 = vmatpush2.msra.mxu0 0.0
    %3031 = vmatprep.subr.mxu0 0.0
    %3032 = vmatpush2.msra.mxu0 0.0
    %3033 = vmatprep.subr.mxu0 0.0
    %3034 = vmatpush2.msra.mxu0 0.0
    %3035 = vmatprep.subr.mxu0 0.0
    %3036 = vmatpush2.msra.mxu0 0.0
    %3037 = vmatprep.subr.mxu0 0.0
    %3038 = vmatpush2.msra.mxu0 0.0
    %3039 = vmatprep.subr.mxu0 0.0
    %3040 = vmatpush2.msra.mxu0 0.0
    %3041 = vmatprep.subr.mxu0 0.0
    %3042 = vmatpush2.msra.mxu0 0.0
    %3043 = vmatprep.subr.mxu0 0.0
    %3044 = vmatpush2.msra.mxu0 0.0
    %3045 = vmatprep.subr.mxu0 0.0
    %3046 = vmatpush2.msra.mxu0 0.0
    %3047 = vmatprep.subr.mxu0 0.0
    %3048 = vmatpush2.msra.mxu0 0.0
    %3049 = vmatprep.subr.mxu0 0.0
    %3050 = vmatpush2.msra.mxu0 0.0
    %3051 = vmatprep.subr.mxu0 0.0
    %3052 = vmatpush2.msra.mxu0 0.0
    %3053 = vmatprep.subr.mxu0 0.0
    %3054 = vmatpush2.msra.mxu0 0.0
    %3055 = vmatprep.subr.mxu0 0.0
    %3056 = vmatpush2.msra.mxu0 0.0
    %3057 = vmatprep.mubr.f32.mxu0 0.0
    %3058 = vmatmul.mubr.f32.gmra.mxu0 %v2988
    %v3059 = vpop.f32.mrf.mxu0
    %v3060 = vadd.f32 0.0, %v3059
    %v3061 = vpop.f32.mrf.mxu0
    %3062 = vmatprep.mubr.f32.mxu0 0.0
    %3063 = vmatmul.mubr.f32.gmra.mxu0 %v2991
    %v3064 = vpop.f32.mrf.mxu0
    %v3065 = vadd.f32 0.0, %v3064
    %v3066 = vpop.f32.mrf.mxu0
    %3067 = vdwg.mxu0
    %v3069 = vsel %vm242, %v2574, 0
    %v3072 = vsel %vm242, %v2650, 0
    %3074 = vmatprep.subr.mxu0 0.0
    %3075 = vmatpush1.msra.mxu0 0.0
    %3076 = vmatprep.subr.mxu0 0.0
    %3077 = vmatpush1.msra.mxu0 0.0
    %3078 = vmatprep.subr.mxu0 0.0
    %3079 = vmatpush1.msra.mxu0 0.0
    %3080 = vmatprep.subr.mxu0 0.0
    %3081 = vmatpush1.msra.mxu0 0.0
    %3082 = vmatprep.subr.mxu0 0.0
    %3083 = vmatpush1.msra.mxu0 0.0
    %3084 = vmatprep.subr.mxu0 0.0
    %3085 = vmatpush1.msra.mxu0 0.0
    %3086 = vmatprep.subr.mxu0 0.0
    %3087 = vmatpush1.msra.mxu0 0.0
    %3088 = vmatprep.subr.mxu0 0.0
    %3089 = vmatpush1.msra.mxu0 0.0
    %3090 = vmatprep.subr.mxu0 0.0
    %3091 = vmatpush1.msra.mxu0 0.0
    %3092 = vmatprep.subr.mxu0 0.0
    %3093 = vmatpush1.msra.mxu0 0.0
    %3094 = vmatprep.subr.mxu0 0.0
    %3095 = vmatpush1.msra.mxu0 0.0
    %3096 = vmatprep.subr.mxu0 0.0
    %3097 = vmatpush1.msra.mxu0 0.0
    %3098 = vmatprep.subr.mxu0 0.0
    %3099 = vmatpush1.msra.mxu0 0.0
    %3100 = vmatprep.subr.mxu0 0.0
    %3101 = vmatpush1.msra.mxu0 0.0
    %3102 = vmatprep.subr.mxu0 0.0
    %3103 = vmatpush1.msra.mxu0 0.0
    %3104 = vmatprep.subr.mxu0 0.0
    %3105 = vmatpush1.msra.mxu0 %v2317
    %3106 = vmatprep.subr.mxu0 0.0
    %3107 = vmatpush2.msra.mxu0 0.0
    %3108 = vmatprep.subr.mxu0 0.0
    %3109 = vmatpush2.msra.mxu0 0.0
    %3110 = vmatprep.subr.mxu0 0.0
    %3111 = vmatpush2.msra.mxu0 0.0
    %3112 = vmatprep.subr.mxu0 0.0
    %3113 = vmatpush2.msra.mxu0 0.0
    %3114 = vmatprep.subr.mxu0 0.0
    %3115 = vmatpush2.msra.mxu0 0.0
    %3116 = vmatprep.subr.mxu0 0.0
    %3117 = vmatpush2.msra.mxu0 0.0
    %3118 = vmatprep.subr.mxu0 0.0
    %3119 = vmatpush2.msra.mxu0 0.0
    %3120 = vmatprep.subr.mxu0 0.0
    %3121 = vmatpush2.msra.mxu0 0.0
    %3122 = vmatprep.subr.mxu0 0.0
    %3123 = vmatpush2.msra.mxu0 0.0
    %3124 = vmatprep.subr.mxu0 0.0
    %3125 = vmatpush2.msra.mxu0 0.0
    %3126 = vmatprep.subr.mxu0 0.0
    %3127 = vmatpush2.msra.mxu0 0.0
    %3128 = vmatprep.subr.mxu0 0.0
    %3129 = vmatpush2.msra.mxu0 0.0
    %3130 = vmatprep.subr.mxu0 0.0
    %3131 = vmatpush2.msra.mxu0 0.0
    %3132 = vmatprep.subr.mxu0 0.0
    %3133 = vmatpush2.msra.mxu0 0.0
    %3134 = vmatprep.subr.mxu0 0.0
    %3135 = vmatpush2.msra.mxu0 0.0
    %3136 = vmatprep.subr.mxu0 0.0
    %3137 = vmatpush2.msra.mxu0 0.0
    %3138 = vmatprep.mubr.f32.mxu0 0.0
    %3139 = vmatmul.mubr.f32.gmra.mxu0 %v3069
    %v3140 = vpop.f32.mrf.mxu0
    %v3141 = vadd.f32 %v3060, %v3140
    %v3142 = vpop.f32.mrf.mxu0
    %3143 = vmatprep.mubr.f32.mxu0 0.0
    %3144 = vmatmul.mubr.f32.gmra.mxu0 %v3072
    %v3145 = vpop.f32.mrf.mxu0
    %v3146 = vadd.f32 %v3065, %v3145
    %v3147 = vpop.f32.mrf.mxu0
    %3148 = vdwg.mxu0
    %3149 = vrot.lane.b32.xlu0 %v2308, 112
    %v3150 = vpop.permute.xlu0 %3149
    %3151 = vrot.lane.b32.xlu0 %v2308, 80
    %v3152 = vpop.permute.xlu0 %3151
    %v3153 = vsel %vm242, %v3150, 0
    %v3155 = vsel %vm242, %v3152, 0
    %3157 = vmatprep.subr.mxu0 0.0
    %3158 = vmatpush1.xpose.msra.mxu0 0.0
    %3159 = vmatprep.subr.mxu0 0.0
    %3160 = vmatpush1.xpose.msra.mxu0 0.0
    %3161 = vmatprep.subr.mxu0 0.0
    %3162 = vmatpush1.xpose.msra.mxu0 0.0
    %3163 = vmatprep.subr.mxu0 0.0
    %3164 = vmatpush1.xpose.msra.mxu0 0.0
    %3165 = vmatprep.subr.mxu0 0.0
    %3166 = vmatpush1.xpose.msra.mxu0 0.0
    %3167 = vmatprep.subr.mxu0 0.0
    %3168 = vmatpush1.xpose.msra.mxu0 0.0
    %3169 = vmatprep.subr.mxu0 0.0
    %3170 = vmatpush1.xpose.msra.mxu0 0.0
    %3171 = vmatprep.subr.mxu0 0.0
    %3172 = vmatpush1.xpose.msra.mxu0 0.0
    %3173 = vmatprep.subr.mxu0 0.0
    %3174 = vmatpush1.xpose.msra.mxu0 0.0
    %3175 = vmatprep.subr.mxu0 0.0
    %3176 = vmatpush1.xpose.msra.mxu0 0.0
    %3177 = vmatprep.subr.mxu0 0.0
    %3178 = vmatpush1.xpose.msra.mxu0 0.0
    %3179 = vmatprep.subr.mxu0 0.0
    %3180 = vmatpush1.xpose.msra.mxu0 0.0
    %3181 = vmatprep.subr.mxu0 0.0
    %3182 = vmatpush1.xpose.msra.mxu0 0.0
    %3183 = vmatprep.subr.mxu0 0.0
    %3184 = vmatpush1.xpose.msra.mxu0 0.0
    %3185 = vmatprep.subr.mxu0 0.0
    %3186 = vmatpush1.xpose.msra.mxu0 0.0
    %3187 = vmatprep.subr.mxu0 0.0
    %3188 = vmatpush1.xpose.msra.mxu0 %v3155
    %3189 = vmatprep.subr.mxu0 0.0
    %3190 = vmatpush2.xpose.msra.mxu0 0.0
    %3191 = vmatprep.subr.mxu0 0.0
    %3192 = vmatpush2.xpose.msra.mxu0 0.0
    %3193 = vmatprep.subr.mxu0 0.0
    %3194 = vmatpush2.xpose.msra.mxu0 0.0
    %3195 = vmatprep.subr.mxu0 0.0
    %3196 = vmatpush2.xpose.msra.mxu0 0.0
    %3197 = vmatprep.subr.mxu0 0.0
    %3198 = vmatpush2.xpose.msra.mxu0 0.0
    %3199 = vmatprep.subr.mxu0 0.0
    %3200 = vmatpush2.xpose.msra.mxu0 0.0
    %3201 = vmatprep.subr.mxu0 0.0
    %3202 = vmatpush2.xpose.msra.mxu0 0.0
    %3203 = vmatprep.subr.mxu0 0.0
    %3204 = vmatpush2.xpose.msra.mxu0 0.0
    %3205 = vmatprep.subr.mxu0 0.0
    %3206 = vmatpush2.xpose.msra.mxu0 0.0
    %3207 = vmatprep.subr.mxu0 0.0
    %3208 = vmatpush2.xpose.msra.mxu0 0.0
    %3209 = vmatprep.subr.mxu0 0.0
    %3210 = vmatpush2.xpose.msra.mxu0 0.0
    %3211 = vmatprep.subr.mxu0 0.0
    %3212 = vmatpush2.xpose.msra.mxu0 0.0
    %3213 = vmatprep.subr.mxu0 0.0
    %3214 = vmatpush2.xpose.msra.mxu0 0.0
    %3215 = vmatprep.subr.mxu0 0.0
    %3216 = vmatpush2.xpose.msra.mxu0 0.0
    %3217 = vmatprep.subr.mxu0 0.0
    %3218 = vmatpush2.xpose.msra.mxu0 0.0
    %3219 = vmatprep.subr.mxu0 0.0
    %3220 = vmatpush2.xpose.msra.mxu0 0.0
    %3221 = vmatprep.mubr.f32.mxu0 0.0
    %3222 = vmatmul.mubr.f32.gmra.mxu0 %v3153
    %v3223 = vpop.f32.mrf.mxu0
    %v3224 = vadd.f32 0.0, %v3223
    %v3225 = vpop.f32.mrf.mxu0
    %3226 = vdwg.mxu0
    %3227 = vrot.lane.b32.xlu0 %v2313, 112
    %v3228 = vpop.permute.xlu0 %3227
    %3229 = vrot.lane.b32.xlu0 %v2313, 80
    %v3230 = vpop.permute.xlu0 %3229
    %v3231 = vsel %vm242, %v3228, 0
    %v3233 = vsel %vm242, %v3230, 0
    %3235 = vmatprep.subr.mxu0 0.0
    %3236 = vmatpush1.xpose.msra.mxu0 0.0
    %3237 = vmatprep.subr.mxu0 0.0
    %3238 = vmatpush1.xpose.msra.mxu0 0.0
    %3239 = vmatprep.subr.mxu0 0.0
    %3240 = vmatpush1.xpose.msra.mxu0 0.0
    %3241 = vmatprep.subr.mxu0 0.0
    %3242 = vmatpush1.xpose.msra.mxu0 0.0
    %3243 = vmatprep.subr.mxu0 0.0
    %3244 = vmatpush1.xpose.msra.mxu0 0.0
    %3245 = vmatprep.subr.mxu0 0.0
    %3246 = vmatpush1.xpose.msra.mxu0 0.0
    %3247 = vmatprep.subr.mxu0 0.0
    %3248 = vmatpush1.xpose.msra.mxu0 0.0
    %3249 = vmatprep.subr.mxu0 0.0
    %3250 = vmatpush1.xpose.msra.mxu0 0.0
    %3251 = vmatprep.subr.mxu0 0.0
    %3252 = vmatpush1.xpose.msra.mxu0 0.0
    %3253 = vmatprep.subr.mxu0 0.0
    %3254 = vmatpush1.xpose.msra.mxu0 0.0
    %3255 = vmatprep.subr.mxu0 0.0
    %3256 = vmatpush1.xpose.msra.mxu0 0.0
    %3257 = vmatprep.subr.mxu0 0.0
    %3258 = vmatpush1.xpose.msra.mxu0 0.0
    %3259 = vmatprep.subr.mxu0 0.0
    %3260 = vmatpush1.xpose.msra.mxu0 0.0
    %3261 = vmatprep.subr.mxu0 0.0
    %3262 = vmatpush1.xpose.msra.mxu0 0.0
    %3263 = vmatprep.subr.mxu0 0.0
    %3264 = vmatpush1.xpose.msra.mxu0 0.0
    %3265 = vmatprep.subr.mxu0 0.0
    %3266 = vmatpush1.xpose.msra.mxu0 %v3233
    %3267 = vmatprep.subr.mxu0 0.0
    %3268 = vmatpush2.xpose.msra.mxu0 0.0
    %3269 = vmatprep.subr.mxu0 0.0
    %3270 = vmatpush2.xpose.msra.mxu0 0.0
    %3271 = vmatprep.subr.mxu0 0.0
    %3272 = vmatpush2.xpose.msra.mxu0 0.0
    %3273 = vmatprep.subr.mxu0 0.0
    %3274 = vmatpush2.xpose.msra.mxu0 0.0
    %3275 = vmatprep.subr.mxu0 0.0
    %3276 = vmatpush2.xpose.msra.mxu0 0.0
    %3277 = vmatprep.subr.mxu0 0.0
    %3278 = vmatpush2.xpose.msra.mxu0 0.0
    %3279 = vmatprep.subr.mxu0 0.0
    %3280 = vmatpush2.xpose.msra.mxu0 0.0
    %3281 = vmatprep.subr.mxu0 0.0
    %3282 = vmatpush2.xpose.msra.mxu0 0.0
    %3283 = vmatprep.subr.mxu0 0.0
    %3284 = vmatpush2.xpose.msra.mxu0 0.0
    %3285 = vmatprep.subr.mxu0 0.0
    %3286 = vmatpush2.xpose.msra.mxu0 0.0
    %3287 = vmatprep.subr.mxu0 0.0
    %3288 = vmatpush2.xpose.msra.mxu0 0.0
    %3289 = vmatprep.subr.mxu0 0.0
    %3290 = vmatpush2.xpose.msra.mxu0 0.0
    %3291 = vmatprep.subr.mxu0 0.0
    %3292 = vmatpush2.xpose.msra.mxu0 0.0
    %3293 = vmatprep.subr.mxu0 0.0
    %3294 = vmatpush2.xpose.msra.mxu0 0.0
    %3295 = vmatprep.subr.mxu0 0.0
    %3296 = vmatpush2.xpose.msra.mxu0 0.0
    %3297 = vmatprep.subr.mxu0 0.0
    %3298 = vmatpush2.xpose.msra.mxu0 0.0
    %3299 = vmatprep.mubr.f32.mxu0 0.0
    %3300 = vmatmul.mubr.f32.gmra.mxu0 %v3231
    %v3301 = vpop.f32.mrf.mxu0
    %v3302 = vadd.f32 0.0, %v3301
    %v3303 = vpop.f32.mrf.mxu0
    %3304 = vdwg.mxu0
    %v3305 = vmul.f32 %v3224, 0.35355338
    %v3306 = vmul.f32 %v3302, 0.35355338
    %v3307 = vadd.f32 %v3305, %v401
    %v3308 = vadd.f32 %v3306, %v405
    %v3309 = vsel %vm242, %v3307, -inf
    %3310 = vmax.xlane.f32.xlu0 %v3309
    %v3311 = vpop.xlane.xlu0 %3310
    %v3312 = vsel %vm242, %v3308, -inf
    %3313 = vmax.xlane.f32.xlu0 %v3312
    %v3314 = vpop.xlane.xlu0 %3313
    %v3315 = vsub.f32 %v3307, %v3311
    %v3316 = vsub.f32 %v3308, %v3314
    %v3317 = vmul.f32 %v3315, 1.442695
    %v3318 = vpow.pop %v3317
    %v3319 = vmul.f32 %v3316, 1.442695
    %v3320 = vpow.pop %v3319
    %v3321 = vsel %vm242, %v3318, 0.0
    %3322 = vadd.xlane.f32.xlu0 %v3321
    %v3323 = vpop.xlane.xlu0 %3322
    %v3324 = vsel %vm242, %v3320, 0.0
    %3325 = vadd.xlane.f32.xlu0 %v3324
    %v3326 = vpop.xlane.xlu0 %3325
    %v3327 = vrcp.pop %v3323
    %v3328 = vrcp.pop %v3326
    %v3329 = vmul.f32 %v3318, %v3327
    %v3330 = vmul.f32 %v3320, %v3328
    %3331 = vrot.lane.b32.xlu0 %v2308, 48
    %v3332 = vpop.permute.xlu0 %3331
    %v3335 = vsel %vm242, %v3329, 0
    %3337 = vmatprep.subr.mxu0 0.0
    %3338 = vmatpush1.msra.mxu0 0.0
    %3339 = vmatprep.subr.mxu0 0.0
    %3340 = vmatpush1.msra.mxu0 0.0
    %3341 = vmatprep.subr.mxu0 0.0
    %3342 = vmatpush1.msra.mxu0 0.0
    %3343 = vmatprep.subr.mxu0 0.0
    %3344 = vmatpush1.msra.mxu0 0.0
    %3345 = vmatprep.subr.mxu0 0.0
    %3346 = vmatpush1.msra.mxu0 0.0
    %3347 = vmatprep.subr.mxu0 0.0
    %3348 = vmatpush1.msra.mxu0 0.0
    %3349 = vmatprep.subr.mxu0 0.0
    %3350 = vmatpush1.msra.mxu0 0.0
    %3351 = vmatprep.subr.mxu0 0.0
    %3352 = vmatpush1.msra.mxu0 0.0
    %3353 = vmatprep.subr.mxu0 0.0
    %3354 = vmatpush1.msra.mxu0 0.0
    %3355 = vmatprep.subr.mxu0 0.0
    %3356 = vmatpush1.msra.mxu0 0.0
    %3357 = vmatprep.subr.mxu0 0.0
    %3358 = vmatpush1.msra.mxu0 0.0
    %3359 = vmatprep.subr.mxu0 0.0
    %3360 = vmatpush1.msra.mxu0 0.0
    %3361 = vmatprep.subr.mxu0 0.0
    %3362 = vmatpush1.msra.mxu0 0.0
    %3363 = vmatprep.subr.mxu0 0.0
    %3364 = vmatpush1.msra.mxu0 0.0
    %3365 = vmatprep.subr.mxu0 0.0
    %3366 = vmatpush1.msra.mxu0 0.0
    %3367 = vmatprep.subr.mxu0 0.0
    %3368 = vmatpush1.msra.mxu0 %v3332
    %3369 = vmatprep.subr.mxu0 0.0
    %3370 = vmatpush2.msra.mxu0 0.0
    %3371 = vmatprep.subr.mxu0 0.0
    %3372 = vmatpush2.msra.mxu0 0.0
    %3373 = vmatprep.subr.mxu0 0.0
    %3374 = vmatpush2.msra.mxu0 0.0
    %3375 = vmatprep.subr.mxu0 0.0
    %3376 = vmatpush2.msra.mxu0 0.0
    %3377 = vmatprep.subr.mxu0 0.0
    %3378 = vmatpush2.msra.mxu0 0.0
    %3379 = vmatprep.subr.mxu0 0.0
    %3380 = vmatpush2.msra.mxu0 0.0
    %3381 = vmatprep.subr.mxu0 0.0
    %3382 = vmatpush2.msra.mxu0 0.0
    %3383 = vmatprep.subr.mxu0 0.0
    %3384 = vmatpush2.msra.mxu0 0.0
    %3385 = vmatprep.subr.mxu0 0.0
    %3386 = vmatpush2.msra.mxu0 0.0
    %3387 = vmatprep.subr.mxu0 0.0
    %3388 = vmatpush2.msra.mxu0 0.0
    %3389 = vmatprep.subr.mxu0 0.0
    %3390 = vmatpush2.msra.mxu0 0.0
    %3391 = vmatprep.subr.mxu0 0.0
    %3392 = vmatpush2.msra.mxu0 0.0
    %3393 = vmatprep.subr.mxu0 0.0
    %3394 = vmatpush2.msra.mxu0 0.0
    %3395 = vmatprep.subr.mxu0 0.0
    %3396 = vmatpush2.msra.mxu0 0.0
    %3397 = vmatprep.subr.mxu0 0.0
    %3398 = vmatpush2.msra.mxu0 0.0
    %3399 = vmatprep.subr.mxu0 0.0
    %3400 = vmatpush2.msra.mxu0 0.0
    %3401 = vmatprep.mubr.f32.mxu0 0.0
    %3402 = vmatmul.mubr.f32.gmra.mxu0 %v3335
    %v3403 = vpop.f32.mrf.mxu0
    %v3404 = vadd.f32 0.0, %v3403
    %v3405 = vpop.f32.mrf.mxu0
    %3406 = vdwg.mxu0
    %3407 = vrot.lane.b32.xlu0 %v2313, 48
    %v3408 = vpop.permute.xlu0 %3407
    %v3411 = vsel %vm242, %v3330, 0
    %3413 = vmatprep.subr.mxu0 0.0
    %3414 = vmatpush1.msra.mxu0 0.0
    %3415 = vmatprep.subr.mxu0 0.0
    %3416 = vmatpush1.msra.mxu0 0.0
    %3417 = vmatprep.subr.mxu0 0.0
    %3418 = vmatpush1.msra.mxu0 0.0
    %3419 = vmatprep.subr.mxu0 0.0
    %3420 = vmatpush1.msra.mxu0 0.0
    %3421 = vmatprep.subr.mxu0 0.0
    %3422 = vmatpush1.msra.mxu0 0.0
    %3423 = vmatprep.subr.mxu0 0.0
    %3424 = vmatpush1.msra.mxu0 0.0
    %3425 = vmatprep.subr.mxu0 0.0
    %3426 = vmatpush1.msra.mxu0 0.0
    %3427 = vmatprep.subr.mxu0 0.0
    %3428 = vmatpush1.msra.mxu0 0.0
    %3429 = vmatprep.subr.mxu0 0.0
    %3430 = vmatpush1.msra.mxu0 0.0
    %3431 = vmatprep.subr.mxu0 0.0
    %3432 = vmatpush1.msra.mxu0 0.0
    %3433 = vmatprep.subr.mxu0 0.0
    %3434 = vmatpush1.msra.mxu0 0.0
    %3435 = vmatprep.subr.mxu0 0.0
    %3436 = vmatpush1.msra.mxu0 0.0
    %3437 = vmatprep.subr.mxu0 0.0
    %3438 = vmatpush1.msra.mxu0 0.0
    %3439 = vmatprep.subr.mxu0 0.0
    %3440 = vmatpush1.msra.mxu0 0.0
    %3441 = vmatprep.subr.mxu0 0.0
    %3442 = vmatpush1.msra.mxu0 0.0
    %3443 = vmatprep.subr.mxu0 0.0
    %3444 = vmatpush1.msra.mxu0 %v3408
    %3445 = vmatprep.subr.mxu0 0.0
    %3446 = vmatpush2.msra.mxu0 0.0
    %3447 = vmatprep.subr.mxu0 0.0
    %3448 = vmatpush2.msra.mxu0 0.0
    %3449 = vmatprep.subr.mxu0 0.0
    %3450 = vmatpush2.msra.mxu0 0.0
    %3451 = vmatprep.subr.mxu0 0.0
    %3452 = vmatpush2.msra.mxu0 0.0
    %3453 = vmatprep.subr.mxu0 0.0
    %3454 = vmatpush2.msra.mxu0 0.0
    %3455 = vmatprep.subr.mxu0 0.0
    %3456 = vmatpush2.msra.mxu0 0.0
    %3457 = vmatprep.subr.mxu0 0.0
    %3458 = vmatpush2.msra.mxu0 0.0
    %3459 = vmatprep.subr.mxu0 0.0
    %3460 = vmatpush2.msra.mxu0 0.0
    %3461 = vmatprep.subr.mxu0 0.0
    %3462 = vmatpush2.msra.mxu0 0.0
    %3463 = vmatprep.subr.mxu0 0.0
    %3464 = vmatpush2.msra.mxu0 0.0
    %3465 = vmatprep.subr.mxu0 0.0
    %3466 = vmatpush2.msra.mxu0 0.0
    %3467 = vmatprep.subr.mxu0 0.0
    %3468 = vmatpush2.msra.mxu0 0.0
    %3469 = vmatprep.subr.mxu0 0.0
    %3470 = vmatpush2.msra.mxu0 0.0
    %3471 = vmatprep.subr.mxu0 0.0
    %3472 = vmatpush2.msra.mxu0 0.0
    %3473 = vmatprep.subr.mxu0 0.0
    %3474 = vmatpush2.msra.mxu0 0.0
    %3475 = vmatprep.subr.mxu0 0.0
    %3476 = vmatpush2.msra.mxu0 0.0
    %3477 = vmatprep.mubr.f32.mxu0 0.0
    %3478 = vmatmul.mubr.f32.gmra.mxu0 %v3411
    %v3479 = vpop.f32.mrf.mxu0
    %v3480 = vadd.f32 0.0, %v3479
    %v3481 = vpop.f32.mrf.mxu0
    %3482 = vdwg.mxu0
    %v3484 = vsel %vm242, %v3404, 0
    %v3487 = vsel %vm242, %v3480, 0
    %3489 = vmatprep.subr.mxu0 0.0
    %3490 = vmatpush1.msra.mxu0 0.0
    %3491 = vmatprep.subr.mxu0 0.0
    %3492 = vmatpush1.msra.mxu0 0.0
    %3493 = vmatprep.subr.mxu0 0.0
    %3494 = vmatpush1.msra.mxu0 0.0
    %3495 = vmatprep.subr.mxu0 0.0
    %3496 = vmatpush1.msra.mxu0 0.0
    %3497 = vmatprep.subr.mxu0 0.0
    %3498 = vmatpush1.msra.mxu0 0.0
    %3499 = vmatprep.subr.mxu0 0.0
    %3500 = vmatpush1.msra.mxu0 0.0
    %3501 = vmatprep.subr.mxu0 0.0
    %3502 = vmatpush1.msra.mxu0 0.0
    %3503 = vmatprep.subr.mxu0 0.0
    %3504 = vmatpush1.msra.mxu0 0.0
    %3505 = vmatprep.subr.mxu0 0.0
    %3506 = vmatpush1.msra.mxu0 0.0
    %3507 = vmatprep.subr.mxu0 0.0
    %3508 = vmatpush1.msra.mxu0 0.0
    %3509 = vmatprep.subr.mxu0 0.0
    %3510 = vmatpush1.msra.mxu0 0.0
    %3511 = vmatprep.subr.mxu0 0.0
    %3512 = vmatpush1.msra.mxu0 0.0
    %3513 = vmatprep.subr.mxu0 0.0
    %3514 = vmatpush1.msra.mxu0 0.0
    %3515 = vmatprep.subr.mxu0 0.0
    %3516 = vmatpush1.msra.mxu0 0.0
    %3517 = vmatprep.subr.mxu0 0.0
    %3518 = vmatpush1.msra.mxu0 0.0
    %3519 = vmatprep.subr.mxu0 0.0
    %3520 = vmatpush1.msra.mxu0 %v2319
    %3521 = vmatprep.subr.mxu0 0.0
    %3522 = vmatpush2.msra.mxu0 0.0
    %3523 = vmatprep.subr.mxu0 0.0
    %3524 = vmatpush2.msra.mxu0 0.0
    %3525 = vmatprep.subr.mxu0 0.0
    %3526 = vmatpush2.msra.mxu0 0.0
    %3527 = vmatprep.subr.mxu0 0.0
    %3528 = vmatpush2.msra.mxu0 0.0
    %3529 = vmatprep.subr.mxu0 0.0
    %3530 = vmatpush2.msra.mxu0 0.0
    %3531 = vmatprep.subr.mxu0 0.0
    %3532 = vmatpush2.msra.mxu0 0.0
    %3533 = vmatprep.subr.mxu0 0.0
    %3534 = vmatpush2.msra.mxu0 0.0
    %3535 = vmatprep.subr.mxu0 0.0
    %3536 = vmatpush2.msra.mxu0 0.0
    %3537 = vmatprep.subr.mxu0 0.0
    %3538 = vmatpush2.msra.mxu0 0.0
    %3539 = vmatprep.subr.mxu0 0.0
    %3540 = vmatpush2.msra.mxu0 0.0
    %3541 = vmatprep.subr.mxu0 0.0
    %3542 = vmatpush2.msra.mxu0 0.0
    %3543 = vmatprep.subr.mxu0 0.0
    %3544 = vmatpush2.msra.mxu0 0.0
    %3545 = vmatprep.subr.mxu0 0.0
    %3546 = vmatpush2.msra.mxu0 0.0
    %3547 = vmatprep.subr.mxu0 0.0
    %3548 = vmatpush2.msra.mxu0 0.0
    %3549 = vmatprep.subr.mxu0 0.0
    %3550 = vmatpush2.msra.mxu0 0.0
    %3551 = vmatprep.subr.mxu0 0.0
    %3552 = vmatpush2.msra.mxu0 0.0
    %3553 = vmatprep.mubr.f32.mxu0 0.0
    %3554 = vmatmul.mubr.f32.gmra.mxu0 %v3484
    %v3555 = vpop.f32.mrf.mxu0
    %v3556 = vadd.f32 0.0, %v3555
    %v3557 = vpop.f32.mrf.mxu0
    %3558 = vmatprep.mubr.f32.mxu0 0.0
    %3559 = vmatmul.mubr.f32.gmra.mxu0 %v3487
    %v3560 = vpop.f32.mrf.mxu0
    %v3561 = vadd.f32 0.0, %v3560
    %v3562 = vpop.f32.mrf.mxu0
    %3563 = vdwg.mxu0
    %v3564 = vadd.f32 %v3141, %v3556
    %v3565 = vadd.f32 %v3146, %v3561
    %3566 = vrot.lane.b32.xlu0 %v2308, 104
    %v3567 = vpop.permute.xlu0 %3566
    %3568 = vrot.lane.b32.xlu0 %v2308, 72
    %v3569 = vpop.permute.xlu0 %3568
    %v3570 = vsel %vm242, %v3567, 0
    %v3572 = vsel %vm242, %v3569, 0
    %3574 = vmatprep.subr.mxu0 0.0
    %3575 = vmatpush1.xpose.msra.mxu0 0.0
    %3576 = vmatprep.subr.mxu0 0.0
    %3577 = vmatpush1.xpose.msra.mxu0 0.0
    %3578 = vmatprep.subr.mxu0 0.0
    %3579 = vmatpush1.xpose.msra.mxu0 0.0
    %3580 = vmatprep.subr.mxu0 0.0
    %3581 = vmatpush1.xpose.msra.mxu0 0.0
    %3582 = vmatprep.subr.mxu0 0.0
    %3583 = vmatpush1.xpose.msra.mxu0 0.0
    %3584 = vmatprep.subr.mxu0 0.0
    %3585 = vmatpush1.xpose.msra.mxu0 0.0
    %3586 = vmatprep.subr.mxu0 0.0
    %3587 = vmatpush1.xpose.msra.mxu0 0.0
    %3588 = vmatprep.subr.mxu0 0.0
    %3589 = vmatpush1.xpose.msra.mxu0 0.0
    %3590 = vmatprep.subr.mxu0 0.0
    %3591 = vmatpush1.xpose.msra.mxu0 0.0
    %3592 = vmatprep.subr.mxu0 0.0
    %3593 = vmatpush1.xpose.msra.mxu0 0.0
    %3594 = vmatprep.subr.mxu0 0.0
    %3595 = vmatpush1.xpose.msra.mxu0 0.0
    %3596 = vmatprep.subr.mxu0 0.0
    %3597 = vmatpush1.xpose.msra.mxu0 0.0
    %3598 = vmatprep.subr.mxu0 0.0
    %3599 = vmatpush1.xpose.msra.mxu0 0.0
    %3600 = vmatprep.subr.mxu0 0.0
    %3601 = vmatpush1.xpose.msra.mxu0 0.0
    %3602 = vmatprep.subr.mxu0 0.0
    %3603 = vmatpush1.xpose.msra.mxu0 0.0
    %3604 = vmatprep.subr.mxu0 0.0
    %3605 = vmatpush1.xpose.msra.mxu0 %v3572
    %3606 = vmatprep.subr.mxu0 0.0
    %3607 = vmatpush2.xpose.msra.mxu0 0.0
    %3608 = vmatprep.subr.mxu0 0.0
    %3609 = vmatpush2.xpose.msra.mxu0 0.0
    %3610 = vmatprep.subr.mxu0 0.0
    %3611 = vmatpush2.xpose.msra.mxu0 0.0
    %3612 = vmatprep.subr.mxu0 0.0
    %3613 = vmatpush2.xpose.msra.mxu0 0.0
    %3614 = vmatprep.subr.mxu0 0.0
    %3615 = vmatpush2.xpose.msra.mxu0 0.0
    %3616 = vmatprep.subr.mxu0 0.0
    %3617 = vmatpush2.xpose.msra.mxu0 0.0
    %3618 = vmatprep.subr.mxu0 0.0
    %3619 = vmatpush2.xpose.msra.mxu0 0.0
    %3620 = vmatprep.subr.mxu0 0.0
    %3621 = vmatpush2.xpose.msra.mxu0 0.0
    %3622 = vmatprep.subr.mxu0 0.0
    %3623 = vmatpush2.xpose.msra.mxu0 0.0
    %3624 = vmatprep.subr.mxu0 0.0
    %3625 = vmatpush2.xpose.msra.mxu0 0.0
    %3626 = vmatprep.subr.mxu0 0.0
    %3627 = vmatpush2.xpose.msra.mxu0 0.0
    %3628 = vmatprep.subr.mxu0 0.0
    %3629 = vmatpush2.xpose.msra.mxu0 0.0
    %3630 = vmatprep.subr.mxu0 0.0
    %3631 = vmatpush2.xpose.msra.mxu0 0.0
    %3632 = vmatprep.subr.mxu0 0.0
    %3633 = vmatpush2.xpose.msra.mxu0 0.0
    %3634 = vmatprep.subr.mxu0 0.0
    %3635 = vmatpush2.xpose.msra.mxu0 0.0
    %3636 = vmatprep.subr.mxu0 0.0
    %3637 = vmatpush2.xpose.msra.mxu0 0.0
    %3638 = vmatprep.mubr.f32.mxu0 0.0
    %3639 = vmatmul.mubr.f32.gmra.mxu0 %v3570
    %v3640 = vpop.f32.mrf.mxu0
    %v3641 = vadd.f32 0.0, %v3640
    %v3642 = vpop.f32.mrf.mxu0
    %3643 = vdwg.mxu0
    %3644 = vrot.lane.b32.xlu0 %v2313, 104
    %v3645 = vpop.permute.xlu0 %3644
    %3646 = vrot.lane.b32.xlu0 %v2313, 72
    %v3647 = vpop.permute.xlu0 %3646
    %v3648 = vsel %vm242, %v3645, 0
    %v3650 = vsel %vm242, %v3647, 0
    %3652 = vmatprep.subr.mxu0 0.0
    %3653 = vmatpush1.xpose.msra.mxu0 0.0
    %3654 = vmatprep.subr.mxu0 0.0
    %3655 = vmatpush1.xpose.msra.mxu0 0.0
    %3656 = vmatprep.subr.mxu0 0.0
    %3657 = vmatpush1.xpose.msra.mxu0 0.0
    %3658 = vmatprep.subr.mxu0 0.0
    %3659 = vmatpush1.xpose.msra.mxu0 0.0
    %3660 = vmatprep.subr.mxu0 0.0
    %3661 = vmatpush1.xpose.msra.mxu0 0.0
    %3662 = vmatprep.subr.mxu0 0.0
    %3663 = vmatpush1.xpose.msra.mxu0 0.0
    %3664 = vmatprep.subr.mxu0 0.0
    %3665 = vmatpush1.xpose.msra.mxu0 0.0
    %3666 = vmatprep.subr.mxu0 0.0
    %3667 = vmatpush1.xpose.msra.mxu0 0.0
    %3668 = vmatprep.subr.mxu0 0.0
    %3669 = vmatpush1.xpose.msra.mxu0 0.0
    %3670 = vmatprep.subr.mxu0 0.0
    %3671 = vmatpush1.xpose.msra.mxu0 0.0
    %3672 = vmatprep.subr.mxu0 0.0
    %3673 = vmatpush1.xpose.msra.mxu0 0.0
    %3674 = vmatprep.subr.mxu0 0.0
    %3675 = vmatpush1.xpose.msra.mxu0 0.0
    %3676 = vmatprep.subr.mxu0 0.0
    %3677 = vmatpush1.xpose.msra.mxu0 0.0
    %3678 = vmatprep.subr.mxu0 0.0
    %3679 = vmatpush1.xpose.msra.mxu0 0.0
    %3680 = vmatprep.subr.mxu0 0.0
    %3681 = vmatpush1.xpose.msra.mxu0 0.0
    %3682 = vmatprep.subr.mxu0 0.0
    %3683 = vmatpush1.xpose.msra.mxu0 %v3650
    %3684 = vmatprep.subr.mxu0 0.0
    %3685 = vmatpush2.xpose.msra.mxu0 0.0
    %3686 = vmatprep.subr.mxu0 0.0
    %3687 = vmatpush2.xpose.msra.mxu0 0.0
    %3688 = vmatprep.subr.mxu0 0.0
    %3689 = vmatpush2.xpose.msra.mxu0 0.0
    %3690 = vmatprep.subr.mxu0 0.0
    %3691 = vmatpush2.xpose.msra.mxu0 0.0
    %3692 = vmatprep.subr.mxu0 0.0
    %3693 = vmatpush2.xpose.msra.mxu0 0.0
    %3694 = vmatprep.subr.mxu0 0.0
    %3695 = vmatpush2.xpose.msra.mxu0 0.0
    %3696 = vmatprep.subr.mxu0 0.0
    %3697 = vmatpush2.xpose.msra.mxu0 0.0
    %3698 = vmatprep.subr.mxu0 0.0
    %3699 = vmatpush2.xpose.msra.mxu0 0.0
    %3700 = vmatprep.subr.mxu0 0.0
    %3701 = vmatpush2.xpose.msra.mxu0 0.0
    %3702 = vmatprep.subr.mxu0 0.0
    %3703 = vmatpush2.xpose.msra.mxu0 0.0
    %3704 = vmatprep.subr.mxu0 0.0
    %3705 = vmatpush2.xpose.msra.mxu0 0.0
    %3706 = vmatprep.subr.mxu0 0.0
    %3707 = vmatpush2.xpose.msra.mxu0 0.0
    %3708 = vmatprep.subr.mxu0 0.0
    %3709 = vmatpush2.xpose.msra.mxu0 0.0
    %3710 = vmatprep.subr.mxu0 0.0
    %3711 = vmatpush2.xpose.msra.mxu0 0.0
    %3712 = vmatprep.subr.mxu0 0.0
    %3713 = vmatpush2.xpose.msra.mxu0 0.0
    %3714 = vmatprep.subr.mxu0 0.0
    %3715 = vmatpush2.xpose.msra.mxu0 0.0
    %3716 = vmatprep.mubr.f32.mxu0 0.0
    %3717 = vmatmul.mubr.f32.gmra.mxu0 %v3648
    %v3718 = vpop.f32.mrf.mxu0
    %v3719 = vadd.f32 0.0, %v3718
    %v3720 = vpop.f32.mrf.mxu0
    %3721 = vdwg.mxu0
    %v3722 = vmul.f32 %v3641, 0.35355338
    %v3723 = vmul.f32 %v3719, 0.35355338
    %v3724 = vadd.f32 %v3722, %v401
    %v3725 = vadd.f32 %v3723, %v405
    %v3726 = vsel %vm242, %v3724, -inf
    %3727 = vmax.xlane.f32.xlu0 %v3726
    %v3728 = vpop.xlane.xlu0 %3727
    %v3729 = vsel %vm242, %v3725, -inf
    %3730 = vmax.xlane.f32.xlu0 %v3729
    %v3731 = vpop.xlane.xlu0 %3730
    %v3732 = vsub.f32 %v3724, %v3728
    %v3733 = vsub.f32 %v3725, %v3731
    %v3734 = vmul.f32 %v3732, 1.442695
    %v3735 = vpow.pop %v3734
    %v3736 = vmul.f32 %v3733, 1.442695
    %v3737 = vpow.pop %v3736
    %v3738 = vsel %vm242, %v3735, 0.0
    %3739 = vadd.xlane.f32.xlu0 %v3738
    %v3740 = vpop.xlane.xlu0 %3739
    %v3741 = vsel %vm242, %v3737, 0.0
    %3742 = vadd.xlane.f32.xlu0 %v3741
    %v3743 = vpop.xlane.xlu0 %3742
    %v3744 = vrcp.pop %v3740
    %v3745 = vrcp.pop %v3743
    %v3746 = vmul.f32 %v3735, %v3744
    %v3747 = vmul.f32 %v3737, %v3745
    %3748 = vrot.lane.b32.xlu0 %v2308, 40
    %v3749 = vpop.permute.xlu0 %3748
    %v3752 = vsel %vm242, %v3746, 0
    %3754 = vmatprep.subr.mxu0 0.0
    %3755 = vmatpush1.msra.mxu0 0.0
    %3756 = vmatprep.subr.mxu0 0.0
    %3757 = vmatpush1.msra.mxu0 0.0
    %3758 = vmatprep.subr.mxu0 0.0
    %3759 = vmatpush1.msra.mxu0 0.0
    %3760 = vmatprep.subr.mxu0 0.0
    %3761 = vmatpush1.msra.mxu0 0.0
    %3762 = vmatprep.subr.mxu0 0.0
    %3763 = vmatpush1.msra.mxu0 0.0
    %3764 = vmatprep.subr.mxu0 0.0
    %3765 = vmatpush1.msra.mxu0 0.0
    %3766 = vmatprep.subr.mxu0 0.0
    %3767 = vmatpush1.msra.mxu0 0.0
    %3768 = vmatprep.subr.mxu0 0.0
    %3769 = vmatpush1.msra.mxu0 0.0
    %3770 = vmatprep.subr.mxu0 0.0
    %3771 = vmatpush1.msra.mxu0 0.0
    %3772 = vmatprep.subr.mxu0 0.0
    %3773 = vmatpush1.msra.mxu0 0.0
    %3774 = vmatprep.subr.mxu0 0.0
    %3775 = vmatpush1.msra.mxu0 0.0
    %3776 = vmatprep.subr.mxu0 0.0
    %3777 = vmatpush1.msra.mxu0 0.0
    %3778 = vmatprep.subr.mxu0 0.0
    %3779 = vmatpush1.msra.mxu0 0.0
    %3780 = vmatprep.subr.mxu0 0.0
    %3781 = vmatpush1.msra.mxu0 0.0
    %3782 = vmatprep.subr.mxu0 0.0
    %3783 = vmatpush1.msra.mxu0 0.0
    %3784 = vmatprep.subr.mxu0 0.0
    %3785 = vmatpush1.msra.mxu0 %v3749
    %3786 = vmatprep.subr.mxu0 0.0
    %3787 = vmatpush2.msra.mxu0 0.0
    %3788 = vmatprep.subr.mxu0 0.0
    %3789 = vmatpush2.msra.mxu0 0.0
    %3790 = vmatprep.subr.mxu0 0.0
    %3791 = vmatpush2.msra.mxu0 0.0
    %3792 = vmatprep.subr.mxu0 0.0
    %3793 = vmatpush2.msra.mxu0 0.0
    %3794 = vmatprep.subr.mxu0 0.0
    %3795 = vmatpush2.msra.mxu0 0.0
    %3796 = vmatprep.subr.mxu0 0.0
    %3797 = vmatpush2.msra.mxu0 0.0
    %3798 = vmatprep.subr.mxu0 0.0
    %3799 = vmatpush2.msra.mxu0 0.0
    %3800 = vmatprep.subr.mxu0 0.0
    %3801 = vmatpush2.msra.mxu0 0.0
    %3802 = vmatprep.subr.mxu0 0.0
    %3803 = vmatpush2.msra.mxu0 0.0
    %3804 = vmatprep.subr.mxu0 0.0
    %3805 = vmatpush2.msra.mxu0 0.0
    %3806 = vmatprep.subr.mxu0 0.0
    %3807 = vmatpush2.msra.mxu0 0.0
    %3808 = vmatprep.subr.mxu0 0.0
    %3809 = vmatpush2.msra.mxu0 0.0
    %3810 = vmatprep.subr.mxu0 0.0
    %3811 = vmatpush2.msra.mxu0 0.0
    %3812 = vmatprep.subr.mxu0 0.0
    %3813 = vmatpush2.msra.mxu0 0.0
    %3814 = vmatprep.subr.mxu0 0.0
    %3815 = vmatpush2.msra.mxu0 0.0
    %3816 = vmatprep.subr.mxu0 0.0
    %3817 = vmatpush2.msra.mxu0 0.0
    %3818 = vmatprep.mubr.f32.mxu0 0.0
    %3819 = vmatmul.mubr.f32.gmra.mxu0 %v3752
    %v3820 = vpop.f32.mrf.mxu0
    %v3821 = vadd.f32 0.0, %v3820
    %v3822 = vpop.f32.mrf.mxu0
    %3823 = vdwg.mxu0
    %3824 = vrot.lane.b32.xlu0 %v2313, 40
    %v3825 = vpop.permute.xlu0 %3824
    %v3828 = vsel %vm242, %v3747, 0
    %3830 = vmatprep.subr.mxu0 0.0
    %3831 = vmatpush1.msra.mxu0 0.0
    %3832 = vmatprep.subr.mxu0 0.0
    %3833 = vmatpush1.msra.mxu0 0.0
    %3834 = vmatprep.subr.mxu0 0.0
    %3835 = vmatpush1.msra.mxu0 0.0
    %3836 = vmatprep.subr.mxu0 0.0
    %3837 = vmatpush1.msra.mxu0 0.0
    %3838 = vmatprep.subr.mxu0 0.0
    %3839 = vmatpush1.msra.mxu0 0.0
    %3840 = vmatprep.subr.mxu0 0.0
    %3841 = vmatpush1.msra.mxu0 0.0
    %3842 = vmatprep.subr.mxu0 0.0
    %3843 = vmatpush1.msra.mxu0 0.0
    %3844 = vmatprep.subr.mxu0 0.0
    %3845 = vmatpush1.msra.mxu0 0.0
    %3846 = vmatprep.subr.mxu0 0.0
    %3847 = vmatpush1.msra.mxu0 0.0
    %3848 = vmatprep.subr.mxu0 0.0
    %3849 = vmatpush1.msra.mxu0 0.0
    %3850 = vmatprep.subr.mxu0 0.0
    %3851 = vmatpush1.msra.mxu0 0.0
    %3852 = vmatprep.subr.mxu0 0.0
    %3853 = vmatpush1.msra.mxu0 0.0
    %3854 = vmatprep.subr.mxu0 0.0
    %3855 = vmatpush1.msra.mxu0 0.0
    %3856 = vmatprep.subr.mxu0 0.0
    %3857 = vmatpush1.msra.mxu0 0.0
    %3858 = vmatprep.subr.mxu0 0.0
    %3859 = vmatpush1.msra.mxu0 0.0
    %3860 = vmatprep.subr.mxu0 0.0
    %3861 = vmatpush1.msra.mxu0 %v3825
    %3862 = vmatprep.subr.mxu0 0.0
    %3863 = vmatpush2.msra.mxu0 0.0
    %3864 = vmatprep.subr.mxu0 0.0
    %3865 = vmatpush2.msra.mxu0 0.0
    %3866 = vmatprep.subr.mxu0 0.0
    %3867 = vmatpush2.msra.mxu0 0.0
    %3868 = vmatprep.subr.mxu0 0.0
    %3869 = vmatpush2.msra.mxu0 0.0
    %3870 = vmatprep.subr.mxu0 0.0
    %3871 = vmatpush2.msra.mxu0 0.0
    %3872 = vmatprep.subr.mxu0 0.0
    %3873 = vmatpush2.msra.mxu0 0.0
    %3874 = vmatprep.subr.mxu0 0.0
    %3875 = vmatpush2.msra.mxu0 0.0
    %3876 = vmatprep.subr.mxu0 0.0
    %3877 = vmatpush2.msra.mxu0 0.0
    %3878 = vmatprep.subr.mxu0 0.0
    %3879 = vmatpush2.msra.mxu0 0.0
    %3880 = vmatprep.subr.mxu0 0.0
    %3881 = vmatpush2.msra.mxu0 0.0
    %3882 = vmatprep.subr.mxu0 0.0
    %3883 = vmatpush2.msra.mxu0 0.0
    %3884 = vmatprep.subr.mxu0 0.0
    %3885 = vmatpush2.msra.mxu0 0.0
    %3886 = vmatprep.subr.mxu0 0.0
    %3887 = vmatpush2.msra.mxu0 0.0
    %3888 = vmatprep.subr.mxu0 0.0
    %3889 = vmatpush2.msra.mxu0 0.0
    %3890 = vmatprep.subr.mxu0 0.0
    %3891 = vmatpush2.msra.mxu0 0.0
    %3892 = vmatprep.subr.mxu0 0.0
    %3893 = vmatpush2.msra.mxu0 0.0
    %3894 = vmatprep.mubr.f32.mxu0 0.0
    %3895 = vmatmul.mubr.f32.gmra.mxu0 %v3828
    %v3896 = vpop.f32.mrf.mxu0
    %v3897 = vadd.f32 0.0, %v3896
    %v3898 = vpop.f32.mrf.mxu0
    %3899 = vdwg.mxu0
    %v3901 = vsel %vm242, %v3821, 0
    %v3904 = vsel %vm242, %v3897, 0
    %3906 = vmatprep.subr.mxu0 0.0
    %3907 = vmatpush1.msra.mxu0 0.0
    %3908 = vmatprep.subr.mxu0 0.0
    %3909 = vmatpush1.msra.mxu0 0.0
    %3910 = vmatprep.subr.mxu0 0.0
    %3911 = vmatpush1.msra.mxu0 0.0
    %3912 = vmatprep.subr.mxu0 0.0
    %3913 = vmatpush1.msra.mxu0 0.0
    %3914 = vmatprep.subr.mxu0 0.0
    %3915 = vmatpush1.msra.mxu0 0.0
    %3916 = vmatprep.subr.mxu0 0.0
    %3917 = vmatpush1.msra.mxu0 0.0
    %3918 = vmatprep.subr.mxu0 0.0
    %3919 = vmatpush1.msra.mxu0 0.0
    %3920 = vmatprep.subr.mxu0 0.0
    %3921 = vmatpush1.msra.mxu0 0.0
    %3922 = vmatprep.subr.mxu0 0.0
    %3923 = vmatpush1.msra.mxu0 0.0
    %3924 = vmatprep.subr.mxu0 0.0
    %3925 = vmatpush1.msra.mxu0 0.0
    %3926 = vmatprep.subr.mxu0 0.0
    %3927 = vmatpush1.msra.mxu0 0.0
    %3928 = vmatprep.subr.mxu0 0.0
    %3929 = vmatpush1.msra.mxu0 0.0
    %3930 = vmatprep.subr.mxu0 0.0
    %3931 = vmatpush1.msra.mxu0 0.0
    %3932 = vmatprep.subr.mxu0 0.0
    %3933 = vmatpush1.msra.mxu0 0.0
    %3934 = vmatprep.subr.mxu0 0.0
    %3935 = vmatpush1.msra.mxu0 0.0
    %3936 = vmatprep.subr.mxu0 0.0
    %3937 = vmatpush1.msra.mxu0 %v2320
    %3938 = vmatprep.subr.mxu0 0.0
    %3939 = vmatpush2.msra.mxu0 0.0
    %3940 = vmatprep.subr.mxu0 0.0
    %3941 = vmatpush2.msra.mxu0 0.0
    %3942 = vmatprep.subr.mxu0 0.0
    %3943 = vmatpush2.msra.mxu0 0.0
    %3944 = vmatprep.subr.mxu0 0.0
    %3945 = vmatpush2.msra.mxu0 0.0
    %3946 = vmatprep.subr.mxu0 0.0
    %3947 = vmatpush2.msra.mxu0 0.0
    %3948 = vmatprep.subr.mxu0 0.0
    %3949 = vmatpush2.msra.mxu0 0.0
    %3950 = vmatprep.subr.mxu0 0.0
    %3951 = vmatpush2.msra.mxu0 0.0
    %3952 = vmatprep.subr.mxu0 0.0
    %3953 = vmatpush2.msra.mxu0 0.0
    %3954 = vmatprep.subr.mxu0 0.0
    %3955 = vmatpush2.msra.mxu0 0.0
    %3956 = vmatprep.subr.mxu0 0.0
    %3957 = vmatpush2.msra.mxu0 0.0
    %3958 = vmatprep.subr.mxu0 0.0
    %3959 = vmatpush2.msra.mxu0 0.0
    %3960 = vmatprep.subr.mxu0 0.0
    %3961 = vmatpush2.msra.mxu0 0.0
    %3962 = vmatprep.subr.mxu0 0.0
    %3963 = vmatpush2.msra.mxu0 0.0
    %3964 = vmatprep.subr.mxu0 0.0
    %3965 = vmatpush2.msra.mxu0 0.0
    %3966 = vmatprep.subr.mxu0 0.0
    %3967 = vmatpush2.msra.mxu0 0.0
    %3968 = vmatprep.subr.mxu0 0.0
    %3969 = vmatpush2.msra.mxu0 0.0
    %3970 = vmatprep.mubr.f32.mxu0 0.0
    %3971 = vmatmul.mubr.f32.gmra.mxu0 %v3901
    %v3972 = vpop.f32.mrf.mxu0
    %v3973 = vadd.f32 0.0, %v3972
    %v3974 = vpop.f32.mrf.mxu0
    %3975 = vmatprep.mubr.f32.mxu0 0.0
    %3976 = vmatmul.mubr.f32.gmra.mxu0 %v3904
    %v3977 = vpop.f32.mrf.mxu0
    %v3978 = vadd.f32 0.0, %v3977
    %v3979 = vpop.f32.mrf.mxu0
    %3980 = vdwg.mxu0
    %v3981 = vadd.f32 %v3564, %v3973
    %v3982 = vadd.f32 %v3565, %v3978
    %s3983 = scalar_lea.vmem %s7, 1
    %v3984 = vld [vmem:[%s3983] sm:$0x1]
    %v3986 = vlaneseq
    %v3987 = vshrl.u32 %v3986, 7
    %v3988 = vsub.s32 0, %v3987
    %v3989 = vrot.slane %v3984, %v3988
    %v3991 = vadd.f32 %v3981, %v3989
    %v3992 = vadd.f32 %v3982, %v3989
    %v3993 = vadd.f32 %v2220, %v3991
    %v3994 = vadd.f32 %v2221, %v3992
    %s3995 = scalar_lea.vmem %s8, 1
    %v3996 = vld [vmem:[%s3995] sm:$0x1]
    %s3997 = scalar_lea.vmem %s9, 1
    %v3998 = vld [vmem:[%s3997] sm:$0x1]
    %v3999 = vsel %vm70, %v3993, 0.0
    %4000 = vadd.xlane.f32.xlu0 %v3999
    %v4001 = vpop.xlane.xlu0 %4000
    %v4002 = vsel %vm70, %v3994, 0.0
    %4003 = vadd.xlane.f32.xlu0 %v4002
    %v4004 = vpop.xlane.xlu0 %4003
    %v4005 = vmul.f32 %v4001, %v77
    %v4006 = vmul.f32 %v4004, %v77
    %v4007 = vsub.f32 %v3993, %v4005
    %v4008 = vsub.f32 %v3994, %v4006
    %v4009 = vmul.f32 %v4007, %v4007
    %v4010 = vmul.f32 %v4008, %v4008
    %v4011 = vsel %vm70, %v4009, 0.0
    %4012 = vadd.xlane.f32.xlu0 %v4011
    %v4013 = vpop.xlane.xlu0 %4012
    %v4014 = vsel %vm70, %v4010, 0.0
    %4015 = vadd.xlane.f32.xlu0 %v4014
    %v4016 = vpop.xlane.xlu0 %4015
    %v4017 = vmul.f32 %v4013, %v77
    %v4018 = vmul.f32 %v4016, %v77
    %v4019 = vadd.f32 %v4017, 1e-12
    %v4020 = vadd.f32 %v4018, 1e-12
    %v4021 = vrsqrt.pop %v4019
    %v4022 = vrsqrt.pop %v4020
    %v4023 = vmul.f32 %v4007, %v4021
    %v4024 = vmul.f32 %v4008, %v4022
    %v4026 = vlaneseq
    %v4027 = vshrl.u32 %v4026, 7
    %v4028 = vsub.s32 0, %v4027
    %v4029 = vrot.slane %v3996, %v4028
    %v4031 = vmul.f32 %v4023, %v4029
    %v4032 = vmul.f32 %v4024, %v4029
    %v4034 = vlaneseq
    %v4035 = vshrl.u32 %v4034, 7
    %v4036 = vsub.s32 0, %v4035
    %v4037 = vrot.slane %v3998, %v4036
    %v4039 = vadd.f32 %v4031, %v4037
    %v4040 = vadd.f32 %v4032, %v4037
    %s4041 = scalar_lea.vmem %s10, 32
    %v4042 = vld [vmem:[%s4041] sm:$0xff]
    %v4043 = vld [vmem:[%s4041 + $0x8] sm:$0xff]
    %v4044 = vld [vmem:[%s4041 + $0x10] sm:$0xff]
    %v4045 = vld [vmem:[%s4041 + $0x18] sm:$0xff]
    %s4046 = scalar_lea.vmem %s11, 1
    %v4047 = vld [vmem:[%s4046] sm:$0x1]
    %v4049 = vlaneseq
    %v4050 = vshrl.u32 %v4049, 7
    %v4051 = vsub.s32 0, %v4050
    %v4052 = vrot.slane %v4047, %v4051
    %v4055 = vsel %vm70, %v4039, 0
    %v4058 = vsel %vm70, %v4040, 0
    %4060 = vmatprep.subr.mxu0 0.0
    %4061 = vmatpush1.msra.mxu0 0.0
    %4062 = vmatprep.subr.mxu0 0.0
    %4063 = vmatpush1.msra.mxu0 0.0
    %4064 = vmatprep.subr.mxu0 0.0
    %4065 = vmatpush1.msra.mxu0 0.0
    %4066 = vmatprep.subr.mxu0 0.0
    %4067 = vmatpush1.msra.mxu0 0.0
    %4068 = vmatprep.subr.mxu0 0.0
    %4069 = vmatpush1.msra.mxu0 0.0
    %4070 = vmatprep.subr.mxu0 0.0
    %4071 = vmatpush1.msra.mxu0 0.0
    %4072 = vmatprep.subr.mxu0 0.0
    %4073 = vmatpush1.msra.mxu0 0.0
    %4074 = vmatprep.subr.mxu0 0.0
    %4075 = vmatpush1.msra.mxu0 0.0
    %4076 = vmatprep.subr.mxu0 0.0
    %4077 = vmatpush1.msra.mxu0 0.0
    %4078 = vmatprep.subr.mxu0 0.0
    %4079 = vmatpush1.msra.mxu0 0.0
    %4080 = vmatprep.subr.mxu0 0.0
    %4081 = vmatpush1.msra.mxu0 0.0
    %4082 = vmatprep.subr.mxu0 0.0
    %4083 = vmatpush1.msra.mxu0 0.0
    %4084 = vmatprep.subr.mxu0 0.0
    %4085 = vmatpush1.msra.mxu0 %v4045
    %4086 = vmatprep.subr.mxu0 0.0
    %4087 = vmatpush1.msra.mxu0 %v4044
    %4088 = vmatprep.subr.mxu0 0.0
    %4089 = vmatpush1.msra.mxu0 %v4043
    %4090 = vmatprep.subr.mxu0 0.0
    %4091 = vmatpush1.msra.mxu0 %v4042
    %4092 = vmatprep.subr.mxu0 0.0
    %4093 = vmatpush2.msra.mxu0 0.0
    %4094 = vmatprep.subr.mxu0 0.0
    %4095 = vmatpush2.msra.mxu0 0.0
    %4096 = vmatprep.subr.mxu0 0.0
    %4097 = vmatpush2.msra.mxu0 0.0
    %4098 = vmatprep.subr.mxu0 0.0
    %4099 = vmatpush2.msra.mxu0 0.0
    %4100 = vmatprep.subr.mxu0 0.0
    %4101 = vmatpush2.msra.mxu0 0.0
    %4102 = vmatprep.subr.mxu0 0.0
    %4103 = vmatpush2.msra.mxu0 0.0
    %4104 = vmatprep.subr.mxu0 0.0
    %4105 = vmatpush2.msra.mxu0 0.0
    %4106 = vmatprep.subr.mxu0 0.0
    %4107 = vmatpush2.msra.mxu0 0.0
    %4108 = vmatprep.subr.mxu0 0.0
    %4109 = vmatpush2.msra.mxu0 0.0
    %4110 = vmatprep.subr.mxu0 0.0
    %4111 = vmatpush2.msra.mxu0 0.0
    %4112 = vmatprep.subr.mxu0 0.0
    %4113 = vmatpush2.msra.mxu0 0.0
    %4114 = vmatprep.subr.mxu0 0.0
    %4115 = vmatpush2.msra.mxu0 0.0
    %4116 = vmatprep.subr.mxu0 0.0
    %4117 = vmatpush2.msra.mxu0 0.0
    %4118 = vmatprep.subr.mxu0 0.0
    %4119 = vmatpush2.msra.mxu0 0.0
    %4120 = vmatprep.subr.mxu0 0.0
    %4121 = vmatpush2.msra.mxu0 0.0
    %4122 = vmatprep.subr.mxu0 0.0
    %4123 = vmatpush2.msra.mxu0 0.0
    %4124 = vmatprep.mubr.f32.mxu0 0.0
    %4125 = vmatmul.mubr.f32.gmra.mxu0 %v4055
    %v4126 = vpop.f32.mrf.mxu0
    %v4127 = vadd.f32 %v4052, %v4126
    %v4128 = vpop.f32.mrf.mxu0
    %4129 = vmatprep.mubr.f32.mxu0 0.0
    %4130 = vmatmul.mubr.f32.gmra.mxu0 %v4058
    %v4131 = vpop.f32.mrf.mxu0
    %v4132 = vadd.f32 %v4052, %v4131
    %v4133 = vpop.f32.mrf.mxu0
    %4134 = vdwg.mxu0
    %v4135 = vmul.f32 %v4127, %v4127
    %v4136 = vmul.f32 %v4132, %v4132
    %v4137 = vmul.f32 %v4127, %v4135
    %v4138 = vmul.f32 %v4132, %v4136
    %v4139 = vmul.f32 %v4137, 0.044715
    %v4140 = vmul.f32 %v4138, 0.044715
    %v4141 = vadd.f32 %v4127, %v4139
    %v4142 = vadd.f32 %v4132, %v4140
    %v4143 = vmul.f32 %v4141, 0.7978846
    %v4144 = vmul.f32 %v4142, 0.7978846
    %v4145 = vtanh.pop %v4143
    %v4146 = vtanh.pop %v4144
    %v4147 = vadd.f32 %v4145, 1.0
    %v4148 = vadd.f32 %v4146, 1.0
    %v4149 = vmul.f32 %v4147, 0.5
    %v4150 = vmul.f32 %v4148, 0.5
    %v4151 = vmul.f32 %v4127, %v4149
    %v4152 = vmul.f32 %v4132, %v4150
    %s4153 = scalar_lea.vmem %s12, 64
    %v4154 = vld [vmem:[%s4153] sm:$0xff]
    %v4155 = vld [vmem:[%s4153 + $0x8] sm:$0xff]
    %v4156 = vld [vmem:[%s4153 + $0x10] sm:$0xff]
    %v4157 = vld [vmem:[%s4153 + $0x18] sm:$0xff]
    %v4158 = vld [vmem:[%s4153 + $0x20] sm:$0xff]
    %v4159 = vld [vmem:[%s4153 + $0x28] sm:$0xff]
    %v4160 = vld [vmem:[%s4153 + $0x30] sm:$0xff]
    %v4161 = vld [vmem:[%s4153 + $0x38] sm:$0xff]
    %s4162 = scalar_lea.vmem %s13, 1
    %v4163 = vld [vmem:[%s4162] sm:$0x1]
    %v4165 = vlaneseq
    %v4166 = vshrl.u32 %v4165, 7
    %v4167 = vsub.s32 0, %v4166
    %v4168 = vrot.slane %v4163, %v4167
    %v4171 = vsel %vm2094, %v4151, 0
    %v4174 = vsel %vm2094, %v4152, 0
    %4176 = vmatprep.subr.mxu0 0.0
    %4177 = vmatpush1.msra.mxu0 0.0
    %4178 = vmatprep.subr.mxu0 0.0
    %4179 = vmatpush1.msra.mxu0 0.0
    %4180 = vmatprep.subr.mxu0 0.0
    %4181 = vmatpush1.msra.mxu0 0.0
    %4182 = vmatprep.subr.mxu0 0.0
    %4183 = vmatpush1.msra.mxu0 0.0
    %4184 = vmatprep.subr.mxu0 0.0
    %4185 = vmatpush1.msra.mxu0 0.0
    %4186 = vmatprep.subr.mxu0 0.0
    %4187 = vmatpush1.msra.mxu0 0.0
    %4188 = vmatprep.subr.mxu0 0.0
    %4189 = vmatpush1.msra.mxu0 0.0
    %4190 = vmatprep.subr.mxu0 0.0
    %4191 = vmatpush1.msra.mxu0 0.0
    %4192 = vmatprep.subr.mxu0 0.0
    %4193 = vmatpush1.msra.mxu0 %v4161
    %4194 = vmatprep.subr.mxu0 0.0
    %4195 = vmatpush1.msra.mxu0 %v4160
    %4196 = vmatprep.subr.mxu0 0.0
    %4197 = vmatpush1.msra.mxu0 %v4159
    %4198 = vmatprep.subr.mxu0 0.0
    %4199 = vmatpush1.msra.mxu0 %v4158
    %4200 = vmatprep.subr.mxu0 0.0
    %4201 = vmatpush1.msra.mxu0 %v4157
    %4202 = vmatprep.subr.mxu0 0.0
    %4203 = vmatpush1.msra.mxu0 %v4156
    %4204 = vmatprep.subr.mxu0 0.0
    %4205 = vmatpush1.msra.mxu0 %v4155
    %4206 = vmatprep.subr.mxu0 0.0
    %4207 = vmatpush1.msra.mxu0 %v4154
    %4208 = vmatprep.subr.mxu0 0.0
    %4209 = vmatpush2.msra.mxu0 0.0
    %4210 = vmatprep.subr.mxu0 0.0
    %4211 = vmatpush2.msra.mxu0 0.0
    %4212 = vmatprep.subr.mxu0 0.0
    %4213 = vmatpush2.msra.mxu0 0.0
    %4214 = vmatprep.subr.mxu0 0.0
    %4215 = vmatpush2.msra.mxu0 0.0
    %4216 = vmatprep.subr.mxu0 0.0
    %4217 = vmatpush2.msra.mxu0 0.0
    %4218 = vmatprep.subr.mxu0 0.0
    %4219 = vmatpush2.msra.mxu0 0.0
    %4220 = vmatprep.subr.mxu0 0.0
    %4221 = vmatpush2.msra.mxu0 0.0
    %4222 = vmatprep.subr.mxu0 0.0
    %4223 = vmatpush2.msra.mxu0 0.0
    %4224 = vmatprep.subr.mxu0 0.0
    %4225 = vmatpush2.msra.mxu0 0.0
    %4226 = vmatprep.subr.mxu0 0.0
    %4227 = vmatpush2.msra.mxu0 0.0
    %4228 = vmatprep.subr.mxu0 0.0
    %4229 = vmatpush2.msra.mxu0 0.0
    %4230 = vmatprep.subr.mxu0 0.0
    %4231 = vmatpush2.msra.mxu0 0.0
    %4232 = vmatprep.subr.mxu0 0.0
    %4233 = vmatpush2.msra.mxu0 0.0
    %4234 = vmatprep.subr.mxu0 0.0
    %4235 = vmatpush2.msra.mxu0 0.0
    %4236 = vmatprep.subr.mxu0 0.0
    %4237 = vmatpush2.msra.mxu0 0.0
    %4238 = vmatprep.subr.mxu0 0.0
    %4239 = vmatpush2.msra.mxu0 0.0
    %4240 = vmatprep.mubr.f32.mxu0 0.0
    %4241 = vmatmul.mubr.f32.gmra.mxu0 %v4171
    %v4242 = vpop.f32.mrf.mxu0
    %v4243 = vadd.f32 %v4168, %v4242
    %v4244 = vpop.f32.mrf.mxu0
    %4245 = vmatprep.mubr.f32.mxu0 0.0
    %4246 = vmatmul.mubr.f32.gmra.mxu0 %v4174
    %v4247 = vpop.f32.mrf.mxu0
    %v4248 = vadd.f32 %v4168, %v4247
    %v4249 = vpop.f32.mrf.mxu0
    %4250 = vdwg.mxu0
    %v4251 = vadd.f32 %v4039, %v4243
    %v4252 = vadd.f32 %v4040, %v4248
    %s4253 = scalar_lea.vmem %s14, 1
    %v4254 = vld [vmem:[%s4253] sm:$0x1]
    %s4255 = scalar_lea.vmem %s15, 1
    %v4256 = vld [vmem:[%s4255] sm:$0x1]
    %v4257 = vsel %vm70, %v4251, 0.0
    %4258 = vadd.xlane.f32.xlu0 %v4257
    %v4259 = vpop.xlane.xlu0 %4258
    %v4260 = vsel %vm70, %v4252, 0.0
    %4261 = vadd.xlane.f32.xlu0 %v4260
    %v4262 = vpop.xlane.xlu0 %4261
    %v4263 = vmul.f32 %v4259, %v77
    %v4264 = vmul.f32 %v4262, %v77
    %v4265 = vsub.f32 %v4251, %v4263
    %v4266 = vsub.f32 %v4252, %v4264
    %v4267 = vmul.f32 %v4265, %v4265
    %v4268 = vmul.f32 %v4266, %v4266
    %v4269 = vsel %vm70, %v4267, 0.0
    %4270 = vadd.xlane.f32.xlu0 %v4269
    %v4271 = vpop.xlane.xlu0 %4270
    %v4272 = vsel %vm70, %v4268, 0.0
    %4273 = vadd.xlane.f32.xlu0 %v4272
    %v4274 = vpop.xlane.xlu0 %4273
    %v4275 = vmul.f32 %v4271, %v77
    %v4276 = vmul.f32 %v4274, %v77
    %v4277 = vadd.f32 %v4275, 1e-12
    %v4278 = vadd.f32 %v4276, 1e-12
    %v4279 = vrsqrt.pop %v4277
    %v4280 = vrsqrt.pop %v4278
    %v4281 = vmul.f32 %v4265, %v4279
    %v4282 = vmul.f32 %v4266, %v4280
    %v4284 = vlaneseq
    %v4285 = vshrl.u32 %v4284, 7
    %v4286 = vsub.s32 0, %v4285
    %v4287 = vrot.slane %v4254, %v4286
    %v4289 = vmul.f32 %v4281, %v4287
    %v4290 = vmul.f32 %v4282, %v4287
    %v4292 = vlaneseq
    %v4293 = vshrl.u32 %v4292, 7
    %v4294 = vsub.s32 0, %v4293
    %v4295 = vrot.slane %v4256, %v4294
    %v4297 = vadd.f32 %v4289, %v4295
    %v4298 = vadd.f32 %v4290, %v4295
    %v4299 = vld [vmem:[%s16] sm:$0xff]
    %v4300 = vld [vmem:[%s16 + $0x8] sm:$0xff]
    %v4301 = vld [vmem:[%s16 + $0x10] sm:$0xff]
    %v4302 = vld [vmem:[%s16 + $0x18] sm:$0xff]
    %v4303 = vld [vmem:[%s17] sm:$0x1]
    %v4306 = vrot.slane %v4298, 7
    %vm4307 = vcmask 1041409
    %v4308 = vsel %vm4307, %v4306, %v4297
    %v4310 = vcombine.low %v4303, %v4303
    %v4312 = vunpack.c.l.s4 1966171168
    %v4313 = vunpack.c.0.s8 %v4312
    %v4314 = vlaneseq
    %v4315 = vshrl.u32 %v4314, 7
    %v4316 = vsub.s32 %v4313, %v4315
    %v4317 = vrot.slane %v4310, %v4316
    %v4319 = vunpack.c.l.s4 1966171168
    %v4320 = vunpack.c.0.s8 %v4319
    %v4321 = vlaneseq
    %v4322 = vshrl.u32 %v4321, 7
    %v4323 = vsub.s32 %v4320, %v4322
    %v4324 = vrot.slane %v4317, %v4323
    %v4326 = vsel %vm70, %v4308, 0
    %4328 = vmatprep.subr.mxu0 0.0
    %4329 = vmatpush1.msra.mxu0 0.0
    %4330 = vmatprep.subr.mxu0 0.0
    %4331 = vmatpush1.msra.mxu0 0.0
    %4332 = vmatprep.subr.mxu0 0.0
    %4333 = vmatpush1.msra.mxu0 0.0
    %4334 = vmatprep.subr.mxu0 0.0
    %4335 = vmatpush1.msra.mxu0 0.0
    %4336 = vmatprep.subr.mxu0 0.0
    %4337 = vmatpush1.msra.mxu0 0.0
    %4338 = vmatprep.subr.mxu0 0.0
    %4339 = vmatpush1.msra.mxu0 0.0
    %4340 = vmatprep.subr.mxu0 0.0
    %4341 = vmatpush1.msra.mxu0 0.0
    %4342 = vmatprep.subr.mxu0 0.0
    %4343 = vmatpush1.msra.mxu0 0.0
    %4344 = vmatprep.subr.mxu0 0.0
    %4345 = vmatpush1.msra.mxu0 0.0
    %4346 = vmatprep.subr.mxu0 0.0
    %4347 = vmatpush1.msra.mxu0 0.0
    %4348 = vmatprep.subr.mxu0 0.0
    %4349 = vmatpush1.msra.mxu0 0.0
    %4350 = vmatprep.subr.mxu0 0.0
    %4351 = vmatpush1.msra.mxu0 0.0
    %4352 = vmatprep.subr.mxu0 0.0
    %4353 = vmatpush1.msra.mxu0 %v4302
    %4354 = vmatprep.subr.mxu0 0.0
    %4355 = vmatpush1.msra.mxu0 %v4301
    %4356 = vmatprep.subr.mxu0 0.0
    %4357 = vmatpush1.msra.mxu0 %v4300
    %4358 = vmatprep.subr.mxu0 0.0
    %4359 = vmatpush1.msra.mxu0 %v4299
    %4360 = vmatprep.subr.mxu0 0.0
    %4361 = vmatpush2.msra.mxu0 0.0
    %4362 = vmatprep.subr.mxu0 0.0
    %4363 = vmatpush2.msra.mxu0 0.0
    %4364 = vmatprep.subr.mxu0 0.0
    %4365 = vmatpush2.msra.mxu0 0.0
    %4366 = vmatprep.subr.mxu0 0.0
    %4367 = vmatpush2.msra.mxu0 0.0
    %4368 = vmatprep.subr.mxu0 0.0
    %4369 = vmatpush2.msra.mxu0 0.0
    %4370 = vmatprep.subr.mxu0 0.0
    %4371 = vmatpush2.msra.mxu0 0.0
    %4372 = vmatprep.subr.mxu0 0.0
    %4373 = vmatpush2.msra.mxu0 0.0
    %4374 = vmatprep.subr.mxu0 0.0
    %4375 = vmatpush2.msra.mxu0 0.0
    %4376 = vmatprep.subr.mxu0 0.0
    %4377 = vmatpush2.msra.mxu0 0.0
    %4378 = vmatprep.subr.mxu0 0.0
    %4379 = vmatpush2.msra.mxu0 0.0
    %4380 = vmatprep.subr.mxu0 0.0
    %4381 = vmatpush2.msra.mxu0 0.0
    %4382 = vmatprep.subr.mxu0 0.0
    %4383 = vmatpush2.msra.mxu0 0.0
    %4384 = vmatprep.subr.mxu0 0.0
    %4385 = vmatpush2.msra.mxu0 0.0
    %4386 = vmatprep.subr.mxu0 0.0
    %4387 = vmatpush2.msra.mxu0 0.0
    %4388 = vmatprep.subr.mxu0 0.0
    %4389 = vmatpush2.msra.mxu0 0.0
    %4390 = vmatprep.subr.mxu0 0.0
    %4391 = vmatpush2.msra.mxu0 0.0
    %4392 = vmatprep.mubr.f32.mxu0 0.0
    %4393 = vmatmul.mubr.f32.gmra.mxu0 %v4326
    %v4394 = vpop.f32.mrf.mxu0
    %v4395 = vadd.f32 %v4324, %v4394
    %v4396 = vpop.f32.mrf.mxu0
    %4397 = vdwg.mxu0
    %v4400 = vunpack.c.l.s4 1966171168
    %v4401 = vunpack.c.0.s8 %v4400
    %v4402 = vlaneseq
    %v4403 = vshrl.u32 %v4402, 7
    %v4404 = vsub.s32 %v4401, %v4403
    %v4405 = vrot.slane %v4395, %v4404
    %v4406 = vcombine.high %v4405, %v4405
    %v4408 = vunpack.c.l.s4 1966171168
    %v4409 = vunpack.c.0.s8 %v4408
    %v4410 = vlaneseq
    %v4411 = vshrl.u32 %v4410, 7
    %v4412 = vsub.s32 %v4409, %v4411
    %v4413 = vrot.slane %v4405, %v4412
    %v4415 = vunpack.c.l.s4 1966171168
    %v4416 = vunpack.c.0.s8 %v4415
    %v4417 = vlaneseq
    %v4418 = vshrl.u32 %v4417, 7
    %v4419 = vsub.s32 %v4416, %v4418
    %v4420 = vrot.slane %v4406, %v4419
    %v4423 = vtanh.pop %v4413
    %v4424 = vtanh.pop %v4420
    %v4425 = vld [vmem:[%s18] sm:$0xff]
    %v4426 = vld [vmem:[%s18 + $0x8] sm:$0xff]
    %v4427 = vld [vmem:[%s18 + $0x10] sm:$0xff]
    %v4428 = vld [vmem:[%s18 + $0x18] sm:$0xff]
    %v4429 = vld [vmem:[%s19] sm:$0x1]
    %v4432 = vcombine.low %v4423, %v4424
    %v4434 = vunpack.c.l.s4 1966171168
    %v4435 = vunpack.c.0.s8 %v4434
    %v4436 = vlaneseq
    %v4437 = vshrl.u32 %v4436, 7
    %v4438 = vsub.s32 %v4435, %v4437
    %v4439 = vrot.slane %v4432, %v4438
    %v4441 = vunpack.c.l.s4 1966171168
    %v4442 = vunpack.c.0.s8 %v4441
    %v4443 = vlaneseq
    %v4444 = vshrl.u32 %v4443, 7
    %v4445 = vsub.s32 %v4442, %v4444
    %v4446 = vrot.slane %v4439, %v4445
    %v4448 = vcombine.low %v4429, %v4429
    %v4450 = vunpack.c.l.s4 1966171168
    %v4451 = vunpack.c.0.s8 %v4450
    %v4452 = vlaneseq
    %v4453 = vshrl.u32 %v4452, 7
    %v4454 = vsub.s32 %v4451, %v4453
    %v4455 = vrot.slane %v4448, %v4454
    %v4457 = vunpack.c.l.s4 1966171168
    %v4458 = vunpack.c.0.s8 %v4457
    %v4459 = vlaneseq
    %v4460 = vshrl.u32 %v4459, 7
    %v4461 = vsub.s32 %v4458, %v4460
    %v4462 = vrot.slane %v4455, %v4461
    %v4464 = vsel %vm70, %v4446, 0
    %4466 = vmatprep.subr.mxu0 0.0
    %4467 = vmatpush1.msra.mxu0 0.0
    %4468 = vmatprep.subr.mxu0 0.0
    %4469 = vmatpush1.msra.mxu0 0.0
    %4470 = vmatprep.subr.mxu0 0.0
    %4471 = vmatpush1.msra.mxu0 0.0
    %4472 = vmatprep.subr.mxu0 0.0
    %4473 = vmatpush1.msra.mxu0 0.0
    %4474 = vmatprep.subr.mxu0 0.0
    %4475 = vmatpush1.msra.mxu0 0.0
    %4476 = vmatprep.subr.mxu0 0.0
    %4477 = vmatpush1.msra.mxu0 0.0
    %4478 = vmatprep.subr.mxu0 0.0
    %4479 = vmatpush1.msra.mxu0 0.0
    %4480 = vmatprep.subr.mxu0 0.0
    %4481 = vmatpush1.msra.mxu0 0.0
    %4482 = vmatprep.subr.mxu0 0.0
    %4483 = vmatpush1.msra.mxu0 0.0
    %4484 = vmatprep.subr.mxu0 0.0
    %4485 = vmatpush1.msra.mxu0 0.0
    %4486 = vmatprep.subr.mxu0 0.0
    %4487 = vmatpush1.msra.mxu0 0.0
    %4488 = vmatprep.subr.mxu0 0.0
    %4489 = vmatpush1.msra.mxu0 0.0
    %4490 = vmatprep.subr.mxu0 0.0
    %4491 = vmatpush1.msra.mxu0 %v4428
    %4492 = vmatprep.subr.mxu0 0.0
    %4493 = vmatpush1.msra.mxu0 %v4427
    %4494 = vmatprep.subr.mxu0 0.0
    %4495 = vmatpush1.msra.mxu0 %v4426
    %4496 = vmatprep.subr.mxu0 0.0
    %4497 = vmatpush1.msra.mxu0 %v4425
    %4498 = vmatprep.subr.mxu0 0.0
    %4499 = vmatpush2.msra.mxu0 0.0
    %4500 = vmatprep.subr.mxu0 0.0
    %4501 = vmatpush2.msra.mxu0 0.0
    %4502 = vmatprep.subr.mxu0 0.0
    %4503 = vmatpush2.msra.mxu0 0.0
    %4504 = vmatprep.subr.mxu0 0.0
    %4505 = vmatpush2.msra.mxu0 0.0
    %4506 = vmatprep.subr.mxu0 0.0
    %4507 = vmatpush2.msra.mxu0 0.0
    %4508 = vmatprep.subr.mxu0 0.0
    %4509 = vmatpush2.msra.mxu0 0.0
    %4510 = vmatprep.subr.mxu0 0.0
    %4511 = vmatpush2.msra.mxu0 0.0
    %4512 = vmatprep.subr.mxu0 0.0
    %4513 = vmatpush2.msra.mxu0 0.0
    %4514 = vmatprep.subr.mxu0 0.0
    %4515 = vmatpush2.msra.mxu0 0.0
    %4516 = vmatprep.subr.mxu0 0.0
    %4517 = vmatpush2.msra.mxu0 0.0
    %4518 = vmatprep.subr.mxu0 0.0
    %4519 = vmatpush2.msra.mxu0 0.0
    %4520 = vmatprep.subr.mxu0 0.0
    %4521 = vmatpush2.msra.mxu0 0.0
    %4522 = vmatprep.subr.mxu0 0.0
    %4523 = vmatpush2.msra.mxu0 0.0
    %4524 = vmatprep.subr.mxu0 0.0
    %4525 = vmatpush2.msra.mxu0 0.0
    %4526 = vmatprep.subr.mxu0 0.0
    %4527 = vmatpush2.msra.mxu0 0.0
    %4528 = vmatprep.subr.mxu0 0.0
    %4529 = vmatpush2.msra.mxu0 0.0
    %4530 = vmatprep.mubr.f32.mxu0 0.0
    %4531 = vmatmul.mubr.f32.gmra.mxu0 %v4464
    %v4532 = vpop.f32.mrf.mxu0
    %v4533 = vadd.f32 %v4462, %v4532
    %v4534 = vpop.f32.mrf.mxu0
    %4535 = vdwg.mxu0
    %v4538 = vunpack.c.l.s4 1966171168
    %v4539 = vunpack.c.0.s8 %v4538
    %v4540 = vlaneseq
    %v4541 = vshrl.u32 %v4540, 7
    %v4542 = vsub.s32 %v4539, %v4541
    %v4543 = vrot.slane %v4533, %v4542
    %v4544 = vcombine.high %v4543, %v4543
    %v4546 = vunpack.c.l.s4 1966171168
    %v4547 = vunpack.c.0.s8 %v4546
    %v4548 = vlaneseq
    %v4549 = vshrl.u32 %v4548, 7
    %v4550 = vsub.s32 %v4547, %v4549
    %v4551 = vrot.slane %v4543, %v4550
    %v4553 = vunpack.c.l.s4 1966171168
    %v4554 = vunpack.c.0.s8 %v4553
    %v4555 = vlaneseq
    %v4556 = vshrl.u32 %v4555, 7
    %v4557 = vsub.s32 %v4554, %v4556
    %v4558 = vrot.slane %v4544, %v4557
    %vm4561 = vcmask 16384
    %v4562 = vsel %vm4561, %v4551, -inf
    %4563 = vmax.xlane.f32.xlu0 %v4562
    %v4564 = vpop.xlane.xlu0 %4563
    %v4565 = vsel %vm4561, %v4558, -inf
    %4566 = vmax.xlane.f32.xlu0 %v4565
    %v4567 = vpop.xlane.xlu0 %4566
    %v4568 = vsub.f32 %v4551, %v4564
    %v4569 = vsub.f32 %v4558, %v4567
    %v4570 = vmul.f32 %v4568, 1.442695
    %v4571 = vpow.pop %v4570
    %v4572 = vmul.f32 %v4569, 1.442695
    %v4573 = vpow.pop %v4572
    %v4574 = vsel %vm4561, %v4571, 0.0
    %4575 = vadd.xlane.f32.xlu0 %v4574
    %v4576 = vpop.xlane.xlu0 %4575
    %v4577 = vsel %vm4561, %v4573, 0.0
    %4578 = vadd.xlane.f32.xlu0 %v4577
    %v4579 = vpop.xlane.xlu0 %4578
    %v4580 = vrcp.pop %v4576
    %v4581 = vmul.f32 %v4571, %v4580
    %v4582 = vrcp.pop %v4579
    %v4583 = vmul.f32 %v4573, %v4582
    %4584 = vst.msk [vmem:[#allocation2] sm:$0x1] %vm4561, %v4581
    %4585 = vst.msk [vmem:[#allocation2 + $0x1] sm:$0x1] %vm4561, %v4583
    // Predicated region
    $region82: #{sentiment_classifier_forward.1} parent=1 // pred_check
      _
    $region83: #{sentiment_classifier_forward.1} parent=1 // pred_check_branch
      %4587 = sbr.rel (0) target = $region85
    $region84: #{sentiment_classifier_forward.1} parent=1 // pred_region
      %s4589 = ssub.s32 32, 32
      %4590 = vsyncadd [#allocation3], %s4589
      %s4591 = sshll.u32 [#allocation2], 4
      %s4592 = int_to_ptr.vmem [resolvable:$true] %s4591
      %4597 = dma.vmem_to_hbm [thread:$0]  %s4592, 32, %s20, [#allocation3], 16, 16, 1
    $region85: #{sentiment_classifier_forward.1} parent=1 // pred_fallthru
      _
    // Predicated region
    $region86: #{sentiment_classifier_forward.1} parent=1 // pred_check
      _
    $region87: #{sentiment_classifier_forward.1} parent=1 // pred_check_branch
      %4599 = sbr.rel (0) target = $region89
    $region88: #{sentiment_classifier_forward.1} parent=1 // pred_region
      %4600 = dma.done [#allocation3], 32
    $region89: #{sentiment_classifier_forward.1} parent=1 // pred_fallthru
      _
    %4601 = vsyncpa [#allocation3], 1

</llo_original>
